<compile_context>
chip_gen: v5e
topology: v5e:2x2
jax: 0.10.0
libtpu: 0.0.40
codegen_flags: <defaults>
</compile_context>

<pallas_src>
import functools

import jax
import jax.numpy as jnp
import numpy as np
from jax.experimental import pallas as pl
from jax.experimental.pallas import tpu as pltpu


# -----------------------------------------------------------------------------
# Pallas kernel: full DSPN inner loop for the WHOLE batch, single program.
# -----------------------------------------------------------------------------
def dspn_kernel(xaug_ref, target_ref, pool_ref, expand_ref,
                w1_ref, b1_ref, w2_ref, b2_ref, w2T_s_ref, w1T_s_ref,
                out_ref, *, iters):
    # xaug    : (B*N, C+1)  augmented state: [set channels | mask column]
    # target  : (B, D)      target representation
    # pool    : (B, B*N)    block matrix with 1/N in each batch's block
    # expand  : (B*N, B)    block matrix of ones (broadcast rows per set)
    # w1      : (C+1, D)    first conv1d(k=1), transposed for x @ w1
    # b1      : (1, D)
    # w2      : (D, D)      second conv1d(k=1), transposed for hbar @ w2
    # b2      : (1, D)
    # w2T_s   : (D, D)      W2 * 1/(N*B*D)   (backward, scales folded in)
    # w1T_s   : (D, C+1)    lr * W1          (backward, lr folded in)
    BN, C1 = xaug_ref.shape

    x0 = xaug_ref[...]            # mask column pre-clamped in wrapper
    t = target_ref[...]
    pool = pool_ref[...]
    expand = expand_ref[...]
    w1 = w1_ref[...]
    b1 = b1_ref[...]
    w2 = w2_ref[...]
    b2 = b2_ref[...]
    w2T_s = w2T_s_ref[...]
    w1T_s = w1T_s_ref[...]

    # Mask-column selector, hoisted out of the loop (broadcasts are not CSE'd).
    col = jax.lax.broadcasted_iota(jnp.int32, (BN, C1), 1)
    is_mask_col = col == (C1 - 1)

    def step(_, x):
        # ---- encoder forward: per-element MLP, mean-pool, second layer ----
        h_pre = jnp.dot(x, w1, preferred_element_type=jnp.float32) + b1   # (BN, D)
        h = jnp.maximum(h_pre, 0.0)                                       # ReLU
        hbar = jnp.dot(pool, h, preferred_element_type=jnp.float32)       # (B, D) = mean over set
        r = jnp.dot(hbar, w2, preferred_element_type=jnp.float32) + b2    # (B, D)

        # ---- smooth-L1 loss gradient wrt r (beta=1); 1/(B*D*N) is in w2T_s ----
        dldr = jnp.clip(r - t, -1.0, 1.0)                                 # (B, D)

        # ---- manual backward through the encoder ----
        dldh_row = jnp.dot(dldr, w2T_s, preferred_element_type=jnp.float32)   # (B, D)
        dldh_bn = jnp.dot(expand, dldh_row, preferred_element_type=jnp.float32)  # (BN, D)
        dldhpre = jnp.where(h_pre > 0.0, dldh_bn, 0.0)                    # ReLU gate

        # ---- DSPN inner SGD step (lr folded into w1T_s); clamp mask column ----
        x_upd = x - jnp.dot(dldhpre, w1T_s, preferred_element_type=jnp.float32)
        return jnp.where(is_mask_col, jnp.clip(x_upd, 0.0, 1.0), x_upd)

    out_ref[...] = jax.lax.fori_loop(0, iters, step, x0, unroll=True)


# -----------------------------------------------------------------------------
# Wrapper (glue): parameter layout massaging + pallas_call
# -----------------------------------------------------------------------------
@functools.partial(jax.jit, static_argnames=("iters", "lr"))
def dspn_forward(target_repr, params, *, iters=30, lr=800.0):
    """Returns (final_set (B, C, N), final_mask (B, N))."""
    B, D = target_repr.shape
    starting_set = params["starting_set"]      # (1, C, N)
    starting_mask = params["starting_mask"]    # (1, N)
    _, C, N = starting_set.shape
    C1 = C + 1
    BN = B * N

    # expand starting set/mask to the batch, fuse into one augmented state
    set0 = jnp.broadcast_to(jnp.transpose(starting_set, (0, 2, 1)),
                            (B, N, C)).astype(jnp.float32)
    mask0 = jnp.clip(jnp.broadcast_to(starting_mask[:, :, None], (B, N, 1)),
                     0.0, 1.0).astype(jnp.float32)
    xaug0 = jnp.concatenate([set0, mask0], axis=-1).reshape(BN, C1)

    # encoder weights (PyTorch conv1d(k=1) convention W: (out, in))
    W1 = jnp.asarray(params["W1"], jnp.float32)        # (D, C + 1)
    b1 = jnp.asarray(params["b1"], jnp.float32)        # (D,)
    W2 = jnp.asarray(params["W2"], jnp.float32)        # (D, D)
    b2 = jnp.asarray(params["b2"], jnp.float32)        # (D,)

    w1 = W1.T                    # (C+1, D)
    b1r = b1[None, :]            # (1, D)
    w2 = W2.T                    # (D, D)
    b2r = b2[None, :]            # (1, D)
    # fold loop-invariant scalars into the (tiny) weights, once, wrapper-side
    w2T_s = W2 * (1.0 / (float(N) * float(B) * float(D)))   # (D, D)
    w1T_s = float(lr) * W1                                  # (D, C+1)

    # hoisted pooling / expansion matrices (MXU replaces reshape+reduce+bcast)
    batch_ids = jnp.repeat(jnp.arange(B, dtype=jnp.int32), N)             # (BN,)
    expand = (batch_ids[:, None]
              == jnp.arange(B, dtype=jnp.int32)[None, :]).astype(jnp.float32)  # (BN, B)
    pool = expand.T * (1.0 / float(N))                                    # (B, BN)

    kernel = functools.partial(dspn_kernel, iters=int(iters))

    vmem_spec = lambda: pl.BlockSpec(memory_space=pltpu.MemorySpace.VMEM)

    out = pl.pallas_call(
        kernel,
        out_shape=jax.ShapeDtypeStruct((BN, C1), jnp.float32),
        in_specs=[vmem_spec() for _ in range(10)],
        out_specs=vmem_spec(),
        input_output_aliases={0: 0},   # final state overwrites xaug0 buffer
    )(xaug0, jnp.asarray(target_repr, jnp.float32), pool, expand,
      w1, b1r, w2, b2r, w2T_s, w1T_s)

    out = out.reshape(B, N, C1)
    final_set = jnp.transpose(out[:, :, :C], (0, 2, 1))   # (B, C, N) PyTorch layout
    final_mask = out[:, :, C]                             # (B, N)
    return final_set, final_mask


# -----------------------------------------------------------------------------
# Pure-JAX reference (uses autodiff) for verification
# -----------------------------------------------------------------------------
def _encoder_ref(x_bcn, mask_bn, W1, b1, W2, b2):
    N = x_bcn.shape[-1]
    xcat = jnp.concatenate([x_bcn, mask_bn[:, None, :]], axis=1)       # (B, C+1, N)
    h = jax.nn.relu(jnp.einsum("dc,bcn->bdn", W1, xcat) + b1[None, :, None])
    h2 = jnp.einsum("ed,bdn->ben", W2, h) + b2[None, :, None]
    return jnp.sum(h2, axis=-1) / N                                    # (B, D)


def dspn_forward_ref(target_repr, params, *, iters, lr):
    B, D = target_repr.shape
    starting_set = params["starting_set"]
    starting_mask = params["starting_mask"]
    _, C, N = starting_set.shape
    W1, b1, W2, b2 = params["W1"], params["b1"], params["W2"], params["b2"]

    x = jnp.broadcast_to(starting_set, (B, C, N))
    m = jnp.clip(jnp.broadcast_to(starting_mask, (B, N)), 0.0, 1.0)

    def loss_fn(x, m):
        r = _encoder_ref(x, m, W1, b1, W2, b2)
        d = r - target_repr
        return jnp.mean(jnp.where(jnp.abs(d) < 1.0, 0.5 * d * d,
                                  jnp.abs(d) - 0.5))

    grad_fn = jax.grad(loss_fn, argnums=(0, 1))
    for _ in range(iters):
        gx, gm = grad_fn(x, m)
        x = x - lr * gx
        m = jnp.clip(m - lr * gm, 0.0, 1.0)
    return x, m


# -----------------------------------------------------------------------------
if __name__ == "__main__":
    # Small deterministic shapes consistent with the module
    B = 2            # batch size
    C = 4            # set_channels
    N = 16           # max_set_size
    D = 32           # repr_channels (encoder output / target_repr dim)
    ITERS = 20
    LR = 20.0

    key = jax.random.PRNGKey(0)
    k_set, k_w1, k_b1, k_w2, k_b2, k_t = jax.random.split(key, 6)

    params = {
        "starting_set": jax.random.uniform(k_set, (1, C, N), jnp.float32),
        "starting_mask": 0.5 * jnp.ones((1, N), jnp.float32),
        "W1": 0.1 * jax.random.normal(k_w1, (D, C + 1), jnp.float32),
        "b1": 0.01 * jax.random.normal(k_b1, (D,), jnp.float32),
        "W2": 0.1 * jax.random.normal(k_w2, (D, D), jnp.float32),
        "b2": 0.01 * jax.random.normal(k_b2, (D,), jnp.float32),
    }
    target_repr = 0.5 * jax.random.normal(k_t, (B, D), jnp.float32)

    final_set, final_mask = dspn_forward(target_repr, params,
                                         iters=ITERS, lr=LR)
    jax.block_until_ready((final_set, final_mask))

    # Verify against autodiff reference
    ref_set, ref_mask = dspn_forward_ref(target_repr, params,
                                         iters=ITERS, lr=LR)
    np.testing.assert_allclose(np.asarray(final_set), np.asarray(ref_set),
                               rtol=2e-3, atol=2e-3)
    np.testing.assert_allclose(np.asarray(final_mask), np.asarray(ref_mask),
                               rtol=2e-3, atol=2e-3)

    assert final_set.shape == (B, C, N) and final_mask.shape == (B, N)
    print("KERNEL_OK")
</pallas_src>

<mosaic_0001>
module attributes {stable_mosaic.version = 11 : i64} {
  func.func @dspn_kernel(%arg0: memref<32x5xf32, #tpu.memory_space<vmem>>, %arg1: memref<2x32xf32, #tpu.memory_space<vmem>>, %arg2: memref<2x32xf32, #tpu.memory_space<vmem>>, %arg3: memref<32x2xf32, #tpu.memory_space<vmem>>, %arg4: memref<5x32xf32, #tpu.memory_space<vmem>>, %arg5: memref<1x32xf32, #tpu.memory_space<vmem>>, %arg6: memref<32x32xf32, #tpu.memory_space<vmem>>, %arg7: memref<1x32xf32, #tpu.memory_space<vmem>>, %arg8: memref<32x32xf32, #tpu.memory_space<vmem>>, %arg9: memref<32x5xf32, #tpu.memory_space<vmem>>, %arg10: memref<32x5xf32, #tpu.memory_space<vmem>>) attributes {dimension_semantics = [], scalar_prefetch = 0 : i64, scratch_operands = 0 : i64, tpu.core_type = #tpu.core_type<tc>} {
    %c0 = arith.constant 0 : index
    %c0_0 = arith.constant 0 : index
    %0 = vector.load %arg0[%c0, %c0_0] : memref<32x5xf32, #tpu.memory_space<vmem>>, vector<32x5xf32>
    %c0_1 = arith.constant 0 : index
    %c0_2 = arith.constant 0 : index
    %1 = vector.load %arg1[%c0_1, %c0_2] : memref<2x32xf32, #tpu.memory_space<vmem>>, vector<2x32xf32>
    %c0_3 = arith.constant 0 : index
    %c0_4 = arith.constant 0 : index
    %2 = vector.load %arg2[%c0_3, %c0_4] : memref<2x32xf32, #tpu.memory_space<vmem>>, vector<2x32xf32>
    %c0_5 = arith.constant 0 : index
    %c0_6 = arith.constant 0 : index
    %3 = vector.load %arg3[%c0_5, %c0_6] : memref<32x2xf32, #tpu.memory_space<vmem>>, vector<32x2xf32>
    %c0_7 = arith.constant 0 : index
    %c0_8 = arith.constant 0 : index
    %4 = vector.load %arg4[%c0_7, %c0_8] : memref<5x32xf32, #tpu.memory_space<vmem>>, vector<5x32xf32>
    %c0_9 = arith.constant 0 : index
    %c0_10 = arith.constant 0 : index
    %5 = vector.load %arg5[%c0_9, %c0_10] : memref<1x32xf32, #tpu.memory_space<vmem>>, vector<1x32xf32>
    %c0_11 = arith.constant 0 : index
    %c0_12 = arith.constant 0 : index
    %6 = vector.load %arg6[%c0_11, %c0_12] : memref<32x32xf32, #tpu.memory_space<vmem>>, vector<32x32xf32>
    %c0_13 = arith.constant 0 : index
    %c0_14 = arith.constant 0 : index
    %7 = vector.load %arg7[%c0_13, %c0_14] : memref<1x32xf32, #tpu.memory_space<vmem>>, vector<1x32xf32>
    %c0_15 = arith.constant 0 : index
    %c0_16 = arith.constant 0 : index
    %8 = vector.load %arg8[%c0_15, %c0_16] : memref<32x32xf32, #tpu.memory_space<vmem>>, vector<32x32xf32>
    %c0_17 = arith.constant 0 : index
    %c0_18 = arith.constant 0 : index
    %9 = vector.load %arg9[%c0_17, %c0_18] : memref<32x5xf32, #tpu.memory_space<vmem>>, vector<32x5xf32>
    %10 = tpu.iota {dimensions = array<i32: 1>} : vector<32x5xi32>
    %c4_i32 = arith.constant 4 : i32
    %11 = vector.broadcast %c4_i32 : i32 to vector<32x5xi32>
    %12 = arith.cmpi eq, %10, %11 : vector<32x5xi32>
    %c0_i32 = arith.constant 0 : i32
    %cst = arith.constant dense<0.000000e+00> : vector<32x32xf32>
    %13 = tpu.matmul %0, %4, %cst {dimension_numbers = #tpu.dot_dimension_numbers<[1], [0], [0], [1], [0, 0, 1, 1], [], []>} : vector<32x5xf32>, vector<5x32xf32>, vector<32x32xf32> -> vector<32x32xf32>
    %14 = vector.broadcast %5 : vector<1x32xf32> to vector<32x32xf32>
    %15 = arith.addf %13, %14 : vector<32x32xf32>
    %cst_19 = arith.constant 0.000000e+00 : f32
    %16 = vector.broadcast %cst_19 : f32 to vector<32x32xf32>
    %17 = arith.maximumf %15, %16 : vector<32x32xf32>
    %cst_20 = arith.constant dense<0.000000e+00> : vector<2x32xf32>
    %18 = tpu.matmul %2, %17, %cst_20 {dimension_numbers = #tpu.dot_dimension_numbers<[1], [0], [0], [1], [0, 0, 1, 1], [], []>} : vector<2x32xf32>, vector<32x32xf32>, vector<2x32xf32> -> vector<2x32xf32>
    %cst_21 = arith.constant dense<0.000000e+00> : vector<2x32xf32>
    %19 = tpu.matmul %18, %6, %cst_21 {dimension_numbers = #tpu.dot_dimension_numbers<[1], [0], [0], [1], [0, 0, 1, 1], [], []>} : vector<2x32xf32>, vector<32x32xf32>, vector<2x32xf32> -> vector<2x32xf32>
    %20 = vector.broadcast %7 : vector<1x32xf32> to vector<2x32xf32>
    %21 = arith.addf %19, %20 : vector<2x32xf32>
    %22 = arith.subf %21, %1 : vector<2x32xf32>
    %cst_22 = arith.constant -1.000000e+00 : f32
    %cst_23 = arith.constant 1.000000e+00 : f32
    %23 = vector.broadcast %cst_22 : f32 to vector<2x32xf32>
    %24 = arith.maximumf %23, %22 : vector<2x32xf32>
    %25 = vector.broadcast %cst_23 : f32 to vector<2x32xf32>
    %26 = arith.minimumf %25, %24 : vector<2x32xf32>
    %cst_24 = arith.constant dense<0.000000e+00> : vector<2x32xf32>
    %27 = tpu.matmul %26, %8, %cst_24 {dimension_numbers = #tpu.dot_dimension_numbers<[1], [0], [0], [1], [0, 0, 1, 1], [], []>} : vector<2x32xf32>, vector<32x32xf32>, vector<2x32xf32> -> vector<2x32xf32>
    %cst_25 = arith.constant dense<0.000000e+00> : vector<32x32xf32>
    %28 = tpu.matmul %3, %27, %cst_25 {dimension_numbers = #tpu.dot_dimension_numbers<[1], [0], [0], [1], [0, 0, 1, 1], [], []>} : vector<32x2xf32>, vector<2x32xf32>, vector<32x32xf32> -> vector<32x32xf32>
    %cst_26 = arith.constant 0.000000e+00 : f32
    %29 = vector.broadcast %cst_26 : f32 to vector<32x32xf32>
    %30 = arith.cmpf ogt, %15, %29 : vector<32x32xf32>
    %cst_27 = arith.constant 0.000000e+00 : f32
    %31 = vector.broadcast %cst_27 : f32 to vector<32x32xf32>
    %32 = arith.select %30, %28, %31 : vector<32x32xi1>, vector<32x32xf32>
    %cst_28 = arith.constant dense<0.000000e+00> : vector<32x5xf32>
    %33 = tpu.matmul %32, %9, %cst_28 {dimension_numbers = #tpu.dot_dimension_numbers<[1], [0], [0], [1], [0, 0, 1, 1], [], []>} : vector<32x32xf32>, vector<32x5xf32>, vector<32x5xf32> -> vector<32x5xf32>
    %34 = arith.subf %0, %33 : vector<32x5xf32>
    %cst_29 = arith.constant 0.000000e+00 : f32
    %cst_30 = arith.constant 1.000000e+00 : f32
    %35 = vector.broadcast %cst_29 : f32 to vector<32x5xf32>
    %36 = arith.maximumf %35, %34 : vector<32x5xf32>
    %37 = vector.broadcast %cst_30 : f32 to vector<32x5xf32>
    %38 = arith.minimumf %37, %36 : vector<32x5xf32>
    %39 = arith.select %12, %38, %34 : vector<32x5xi1>, vector<32x5xf32>
    %c1_i32 = arith.constant 1 : i32
    %cst_31 = arith.constant dense<0.000000e+00> : vector<32x32xf32>
    %40 = tpu.matmul %39, %4, %cst_31 {dimension_numbers = #tpu.dot_dimension_numbers<[1], [0], [0], [1], [0, 0, 1, 1], [], []>} : vector<32x5xf32>, vector<5x32xf32>, vector<32x32xf32> -> vector<32x32xf32>
    %41 = vector.broadcast %5 : vector<1x32xf32> to vector<32x32xf32>
    %42 = arith.addf %40, %41 : vector<32x32xf32>
    %cst_32 = arith.constant 0.000000e+00 : f32
    %43 = vector.broadcast %cst_32 : f32 to vector<32x32xf32>
    %44 = arith.maximumf %42, %43 : vector<32x32xf32>
    %cst_33 = arith.constant dense<0.000000e+00> : vector<2x32xf32>
    %45 = tpu.matmul %2, %44, %cst_33 {dimension_numbers = #tpu.dot_dimension_numbers<[1], [0], [0], [1], [0, 0, 1, 1], [], []>} : vector<2x32xf32>, vector<32x32xf32>, vector<2x32xf32> -> vector<2x32xf32>
    %cst_34 = arith.constant dense<0.000000e+00> : vector<2x32xf32>
    %46 = tpu.matmul %45, %6, %cst_34 {dimension_numbers = #tpu.dot_dimension_numbers<[1], [0], [0], [1], [0, 0, 1, 1], [], []>} : vector<2x32xf32>, vector<32x32xf32>, vector<2x32xf32> -> vector<2x32xf32>
    %47 = vector.broadcast %7 : vector<1x32xf32> to vector<2x32xf32>
    %48 = arith.addf %46, %47 : vector<2x32xf32>
    %49 = arith.subf %48, %1 : vector<2x32xf32>
    %cst_35 = arith.constant -1.000000e+00 : f32
    %cst_36 = arith.constant 1.000000e+00 : f32
    %50 = vector.broadcast %cst_35 : f32 to vector<2x32xf32>
    %51 = arith.maximumf %50, %49 : vector<2x32xf32>
    %52 = vector.broadcast %cst_36 : f32 to vector<2x32xf32>
    %53 = arith.minimumf %52, %51 : vector<2x32xf32>
    %cst_37 = arith.constant dense<0.000000e+00> : vector<2x32xf32>
    %54 = tpu.matmul %53, %8, %cst_37 {dimension_numbers = #tpu.dot_dimension_numbers<[1], [0], [0], [1], [0, 0, 1, 1], [], []>} : vector<2x32xf32>, vector<32x32xf32>, vector<2x32xf32> -> vector<2x32xf32>
    %cst_38 = arith.constant dense<0.000000e+00> : vector<32x32xf32>
    %55 = tpu.matmul %3, %54, %cst_38 {dimension_numbers = #tpu.dot_dimension_numbers<[1], [0], [0], [1], [0, 0, 1, 1], [], []>} : vector<32x2xf32>, vector<2x32xf32>, vector<32x32xf32> -> vector<32x32xf32>
    %cst_39 = arith.constant 0.000000e+00 : f32
    %56 = vector.broadcast %cst_39 : f32 to vector<32x32xf32>
    %57 = arith.cmpf ogt, %42, %56 : vector<32x32xf32>
    %cst_40 = arith.constant 0.000000e+00 : f32
    %58 = vector.broadcast %cst_40 : f32 to vector<32x32xf32>
    %59 = arith.select %57, %55, %58 : vector<32x32xi1>, vector<32x32xf32>
    %cst_41 = arith.constant dense<0.000000e+00> : vector<32x5xf32>
    %60 = tpu.matmul %59, %9, %cst_41 {dimension_numbers = #tpu.dot_dimension_numbers<[1], [0], [0], [1], [0, 0, 1, 1], [], []>} : vector<32x32xf32>, vector<32x5xf32>, vector<32x5xf32> -> vector<32x5xf32>
    %61 = arith.subf %39, %60 : vector<32x5xf32>
    %cst_42 = arith.constant 0.000000e+00 : f32
    %cst_43 = arith.constant 1.000000e+00 : f32
    %62 = vector.broadcast %cst_42 : f32 to vector<32x5xf32>
    %63 = arith.maximumf %62, %61 : vector<32x5xf32>
    %64 = vector.broadcast %cst_43 : f32 to vector<32x5xf32>
    %65 = arith.minimumf %64, %63 : vector<32x5xf32>
    %66 = arith.select %12, %65, %61 : vector<32x5xi1>, vector<32x5xf32>
    %c2_i32 = arith.constant 2 : i32
    %cst_44 = arith.constant dense<0.000000e+00> : vector<32x32xf32>
    %67 = tpu.matmul %66, %4, %cst_44 {dimension_numbers = #tpu.dot_dimension_numbers<[1], [0], [0], [1], [0, 0, 1, 1], [], []>} : vector<32x5xf32>, vector<5x32xf32>, vector<32x32xf32> -> vector<32x32xf32>
    %68 = vector.broadcast %5 : vector<1x32xf32> to vector<32x32xf32>
    %69 = arith.addf %67, %68 : vector<32x32xf32>
    %cst_45 = arith.constant 0.000000e+00 : f32
    %70 = vector.broadcast %cst_45 : f32 to vector<32x32xf32>
    %71 = arith.maximumf %69, %70 : vector<32x32xf32>
    %cst_46 = arith.constant dense<0.000000e+00> : vector<2x32xf32>
    %72 = tpu.matmul %2, %71, %cst_46 {dimension_numbers = #tpu.dot_dimension_numbers<[1], [0], [0], [1], [0, 0, 1, 1], [], []>} : vector<2x32xf32>, vector<32x32xf32>, vector<2x32xf32> -> vector<2x32xf32>
    %cst_47 = arith.constant dense<0.000000e+00> : vector<2x32xf32>
    %73 = tpu.matmul %72, %6, %cst_47 {dimension_numbers = #tpu.dot_dimension_numbers<[1], [0], [0], [1], [0, 0, 1, 1], [], []>} : vector<2x32xf32>, vector<32x32xf32>, vector<2x32xf32> -> vector<2x32xf32>
    %74 = vector.broadcast %7 : vector<1x32xf32> to vector<2x32xf32>
    %75 = arith.addf %73, %74 : vector<2x32xf32>
    %76 = arith.subf %75, %1 : vector<2x32xf32>
    %cst_48 = arith.constant -1.000000e+00 : f32
    %cst_49 = arith.constant 1.000000e+00 : f32
    %77 = vector.broadcast %cst_48 : f32 to vector<2x32xf32>
    %78 = arith.maximumf %77, %76 : vector<2x32xf32>
    %79 = vector.broadcast %cst_49 : f32 to vector<2x32xf32>
    %80 = arith.minimumf %79, %78 : vector<2x32xf32>
    %cst_50 = arith.constant dense<0.000000e+00> : vector<2x32xf32>
    %81 = tpu.matmul %80, %8, %cst_50 {dimension_numbers = #tpu.dot_dimension_numbers<[1], [0], [0], [1], [0, 0, 1, 1], [], []>} : vector<2x32xf32>, vector<32x32xf32>, vector<2x32xf32> -> vector<2x32xf32>
    %cst_51 = arith.constant dense<0.000000e+00> : vector<32x32xf32>
    %82 = tpu.matmul %3, %81, %cst_51 {dimension_numbers = #tpu.dot_dimension_numbers<[1], [0], [0], [1], [0, 0, 1, 1], [], []>} : vector<32x2xf32>, vector<2x32xf32>, vector<32x32xf32> -> vector<32x32xf32>
    %cst_52 = arith.constant 0.000000e+00 : f32
    %83 = vector.broadcast %cst_52 : f32 to vector<32x32xf32>
    %84 = arith.cmpf ogt, %69, %83 : vector<32x32xf32>
    %cst_53 = arith.constant 0.000000e+00 : f32
    %85 = vector.broadcast %cst_53 : f32 to vector<32x32xf32>
    %86 = arith.select %84, %82, %85 : vector<32x32xi1>, vector<32x32xf32>
    %cst_54 = arith.constant dense<0.000000e+00> : vector<32x5xf32>
    %87 = tpu.matmul %86, %9, %cst_54 {dimension_numbers = #tpu.dot_dimension_numbers<[1], [0], [0], [1], [0, 0, 1, 1], [], []>} : vector<32x32xf32>, vector<32x5xf32>, vector<32x5xf32> -> vector<32x5xf32>
    %88 = arith.subf %66, %87 : vector<32x5xf32>
    %cst_55 = arith.constant 0.000000e+00 : f32
    %cst_56 = arith.constant 1.000000e+00 : f32
    %89 = vector.broadcast %cst_55 : f32 to vector<32x5xf32>
    %90 = arith.maximumf %89, %88 : vector<32x5xf32>
    %91 = vector.broadcast %cst_56 : f32 to vector<32x5xf32>
    %92 = arith.minimumf %91, %90 : vector<32x5xf32>
    %93 = arith.select %12, %92, %88 : vector<32x5xi1>, vector<32x5xf32>
    %c3_i32 = arith.constant 3 : i32
    %cst_57 = arith.constant dense<0.000000e+00> : vector<32x32xf32>
    %94 = tpu.matmul %93, %4, %cst_57 {dimension_numbers = #tpu.dot_dimension_numbers<[1], [0], [0], [1], [0, 0, 1, 1], [], []>} : vector<32x5xf32>, vector<5x32xf32>, vector<32x32xf32> -> vector<32x32xf32>
    %95 = vector.broadcast %5 : vector<1x32xf32> to vector<32x32xf32>
    %96 = arith.addf %94, %95 : vector<32x32xf32>
    %cst_58 = arith.constant 0.000000e+00 : f32
    %97 = vector.broadcast %cst_58 : f32 to vector<32x32xf32>
    %98 = arith.maximumf %96, %97 : vector<32x32xf32>
    %cst_59 = arith.constant dense<0.000000e+00> : vector<2x32xf32>
    %99 = tpu.matmul %2, %98, %cst_59 {dimension_numbers = #tpu.dot_dimension_numbers<[1], [0], [0], [1], [0, 0, 1, 1], [], []>} : vector<2x32xf32>, vector<32x32xf32>, vector<2x32xf32> -> vector<2x32xf32>
    %cst_60 = arith.constant dense<0.000000e+00> : vector<2x32xf32>
    %100 = tpu.matmul %99, %6, %cst_60 {dimension_numbers = #tpu.dot_dimension_numbers<[1], [0], [0], [1], [0, 0, 1, 1], [], []>} : vector<2x32xf32>, vector<32x32xf32>, vector<2x32xf32> -> vector<2x32xf32>
    %101 = vector.broadcast %7 : vector<1x32xf32> to vector<2x32xf32>
    %102 = arith.addf %100, %101 : vector<2x32xf32>
    %103 = arith.subf %102, %1 : vector<2x32xf32>
    %cst_61 = arith.constant -1.000000e+00 : f32
    %cst_62 = arith.constant 1.000000e+00 : f32
    %104 = vector.broadcast %cst_61 : f32 to vector<2x32xf32>
    %105 = arith.maximumf %104, %103 : vector<2x32xf32>
    %106 = vector.broadcast %cst_62 : f32 to vector<2x32xf32>
    %107 = arith.minimumf %106, %105 : vector<2x32xf32>
    %cst_63 = arith.constant dense<0.000000e+00> : vector<2x32xf32>
    %108 = tpu.matmul %107, %8, %cst_63 {dimension_numbers = #tpu.dot_dimension_numbers<[1], [0], [0], [1], [0, 0, 1, 1], [], []>} : vector<2x32xf32>, vector<32x32xf32>, vector<2x32xf32> -> vector<2x32xf32>
    %cst_64 = arith.constant dense<0.000000e+00> : vector<32x32xf32>
    %109 = tpu.matmul %3, %108, %cst_64 {dimension_numbers = #tpu.dot_dimension_numbers<[1], [0], [0], [1], [0, 0, 1, 1], [], []>} : vector<32x2xf32>, vector<2x32xf32>, vector<32x32xf32> -> vector<32x32xf32>
    %cst_65 = arith.constant 0.000000e+00 : f32
    %110 = vector.broadcast %cst_65 : f32 to vector<32x32xf32>
    %111 = arith.cmpf ogt, %96, %110 : vector<32x32xf32>
    %cst_66 = arith.constant 0.000000e+00 : f32
    %112 = vector.broadcast %cst_66 : f32 to vector<32x32xf32>
    %113 = arith.select %111, %109, %112 : vector<32x32xi1>, vector<32x32xf32>
    %cst_67 = arith.constant dense<0.000000e+00> : vector<32x5xf32>
    %114 = tpu.matmul %113, %9, %cst_67 {dimension_numbers = #tpu.dot_dimension_numbers<[1], [0], [0], [1], [0, 0, 1, 1], [], []>} : vector<32x32xf32>, vector<32x5xf32>, vector<32x5xf32> -> vector<32x5xf32>
    %115 = arith.subf %93, %114 : vector<32x5xf32>
    %cst_68 = arith.constant 0.000000e+00 : f32
    %cst_69 = arith.constant 1.000000e+00 : f32
    %116 = vector.broadcast %cst_68 : f32 to vector<32x5xf32>
    %117 = arith.maximumf %116, %115 : vector<32x5xf32>
    %118 = vector.broadcast %cst_69 : f32 to vector<32x5xf32>
    %119 = arith.minimumf %118, %117 : vector<32x5xf32>
    %120 = arith.select %12, %119, %115 : vector<32x5xi1>, vector<32x5xf32>
    %c4_i32_70 = arith.constant 4 : i32
    %cst_71 = arith.constant dense<0.000000e+00> : vector<32x32xf32>
    %121 = tpu.matmul %120, %4, %cst_71 {dimension_numbers = #tpu.dot_dimension_numbers<[1], [0], [0], [1], [0, 0, 1, 1], [], []>} : vector<32x5xf32>, vector<5x32xf32>, vector<32x32xf32> -> vector<32x32xf32>
    %122 = vector.broadcast %5 : vector<1x32xf32> to vector<32x32xf32>
    %123 = arith.addf %121, %122 : vector<32x32xf32>
    %cst_72 = arith.constant 0.000000e+00 : f32
    %124 = vector.broadcast %cst_72 : f32 to vector<32x32xf32>
    %125 = arith.maximumf %123, %124 : vector<32x32xf32>
    %cst_73 = arith.constant dense<0.000000e+00> : vector<2x32xf32>
    %126 = tpu.matmul %2, %125, %cst_73 {dimension_numbers = #tpu.dot_dimension_numbers<[1], [0], [0], [1], [0, 0, 1, 1], [], []>} : vector<2x32xf32>, vector<32x32xf32>, vector<2x32xf32> -> vector<2x32xf32>
    %cst_74 = arith.constant dense<0.000000e+00> : vector<2x32xf32>
    %127 = tpu.matmul %126, %6, %cst_74 {dimension_numbers = #tpu.dot_dimension_numbers<[1], [0], [0], [1], [0, 0, 1, 1], [], []>} : vector<2x32xf32>, vector<32x32xf32>, vector<2x32xf32> -> vector<2x32xf32>
    %128 = vector.broadcast %7 : vector<1x32xf32> to vector<2x32xf32>
    %129 = arith.addf %127, %128 : vector<2x32xf32>
    %130 = arith.subf %129, %1 : vector<2x32xf32>
    %cst_75 = arith.constant -1.000000e+00 : f32
    %cst_76 = arith.constant 1.000000e+00 : f32
    %131 = vector.broadcast %cst_75 : f32 to vector<2x32xf32>
    %132 = arith.maximumf %131, %130 : vector<2x32xf32>
    %133 = vector.broadcast %cst_76 : f32 to vector<2x32xf32>
    %134 = arith.minimumf %133, %132 : vector<2x32xf32>
    %cst_77 = arith.constant dense<0.000000e+00> : vector<2x32xf32>
    %135 = tpu.matmul %134, %8, %cst_77 {dimension_numbers = #tpu.dot_dimension_numbers<[1], [0], [0], [1], [0, 0, 1, 1], [], []>} : vector<2x32xf32>, vector<32x32xf32>, vector<2x32xf32> -> vector<2x32xf32>
    %cst_78 = arith.constant dense<0.000000e+00> : vector<32x32xf32>
    %136 = tpu.matmul %3, %135, %cst_78 {dimension_numbers = #tpu.dot_dimension_numbers<[1], [0], [0], [1], [0, 0, 1, 1], [], []>} : vector<32x2xf32>, vector<2x32xf32>, vector<32x32xf32> -> vector<32x32xf32>
    %cst_79 = arith.constant 0.000000e+00 : f32
    %137 = vector.broadcast %cst_79 : f32 to vector<32x32xf32>
    %138 = arith.cmpf ogt, %123, %137 : vector<32x32xf32>
    %cst_80 = arith.constant 0.000000e+00 : f32
    %139 = vector.broadcast %cst_80 : f32 to vector<32x32xf32>
    %140 = arith.select %138, %136, %139 : vector<32x32xi1>, vector<32x32xf32>
    %cst_81 = arith.constant dense<0.000000e+00> : vector<32x5xf32>
    %141 = tpu.matmul %140, %9, %cst_81 {dimension_numbers = #tpu.dot_dimension_numbers<[1], [0], [0], [1], [0, 0, 1, 1], [], []>} : vector<32x32xf32>, vector<32x5xf32>, vector<32x5xf32> -> vector<32x5xf32>
    %142 = arith.subf %120, %141 : vector<32x5xf32>
    %cst_82 = arith.constant 0.000000e+00 : f32
    %cst_83 = arith.constant 1.000000e+00 : f32
    %143 = vector.broadcast %cst_82 : f32 to vector<32x5xf32>
    %144 = arith.maximumf %143, %142 : vector<32x5xf32>
    %145 = vector.broadcast %cst_83 : f32 to vector<32x5xf32>
    %146 = arith.minimumf %145, %144 : vector<32x5xf32>
    %147 = arith.select %12, %146, %142 : vector<32x5xi1>, vector<32x5xf32>
    %c5_i32 = arith.constant 5 : i32
    %cst_84 = arith.constant dense<0.000000e+00> : vector<32x32xf32>
    %148 = tpu.matmul %147, %4, %cst_84 {dimension_numbers = #tpu.dot_dimension_numbers<[1], [0], [0], [1], [0, 0, 1, 1], [], []>} : vector<32x5xf32>, vector<5x32xf32>, vector<32x32xf32> -> vector<32x32xf32>
    %149 = vector.broadcast %5 : vector<1x32xf32> to vector<32x32xf32>
    %150 = arith.addf %148, %149 : vector<32x32xf32>
    %cst_85 = arith.constant 0.000000e+00 : f32
    %151 = vector.broadcast %cst_85 : f32 to vector<32x32xf32>
    %152 = arith.maximumf %150, %151 : vector<32x32xf32>
    %cst_86 = arith.constant dense<0.000000e+00> : vector<2x32xf32>
    %153 = tpu.matmul %2, %152, %cst_86 {dimension_numbers = #tpu.dot_dimension_numbers<[1], [0], [0], [1], [0, 0, 1, 1], [], []>} : vector<2x32xf32>, vector<32x32xf32>, vector<2x32xf32> -> vector<2x32xf32>
    %cst_87 = arith.constant dense<0.000000e+00> : vector<2x32xf32>
    %154 = tpu.matmul %153, %6, %cst_87 {dimension_numbers = #tpu.dot_dimension_numbers<[1], [0], [0], [1], [0, 0, 1, 1], [], []>} : vector<2x32xf32>, vector<32x32xf32>, vector<2x32xf32> -> vector<2x32xf32>
    %155 = vector.broadcast %7 : vector<1x32xf32> to vector<2x32xf32>
    %156 = arith.addf %154, %155 : vector<2x32xf32>
    %157 = arith.subf %156, %1 : vector<2x32xf32>
    %cst_88 = arith.constant -1.000000e+00 : f32
    %cst_89 = arith.constant 1.000000e+00 : f32
    %158 = vector.broadcast %cst_88 : f32 to vector<2x32xf32>
    %159 = arith.maximumf %158, %157 : vector<2x32xf32>
    %160 = vector.broadcast %cst_89 : f32 to vector<2x32xf32>
    %161 = arith.minimumf %160, %159 : vector<2x32xf32>
    %cst_90 = arith.constant dense<0.000000e+00> : vector<2x32xf32>
    %162 = tpu.matmul %161, %8, %cst_90 {dimension_numbers = #tpu.dot_dimension_numbers<[1], [0], [0], [1], [0, 0, 1, 1], [], []>} : vector<2x32xf32>, vector<32x32xf32>, vector<2x32xf32> -> vector<2x32xf32>
    %cst_91 = arith.constant dense<0.000000e+00> : vector<32x32xf32>
    %163 = tpu.matmul %3, %162, %cst_91 {dimension_numbers = #tpu.dot_dimension_numbers<[1], [0], [0], [1], [0, 0, 1, 1], [], []>} : vector<32x2xf32>, vector<2x32xf32>, vector<32x32xf32> -> vector<32x32xf32>
    %cst_92 = arith.constant 0.000000e+00 : f32
    %164 = vector.broadcast %cst_92 : f32 to vector<32x32xf32>
    %165 = arith.cmpf ogt, %150, %164 : vector<32x32xf32>
    %cst_93 = arith.constant 0.000000e+00 : f32
    %166 = vector.broadcast %cst_93 : f32 to vector<32x32xf32>
    %167 = arith.select %165, %163, %166 : vector<32x32xi1>, vector<32x32xf32>
    %cst_94 = arith.constant dense<0.000000e+00> : vector<32x5xf32>
    %168 = tpu.matmul %167, %9, %cst_94 {dimension_numbers = #tpu.dot_dimension_numbers<[1], [0], [0], [1], [0, 0, 1, 1], [], []>} : vector<32x32xf32>, vector<32x5xf32>, vector<32x5xf32> -> vector<32x5xf32>
    %169 = arith.subf %147, %168 : vector<32x5xf32>
    %cst_95 = arith.constant 0.000000e+00 : f32
    %cst_96 = arith.constant 1.000000e+00 : f32
    %170 = vector.broadcast %cst_95 : f32 to vector<32x5xf32>
    %171 = arith.maximumf %170, %169 : vector<32x5xf32>
    %172 = vector.broadcast %cst_96 : f32 to vector<32x5xf32>
    %173 = arith.minimumf %172, %171 : vector<32x5xf32>
    %174 = arith.select %12, %173, %169 : vector<32x5xi1>, vector<32x5xf32>
    %c6_i32 = arith.constant 6 : i32
    %cst_97 = arith.constant dense<0.000000e+00> : vector<32x32xf32>
    %175 = tpu.matmul %174, %4, %cst_97 {dimension_numbers = #tpu.dot_dimension_numbers<[1], [0], [0], [1], [0, 0, 1, 1], [], []>} : vector<32x5xf32>, vector<5x32xf32>, vector<32x32xf32> -> vector<32x32xf32>
    %176 = vector.broadcast %5 : vector<1x32xf32> to vector<32x32xf32>
    %177 = arith.addf %175, %176 : vector<32x32xf32>
    %cst_98 = arith.constant 0.000000e+00 : f32
    %178 = vector.broadcast %cst_98 : f32 to vector<32x32xf32>
    %179 = arith.maximumf %177, %178 : vector<32x32xf32>
    %cst_99 = arith.constant dense<0.000000e+00> : vector<2x32xf32>
    %180 = tpu.matmul %2, %179, %cst_99 {dimension_numbers = #tpu.dot_dimension_numbers<[1], [0], [0], [1], [0, 0, 1, 1], [], []>} : vector<2x32xf32>, vector<32x32xf32>, vector<2x32xf32> -> vector<2x32xf32>
    %cst_100 = arith.constant dense<0.000000e+00> : vector<2x32xf32>
    %181 = tpu.matmul %180, %6, %cst_100 {dimension_numbers = #tpu.dot_dimension_numbers<[1], [0], [0], [1], [0, 0, 1, 1], [], []>} : vector<2x32xf32>, vector<32x32xf32>, vector<2x32xf32> -> vector<2x32xf32>
    %182 = vector.broadcast %7 : vector<1x32xf32> to vector<2x32xf32>
    %183 = arith.addf %181, %182 : vector<2x32xf32>
    %184 = arith.subf %183, %1 : vector<2x32xf32>
    %cst_101 = arith.constant -1.000000e+00 : f32
    %cst_102 = arith.constant 1.000000e+00 : f32
    %185 = vector.broadcast %cst_101 : f32 to vector<2x32xf32>
    %186 = arith.maximumf %185, %184 : vector<2x32xf32>
    %187 = vector.broadcast %cst_102 : f32 to vector<2x32xf32>
    %188 = arith.minimumf %187, %186 : vector<2x32xf32>
    %cst_103 = arith.constant dense<0.000000e+00> : vector<2x32xf32>
    %189 = tpu.matmul %188, %8, %cst_103 {dimension_numbers = #tpu.dot_dimension_numbers<[1], [0], [0], [1], [0, 0, 1, 1], [], []>} : vector<2x32xf32>, vector<32x32xf32>, vector<2x32xf32> -> vector<2x32xf32>
    %cst_104 = arith.constant dense<0.000000e+00> : vector<32x32xf32>
    %190 = tpu.matmul %3, %189, %cst_104 {dimension_numbers = #tpu.dot_dimension_numbers<[1], [0], [0], [1], [0, 0, 1, 1], [], []>} : vector<32x2xf32>, vector<2x32xf32>, vector<32x32xf32> -> vector<32x32xf32>
    %cst_105 = arith.constant 0.000000e+00 : f32
    %191 = vector.broadcast %cst_105 : f32 to vector<32x32xf32>
    %192 = arith.cmpf ogt, %177, %191 : vector<32x32xf32>
    %cst_106 = arith.constant 0.000000e+00 : f32
    %193 = vector.broadcast %cst_106 : f32 to vector<32x32xf32>
    %194 = arith.select %192, %190, %193 : vector<32x32xi1>, vector<32x32xf32>
    %cst_107 = arith.constant dense<0.000000e+00> : vector<32x5xf32>
    %195 = tpu.matmul %194, %9, %cst_107 {dimension_numbers = #tpu.dot_dimension_numbers<[1], [0], [0], [1], [0, 0, 1, 1], [], []>} : vector<32x32xf32>, vector<32x5xf32>, vector<32x5xf32> -> vector<32x5xf32>
    %196 = arith.subf %174, %195 : vector<32x5xf32>
    %cst_108 = arith.constant 0.000000e+00 : f32
    %cst_109 = arith.constant 1.000000e+00 : f32
    %197 = vector.broadcast %cst_108 : f32 to vector<32x5xf32>
    %198 = arith.maximumf %197, %196 : vector<32x5xf32>
    %199 = vector.broadcast %cst_109 : f32 to vector<32x5xf32>
    %200 = arith.minimumf %199, %198 : vector<32x5xf32>
    %201 = arith.select %12, %200, %196 : vector<32x5xi1>, vector<32x5xf32>
    %c7_i32 = arith.constant 7 : i32
    %cst_110 = arith.constant dense<0.000000e+00> : vector<32x32xf32>
    %202 = tpu.matmul %201, %4, %cst_110 {dimension_numbers = #tpu.dot_dimension_numbers<[1], [0], [0], [1], [0, 0, 1, 1], [], []>} : vector<32x5xf32>, vector<5x32xf32>, vector<32x32xf32> -> vector<32x32xf32>
    %203 = vector.broadcast %5 : vector<1x32xf32> to vector<32x32xf32>
    %204 = arith.addf %202, %203 : vector<32x32xf32>
    %cst_111 = arith.constant 0.000000e+00 : f32
    %205 = vector.broadcast %cst_111 : f32 to vector<32x32xf32>
    %206 = arith.maximumf %204, %205 : vector<32x32xf32>
    %cst_112 = arith.constant dense<0.000000e+00> : vector<2x32xf32>
    %207 = tpu.matmul %2, %206, %cst_112 {dimension_numbers = #tpu.dot_dimension_numbers<[1], [0], [0], [1], [0, 0, 1, 1], [], []>} : vector<2x32xf32>, vector<32x32xf32>, vector<2x32xf32> -> vector<2x32xf32>
    %cst_113 = arith.constant dense<0.000000e+00> : vector<2x32xf32>
    %208 = tpu.matmul %207, %6, %cst_113 {dimension_numbers = #tpu.dot_dimension_numbers<[1], [0], [0], [1], [0, 0, 1, 1], [], []>} : vector<2x32xf32>, vector<32x32xf32>, vector<2x32xf32> -> vector<2x32xf32>
    %209 = vector.broadcast %7 : vector<1x32xf32> to vector<2x32xf32>
    %210 = arith.addf %208, %209 : vector<2x32xf32>
    %211 = arith.subf %210, %1 : vector<2x32xf32>
    %cst_114 = arith.constant -1.000000e+00 : f32
    %cst_115 = arith.constant 1.000000e+00 : f32
    %212 = vector.broadcast %cst_114 : f32 to vector<2x32xf32>
    %213 = arith.maximumf %212, %211 : vector<2x32xf32>
    %214 = vector.broadcast %cst_115 : f32 to vector<2x32xf32>
    %215 = arith.minimumf %214, %213 : vector<2x32xf32>
    %cst_116 = arith.constant dense<0.000000e+00> : vector<2x32xf32>
    %216 = tpu.matmul %215, %8, %cst_116 {dimension_numbers = #tpu.dot_dimension_numbers<[1], [0], [0], [1], [0, 0, 1, 1], [], []>} : vector<2x32xf32>, vector<32x32xf32>, vector<2x32xf32> -> vector<2x32xf32>
    %cst_117 = arith.constant dense<0.000000e+00> : vector<32x32xf32>
    %217 = tpu.matmul %3, %216, %cst_117 {dimension_numbers = #tpu.dot_dimension_numbers<[1], [0], [0], [1], [0, 0, 1, 1], [], []>} : vector<32x2xf32>, vector<2x32xf32>, vector<32x32xf32> -> vector<32x32xf32>
    %cst_118 = arith.constant 0.000000e+00 : f32
    %218 = vector.broadcast %cst_118 : f32 to vector<32x32xf32>
    %219 = arith.cmpf ogt, %204, %218 : vector<32x32xf32>
    %cst_119 = arith.constant 0.000000e+00 : f32
    %220 = vector.broadcast %cst_119 : f32 to vector<32x32xf32>
    %221 = arith.select %219, %217, %220 : vector<32x32xi1>, vector<32x32xf32>
    %cst_120 = arith.constant dense<0.000000e+00> : vector<32x5xf32>
    %222 = tpu.matmul %221, %9, %cst_120 {dimension_numbers = #tpu.dot_dimension_numbers<[1], [0], [0], [1], [0, 0, 1, 1], [], []>} : vector<32x32xf32>, vector<32x5xf32>, vector<32x5xf32> -> vector<32x5xf32>
    %223 = arith.subf %201, %222 : vector<32x5xf32>
    %cst_121 = arith.constant 0.000000e+00 : f32
    %cst_122 = arith.constant 1.000000e+00 : f32
    %224 = vector.broadcast %cst_121 : f32 to vector<32x5xf32>
    %225 = arith.maximumf %224, %223 : vector<32x5xf32>
    %226 = vector.broadcast %cst_122 : f32 to vector<32x5xf32>
    %227 = arith.minimumf %226, %225 : vector<32x5xf32>
    %228 = arith.select %12, %227, %223 : vector<32x5xi1>, vector<32x5xf32>
    %c8_i32 = arith.constant 8 : i32
    %cst_123 = arith.constant dense<0.000000e+00> : vector<32x32xf32>
    %229 = tpu.matmul %228, %4, %cst_123 {dimension_numbers = #tpu.dot_dimension_numbers<[1], [0], [0], [1], [0, 0, 1, 1], [], []>} : vector<32x5xf32>, vector<5x32xf32>, vector<32x32xf32> -> vector<32x32xf32>
    %230 = vector.broadcast %5 : vector<1x32xf32> to vector<32x32xf32>
    %231 = arith.addf %229, %230 : vector<32x32xf32>
    %cst_124 = arith.constant 0.000000e+00 : f32
    %232 = vector.broadcast %cst_124 : f32 to vector<32x32xf32>
    %233 = arith.maximumf %231, %232 : vector<32x32xf32>
    %cst_125 = arith.constant dense<0.000000e+00> : vector<2x32xf32>
    %234 = tpu.matmul %2, %233, %cst_125 {dimension_numbers = #tpu.dot_dimension_numbers<[1], [0], [0], [1], [0, 0, 1, 1], [], []>} : vector<2x32xf32>, vector<32x32xf32>, vector<2x32xf32> -> vector<2x32xf32>
    %cst_126 = arith.constant dense<0.000000e+00> : vector<2x32xf32>
    %235 = tpu.matmul %234, %6, %cst_126 {dimension_numbers = #tpu.dot_dimension_numbers<[1], [0], [0], [1], [0, 0, 1, 1], [], []>} : vector<2x32xf32>, vector<32x32xf32>, vector<2x32xf32> -> vector<2x32xf32>
    %236 = vector.broadcast %7 : vector<1x32xf32> to vector<2x32xf32>
    %237 = arith.addf %235, %236 : vector<2x32xf32>
    %238 = arith.subf %237, %1 : vector<2x32xf32>
    %cst_127 = arith.constant -1.000000e+00 : f32
    %cst_128 = arith.constant 1.000000e+00 : f32
    %239 = vector.broadcast %cst_127 : f32 to vector<2x32xf32>
    %240 = arith.maximumf %239, %238 : vector<2x32xf32>
    %241 = vector.broadcast %cst_128 : f32 to vector<2x32xf32>
    %242 = arith.minimumf %241, %240 : vector<2x32xf32>
    %cst_129 = arith.constant dense<0.000000e+00> : vector<2x32xf32>
    %243 = tpu.matmul %242, %8, %cst_129 {dimension_numbers = #tpu.dot_dimension_numbers<[1], [0], [0], [1], [0, 0, 1, 1], [], []>} : vector<2x32xf32>, vector<32x32xf32>, vector<2x32xf32> -> vector<2x32xf32>
    %cst_130 = arith.constant dense<0.000000e+00> : vector<32x32xf32>
    %244 = tpu.matmul %3, %243, %cst_130 {dimension_numbers = #tpu.dot_dimension_numbers<[1], [0], [0], [1], [0, 0, 1, 1], [], []>} : vector<32x2xf32>, vector<2x32xf32>, vector<32x32xf32> -> vector<32x32xf32>
    %cst_131 = arith.constant 0.000000e+00 : f32
    %245 = vector.broadcast %cst_131 : f32 to vector<32x32xf32>
    %246 = arith.cmpf ogt, %231, %245 : vector<32x32xf32>
    %cst_132 = arith.constant 0.000000e+00 : f32
    %247 = vector.broadcast %cst_132 : f32 to vector<32x32xf32>
    %248 = arith.select %246, %244, %247 : vector<32x32xi1>, vector<32x32xf32>
    %cst_133 = arith.constant dense<0.000000e+00> : vector<32x5xf32>
    %249 = tpu.matmul %248, %9, %cst_133 {dimension_numbers = #tpu.dot_dimension_numbers<[1], [0], [0], [1], [0, 0, 1, 1], [], []>} : vector<32x32xf32>, vector<32x5xf32>, vector<32x5xf32> -> vector<32x5xf32>
    %250 = arith.subf %228, %249 : vector<32x5xf32>
    %cst_134 = arith.constant 0.000000e+00 : f32
    %cst_135 = arith.constant 1.000000e+00 : f32
    %251 = vector.broadcast %cst_134 : f32 to vector<32x5xf32>
    %252 = arith.maximumf %251, %250 : vector<32x5xf32>
    %253 = vector.broadcast %cst_135 : f32 to vector<32x5xf32>
    %254 = arith.minimumf %253, %252 : vector<32x5xf32>
    %255 = arith.select %12, %254, %250 : vector<32x5xi1>, vector<32x5xf32>
    %c9_i32 = arith.constant 9 : i32
    %cst_136 = arith.constant dense<0.000000e+00> : vector<32x32xf32>
    %256 = tpu.matmul %255, %4, %cst_136 {dimension_numbers = #tpu.dot_dimension_numbers<[1], [0], [0], [1], [0, 0, 1, 1], [], []>} : vector<32x5xf32>, vector<5x32xf32>, vector<32x32xf32> -> vector<32x32xf32>
    %257 = vector.broadcast %5 : vector<1x32xf32> to vector<32x32xf32>
    %258 = arith.addf %256, %257 : vector<32x32xf32>
    %cst_137 = arith.constant 0.000000e+00 : f32
    %259 = vector.broadcast %cst_137 : f32 to vector<32x32xf32>
    %260 = arith.maximumf %258, %259 : vector<32x32xf32>
    %cst_138 = arith.constant dense<0.000000e+00> : vector<2x32xf32>
    %261 = tpu.matmul %2, %260, %cst_138 {dimension_numbers = #tpu.dot_dimension_numbers<[1], [0], [0], [1], [0, 0, 1, 1], [], []>} : vector<2x32xf32>, vector<32x32xf32>, vector<2x32xf32> -> vector<2x32xf32>
    %cst_139 = arith.constant dense<0.000000e+00> : vector<2x32xf32>
    %262 = tpu.matmul %261, %6, %cst_139 {dimension_numbers = #tpu.dot_dimension_numbers<[1], [0], [0], [1], [0, 0, 1, 1], [], []>} : vector<2x32xf32>, vector<32x32xf32>, vector<2x32xf32> -> vector<2x32xf32>
    %263 = vector.broadcast %7 : vector<1x32xf32> to vector<2x32xf32>
    %264 = arith.addf %262, %263 : vector<2x32xf32>
    %265 = arith.subf %264, %1 : vector<2x32xf32>
    %cst_140 = arith.constant -1.000000e+00 : f32
    %cst_141 = arith.constant 1.000000e+00 : f32
    %266 = vector.broadcast %cst_140 : f32 to vector<2x32xf32>
    %267 = arith.maximumf %266, %265 : vector<2x32xf32>
    %268 = vector.broadcast %cst_141 : f32 to vector<2x32xf32>
    %269 = arith.minimumf %268, %267 : vector<2x32xf32>
    %cst_142 = arith.constant dense<0.000000e+00> : vector<2x32xf32>
    %270 = tpu.matmul %269, %8, %cst_142 {dimension_numbers = #tpu.dot_dimension_numbers<[1], [0], [0], [1], [0, 0, 1, 1], [], []>} : vector<2x32xf32>, vector<32x32xf32>, vector<2x32xf32> -> vector<2x32xf32>
    %cst_143 = arith.constant dense<0.000000e+00> : vector<32x32xf32>
    %271 = tpu.matmul %3, %270, %cst_143 {dimension_numbers = #tpu.dot_dimension_numbers<[1], [0], [0], [1], [0, 0, 1, 1], [], []>} : vector<32x2xf32>, vector<2x32xf32>, vector<32x32xf32> -> vector<32x32xf32>
    %cst_144 = arith.constant 0.000000e+00 : f32
    %272 = vector.broadcast %cst_144 : f32 to vector<32x32xf32>
    %273 = arith.cmpf ogt, %258, %272 : vector<32x32xf32>
    %cst_145 = arith.constant 0.000000e+00 : f32
    %274 = vector.broadcast %cst_145 : f32 to vector<32x32xf32>
    %275 = arith.select %273, %271, %274 : vector<32x32xi1>, vector<32x32xf32>
    %cst_146 = arith.constant dense<0.000000e+00> : vector<32x5xf32>
    %276 = tpu.matmul %275, %9, %cst_146 {dimension_numbers = #tpu.dot_dimension_numbers<[1], [0], [0], [1], [0, 0, 1, 1], [], []>} : vector<32x32xf32>, vector<32x5xf32>, vector<32x5xf32> -> vector<32x5xf32>
    %277 = arith.subf %255, %276 : vector<32x5xf32>
    %cst_147 = arith.constant 0.000000e+00 : f32
    %cst_148 = arith.constant 1.000000e+00 : f32
    %278 = vector.broadcast %cst_147 : f32 to vector<32x5xf32>
    %279 = arith.maximumf %278, %277 : vector<32x5xf32>
    %280 = vector.broadcast %cst_148 : f32 to vector<32x5xf32>
    %281 = arith.minimumf %280, %279 : vector<32x5xf32>
    %282 = arith.select %12, %281, %277 : vector<32x5xi1>, vector<32x5xf32>
    %c10_i32 = arith.constant 10 : i32
    %cst_149 = arith.constant dense<0.000000e+00> : vector<32x32xf32>
    %283 = tpu.matmul %282, %4, %cst_149 {dimension_numbers = #tpu.dot_dimension_numbers<[1], [0], [0], [1], [0, 0, 1, 1], [], []>} : vector<32x5xf32>, vector<5x32xf32>, vector<32x32xf32> -> vector<32x32xf32>
    %284 = vector.broadcast %5 : vector<1x32xf32> to vector<32x32xf32>
    %285 = arith.addf %283, %284 : vector<32x32xf32>
    %cst_150 = arith.constant 0.000000e+00 : f32
    %286 = vector.broadcast %cst_150 : f32 to vector<32x32xf32>
    %287 = arith.maximumf %285, %286 : vector<32x32xf32>
    %cst_151 = arith.constant dense<0.000000e+00> : vector<2x32xf32>
    %288 = tpu.matmul %2, %287, %cst_151 {dimension_numbers = #tpu.dot_dimension_numbers<[1], [0], [0], [1], [0, 0, 1, 1], [], []>} : vector<2x32xf32>, vector<32x32xf32>, vector<2x32xf32> -> vector<2x32xf32>
    %cst_152 = arith.constant dense<0.000000e+00> : vector<2x32xf32>
    %289 = tpu.matmul %288, %6, %cst_152 {dimension_numbers = #tpu.dot_dimension_numbers<[1], [0], [0], [1], [0, 0, 1, 1], [], []>} : vector<2x32xf32>, vector<32x32xf32>, vector<2x32xf32> -> vector<2x32xf32>
    %290 = vector.broadcast %7 : vector<1x32xf32> to vector<2x32xf32>
    %291 = arith.addf %289, %290 : vector<2x32xf32>
    %292 = arith.subf %291, %1 : vector<2x32xf32>
    %cst_153 = arith.constant -1.000000e+00 : f32
    %cst_154 = arith.constant 1.000000e+00 : f32
    %293 = vector.broadcast %cst_153 : f32 to vector<2x32xf32>
    %294 = arith.maximumf %293, %292 : vector<2x32xf32>
    %295 = vector.broadcast %cst_154 : f32 to vector<2x32xf32>
    %296 = arith.minimumf %295, %294 : vector<2x32xf32>
    %cst_155 = arith.constant dense<0.000000e+00> : vector<2x32xf32>
    %297 = tpu.matmul %296, %8, %cst_155 {dimension_numbers = #tpu.dot_dimension_numbers<[1], [0], [0], [1], [0, 0, 1, 1], [], []>} : vector<2x32xf32>, vector<32x32xf32>, vector<2x32xf32> -> vector<2x32xf32>
    %cst_156 = arith.constant dense<0.000000e+00> : vector<32x32xf32>
    %298 = tpu.matmul %3, %297, %cst_156 {dimension_numbers = #tpu.dot_dimension_numbers<[1], [0], [0], [1], [0, 0, 1, 1], [], []>} : vector<32x2xf32>, vector<2x32xf32>, vector<32x32xf32> -> vector<32x32xf32>
    %cst_157 = arith.constant 0.000000e+00 : f32
    %299 = vector.broadcast %cst_157 : f32 to vector<32x32xf32>
    %300 = arith.cmpf ogt, %285, %299 : vector<32x32xf32>
    %cst_158 = arith.constant 0.000000e+00 : f32
    %301 = vector.broadcast %cst_158 : f32 to vector<32x32xf32>
    %302 = arith.select %300, %298, %301 : vector<32x32xi1>, vector<32x32xf32>
    %cst_159 = arith.constant dense<0.000000e+00> : vector<32x5xf32>
    %303 = tpu.matmul %302, %9, %cst_159 {dimension_numbers = #tpu.dot_dimension_numbers<[1], [0], [0], [1], [0, 0, 1, 1], [], []>} : vector<32x32xf32>, vector<32x5xf32>, vector<32x5xf32> -> vector<32x5xf32>
    %304 = arith.subf %282, %303 : vector<32x5xf32>
    %cst_160 = arith.constant 0.000000e+00 : f32
    %cst_161 = arith.constant 1.000000e+00 : f32
    %305 = vector.broadcast %cst_160 : f32 to vector<32x5xf32>
    %306 = arith.maximumf %305, %304 : vector<32x5xf32>
    %307 = vector.broadcast %cst_161 : f32 to vector<32x5xf32>
    %308 = arith.minimumf %307, %306 : vector<32x5xf32>
    %309 = arith.select %12, %308, %304 : vector<32x5xi1>, vector<32x5xf32>
    %c11_i32 = arith.constant 11 : i32
    %cst_162 = arith.constant dense<0.000000e+00> : vector<32x32xf32>
    %310 = tpu.matmul %309, %4, %cst_162 {dimension_numbers = #tpu.dot_dimension_numbers<[1], [0], [0], [1], [0, 0, 1, 1], [], []>} : vector<32x5xf32>, vector<5x32xf32>, vector<32x32xf32> -> vector<32x32xf32>
    %311 = vector.broadcast %5 : vector<1x32xf32> to vector<32x32xf32>
    %312 = arith.addf %310, %311 : vector<32x32xf32>
    %cst_163 = arith.constant 0.000000e+00 : f32
    %313 = vector.broadcast %cst_163 : f32 to vector<32x32xf32>
    %314 = arith.maximumf %312, %313 : vector<32x32xf32>
    %cst_164 = arith.constant dense<0.000000e+00> : vector<2x32xf32>
    %315 = tpu.matmul %2, %314, %cst_164 {dimension_numbers = #tpu.dot_dimension_numbers<[1], [0], [0], [1], [0, 0, 1, 1], [], []>} : vector<2x32xf32>, vector<32x32xf32>, vector<2x32xf32> -> vector<2x32xf32>
    %cst_165 = arith.constant dense<0.000000e+00> : vector<2x32xf32>
    %316 = tpu.matmul %315, %6, %cst_165 {dimension_numbers = #tpu.dot_dimension_numbers<[1], [0], [0], [1], [0, 0, 1, 1], [], []>} : vector<2x32xf32>, vector<32x32xf32>, vector<2x32xf32> -> vector<2x32xf32>
    %317 = vector.broadcast %7 : vector<1x32xf32> to vector<2x32xf32>
    %318 = arith.addf %316, %317 : vector<2x32xf32>
    %319 = arith.subf %318, %1 : vector<2x32xf32>
    %cst_166 = arith.constant -1.000000e+00 : f32
    %cst_167 = arith.constant 1.000000e+00 : f32
    %320 = vector.broadcast %cst_166 : f32 to vector<2x32xf32>
    %321 = arith.maximumf %320, %319 : vector<2x32xf32>
    %322 = vector.broadcast %cst_167 : f32 to vector<2x32xf32>
    %323 = arith.minimumf %322, %321 : vector<2x32xf32>
    %cst_168 = arith.constant dense<0.000000e+00> : vector<2x32xf32>
    %324 = tpu.matmul %323, %8, %cst_168 {dimension_numbers = #tpu.dot_dimension_numbers<[1], [0], [0], [1], [0, 0, 1, 1], [], []>} : vector<2x32xf32>, vector<32x32xf32>, vector<2x32xf32> -> vector<2x32xf32>
    %cst_169 = arith.constant dense<0.000000e+00> : vector<32x32xf32>
    %325 = tpu.matmul %3, %324, %cst_169 {dimension_numbers = #tpu.dot_dimension_numbers<[1], [0], [0], [1], [0, 0, 1, 1], [], []>} : vector<32x2xf32>, vector<2x32xf32>, vector<32x32xf32> -> vector<32x32xf32>
    %cst_170 = arith.constant 0.000000e+00 : f32
    %326 = vector.broadcast %cst_170 : f32 to vector<32x32xf32>
    %327 = arith.cmpf ogt, %312, %326 : vector<32x32xf32>
    %cst_171 = arith.constant 0.000000e+00 : f32
    %328 = vector.broadcast %cst_171 : f32 to vector<32x32xf32>
    %329 = arith.select %327, %325, %328 : vector<32x32xi1>, vector<32x32xf32>
    %cst_172 = arith.constant dense<0.000000e+00> : vector<32x5xf32>
    %330 = tpu.matmul %329, %9, %cst_172 {dimension_numbers = #tpu.dot_dimension_numbers<[1], [0], [0], [1], [0, 0, 1, 1], [], []>} : vector<32x32xf32>, vector<32x5xf32>, vector<32x5xf32> -> vector<32x5xf32>
    %331 = arith.subf %309, %330 : vector<32x5xf32>
    %cst_173 = arith.constant 0.000000e+00 : f32
    %cst_174 = arith.constant 1.000000e+00 : f32
    %332 = vector.broadcast %cst_173 : f32 to vector<32x5xf32>
    %333 = arith.maximumf %332, %331 : vector<32x5xf32>
    %334 = vector.broadcast %cst_174 : f32 to vector<32x5xf32>
    %335 = arith.minimumf %334, %333 : vector<32x5xf32>
    %336 = arith.select %12, %335, %331 : vector<32x5xi1>, vector<32x5xf32>
    %c12_i32 = arith.constant 12 : i32
    %cst_175 = arith.constant dense<0.000000e+00> : vector<32x32xf32>
    %337 = tpu.matmul %336, %4, %cst_175 {dimension_numbers = #tpu.dot_dimension_numbers<[1], [0], [0], [1], [0, 0, 1, 1], [], []>} : vector<32x5xf32>, vector<5x32xf32>, vector<32x32xf32> -> vector<32x32xf32>
    %338 = vector.broadcast %5 : vector<1x32xf32> to vector<32x32xf32>
    %339 = arith.addf %337, %338 : vector<32x32xf32>
    %cst_176 = arith.constant 0.000000e+00 : f32
    %340 = vector.broadcast %cst_176 : f32 to vector<32x32xf32>
    %341 = arith.maximumf %339, %340 : vector<32x32xf32>
    %cst_177 = arith.constant dense<0.000000e+00> : vector<2x32xf32>
    %342 = tpu.matmul %2, %341, %cst_177 {dimension_numbers = #tpu.dot_dimension_numbers<[1], [0], [0], [1], [0, 0, 1, 1], [], []>} : vector<2x32xf32>, vector<32x32xf32>, vector<2x32xf32> -> vector<2x32xf32>
    %cst_178 = arith.constant dense<0.000000e+00> : vector<2x32xf32>
    %343 = tpu.matmul %342, %6, %cst_178 {dimension_numbers = #tpu.dot_dimension_numbers<[1], [0], [0], [1], [0, 0, 1, 1], [], []>} : vector<2x32xf32>, vector<32x32xf32>, vector<2x32xf32> -> vector<2x32xf32>
    %344 = vector.broadcast %7 : vector<1x32xf32> to vector<2x32xf32>
    %345 = arith.addf %343, %344 : vector<2x32xf32>
    %346 = arith.subf %345, %1 : vector<2x32xf32>
    %cst_179 = arith.constant -1.000000e+00 : f32
    %cst_180 = arith.constant 1.000000e+00 : f32
    %347 = vector.broadcast %cst_179 : f32 to vector<2x32xf32>
    %348 = arith.maximumf %347, %346 : vector<2x32xf32>
    %349 = vector.broadcast %cst_180 : f32 to vector<2x32xf32>
    %350 = arith.minimumf %349, %348 : vector<2x32xf32>
    %cst_181 = arith.constant dense<0.000000e+00> : vector<2x32xf32>
    %351 = tpu.matmul %350, %8, %cst_181 {dimension_numbers = #tpu.dot_dimension_numbers<[1], [0], [0], [1], [0, 0, 1, 1], [], []>} : vector<2x32xf32>, vector<32x32xf32>, vector<2x32xf32> -> vector<2x32xf32>
    %cst_182 = arith.constant dense<0.000000e+00> : vector<32x32xf32>
    %352 = tpu.matmul %3, %351, %cst_182 {dimension_numbers = #tpu.dot_dimension_numbers<[1], [0], [0], [1], [0, 0, 1, 1], [], []>} : vector<32x2xf32>, vector<2x32xf32>, vector<32x32xf32> -> vector<32x32xf32>
    %cst_183 = arith.constant 0.000000e+00 : f32
    %353 = vector.broadcast %cst_183 : f32 to vector<32x32xf32>
    %354 = arith.cmpf ogt, %339, %353 : vector<32x32xf32>
    %cst_184 = arith.constant 0.000000e+00 : f32
    %355 = vector.broadcast %cst_184 : f32 to vector<32x32xf32>
    %356 = arith.select %354, %352, %355 : vector<32x32xi1>, vector<32x32xf32>
    %cst_185 = arith.constant dense<0.000000e+00> : vector<32x5xf32>
    %357 = tpu.matmul %356, %9, %cst_185 {dimension_numbers = #tpu.dot_dimension_numbers<[1], [0], [0], [1], [0, 0, 1, 1], [], []>} : vector<32x32xf32>, vector<32x5xf32>, vector<32x5xf32> -> vector<32x5xf32>
    %358 = arith.subf %336, %357 : vector<32x5xf32>
    %cst_186 = arith.constant 0.000000e+00 : f32
    %cst_187 = arith.constant 1.000000e+00 : f32
    %359 = vector.broadcast %cst_186 : f32 to vector<32x5xf32>
    %360 = arith.maximumf %359, %358 : vector<32x5xf32>
    %361 = vector.broadcast %cst_187 : f32 to vector<32x5xf32>
    %362 = arith.minimumf %361, %360 : vector<32x5xf32>
    %363 = arith.select %12, %362, %358 : vector<32x5xi1>, vector<32x5xf32>
    %c13_i32 = arith.constant 13 : i32
    %cst_188 = arith.constant dense<0.000000e+00> : vector<32x32xf32>
    %364 = tpu.matmul %363, %4, %cst_188 {dimension_numbers = #tpu.dot_dimension_numbers<[1], [0], [0], [1], [0, 0, 1, 1], [], []>} : vector<32x5xf32>, vector<5x32xf32>, vector<32x32xf32> -> vector<32x32xf32>
    %365 = vector.broadcast %5 : vector<1x32xf32> to vector<32x32xf32>
    %366 = arith.addf %364, %365 : vector<32x32xf32>
    %cst_189 = arith.constant 0.000000e+00 : f32
    %367 = vector.broadcast %cst_189 : f32 to vector<32x32xf32>
    %368 = arith.maximumf %366, %367 : vector<32x32xf32>
    %cst_190 = arith.constant dense<0.000000e+00> : vector<2x32xf32>
    %369 = tpu.matmul %2, %368, %cst_190 {dimension_numbers = #tpu.dot_dimension_numbers<[1], [0], [0], [1], [0, 0, 1, 1], [], []>} : vector<2x32xf32>, vector<32x32xf32>, vector<2x32xf32> -> vector<2x32xf32>
    %cst_191 = arith.constant dense<0.000000e+00> : vector<2x32xf32>
    %370 = tpu.matmul %369, %6, %cst_191 {dimension_numbers = #tpu.dot_dimension_numbers<[1], [0], [0], [1], [0, 0, 1, 1], [], []>} : vector<2x32xf32>, vector<32x32xf32>, vector<2x32xf32> -> vector<2x32xf32>
    %371 = vector.broadcast %7 : vector<1x32xf32> to vector<2x32xf32>
    %372 = arith.addf %370, %371 : vector<2x32xf32>
    %373 = arith.subf %372, %1 : vector<2x32xf32>
    %cst_192 = arith.constant -1.000000e+00 : f32
    %cst_193 = arith.constant 1.000000e+00 : f32
    %374 = vector.broadcast %cst_192 : f32 to vector<2x32xf32>
    %375 = arith.maximumf %374, %373 : vector<2x32xf32>
    %376 = vector.broadcast %cst_193 : f32 to vector<2x32xf32>
    %377 = arith.minimumf %376, %375 : vector<2x32xf32>
    %cst_194 = arith.constant dense<0.000000e+00> : vector<2x32xf32>
    %378 = tpu.matmul %377, %8, %cst_194 {dimension_numbers = #tpu.dot_dimension_numbers<[1], [0], [0], [1], [0, 0, 1, 1], [], []>} : vector<2x32xf32>, vector<32x32xf32>, vector<2x32xf32> -> vector<2x32xf32>
    %cst_195 = arith.constant dense<0.000000e+00> : vector<32x32xf32>
    %379 = tpu.matmul %3, %378, %cst_195 {dimension_numbers = #tpu.dot_dimension_numbers<[1], [0], [0], [1], [0, 0, 1, 1], [], []>} : vector<32x2xf32>, vector<2x32xf32>, vector<32x32xf32> -> vector<32x32xf32>
    %cst_196 = arith.constant 0.000000e+00 : f32
    %380 = vector.broadcast %cst_196 : f32 to vector<32x32xf32>
    %381 = arith.cmpf ogt, %366, %380 : vector<32x32xf32>
    %cst_197 = arith.constant 0.000000e+00 : f32
    %382 = vector.broadcast %cst_197 : f32 to vector<32x32xf32>
    %383 = arith.select %381, %379, %382 : vector<32x32xi1>, vector<32x32xf32>
    %cst_198 = arith.constant dense<0.000000e+00> : vector<32x5xf32>
    %384 = tpu.matmul %383, %9, %cst_198 {dimension_numbers = #tpu.dot_dimension_numbers<[1], [0], [0], [1], [0, 0, 1, 1], [], []>} : vector<32x32xf32>, vector<32x5xf32>, vector<32x5xf32> -> vector<32x5xf32>
    %385 = arith.subf %363, %384 : vector<32x5xf32>
    %cst_199 = arith.constant 0.000000e+00 : f32
    %cst_200 = arith.constant 1.000000e+00 : f32
    %386 = vector.broadcast %cst_199 : f32 to vector<32x5xf32>
    %387 = arith.maximumf %386, %385 : vector<32x5xf32>
    %388 = vector.broadcast %cst_200 : f32 to vector<32x5xf32>
    %389 = arith.minimumf %388, %387 : vector<32x5xf32>
    %390 = arith.select %12, %389, %385 : vector<32x5xi1>, vector<32x5xf32>
    %c14_i32 = arith.constant 14 : i32
    %cst_201 = arith.constant dense<0.000000e+00> : vector<32x32xf32>
    %391 = tpu.matmul %390, %4, %cst_201 {dimension_numbers = #tpu.dot_dimension_numbers<[1], [0], [0], [1], [0, 0, 1, 1], [], []>} : vector<32x5xf32>, vector<5x32xf32>, vector<32x32xf32> -> vector<32x32xf32>
    %392 = vector.broadcast %5 : vector<1x32xf32> to vector<32x32xf32>
    %393 = arith.addf %391, %392 : vector<32x32xf32>
    %cst_202 = arith.constant 0.000000e+00 : f32
    %394 = vector.broadcast %cst_202 : f32 to vector<32x32xf32>
    %395 = arith.maximumf %393, %394 : vector<32x32xf32>
    %cst_203 = arith.constant dense<0.000000e+00> : vector<2x32xf32>
    %396 = tpu.matmul %2, %395, %cst_203 {dimension_numbers = #tpu.dot_dimension_numbers<[1], [0], [0], [1], [0, 0, 1, 1], [], []>} : vector<2x32xf32>, vector<32x32xf32>, vector<2x32xf32> -> vector<2x32xf32>
    %cst_204 = arith.constant dense<0.000000e+00> : vector<2x32xf32>
    %397 = tpu.matmul %396, %6, %cst_204 {dimension_numbers = #tpu.dot_dimension_numbers<[1], [0], [0], [1], [0, 0, 1, 1], [], []>} : vector<2x32xf32>, vector<32x32xf32>, vector<2x32xf32> -> vector<2x32xf32>
    %398 = vector.broadcast %7 : vector<1x32xf32> to vector<2x32xf32>
    %399 = arith.addf %397, %398 : vector<2x32xf32>
    %400 = arith.subf %399, %1 : vector<2x32xf32>
    %cst_205 = arith.constant -1.000000e+00 : f32
    %cst_206 = arith.constant 1.000000e+00 : f32
    %401 = vector.broadcast %cst_205 : f32 to vector<2x32xf32>
    %402 = arith.maximumf %401, %400 : vector<2x32xf32>
    %403 = vector.broadcast %cst_206 : f32 to vector<2x32xf32>
    %404 = arith.minimumf %403, %402 : vector<2x32xf32>
    %cst_207 = arith.constant dense<0.000000e+00> : vector<2x32xf32>
    %405 = tpu.matmul %404, %8, %cst_207 {dimension_numbers = #tpu.dot_dimension_numbers<[1], [0], [0], [1], [0, 0, 1, 1], [], []>} : vector<2x32xf32>, vector<32x32xf32>, vector<2x32xf32> -> vector<2x32xf32>
    %cst_208 = arith.constant dense<0.000000e+00> : vector<32x32xf32>
    %406 = tpu.matmul %3, %405, %cst_208 {dimension_numbers = #tpu.dot_dimension_numbers<[1], [0], [0], [1], [0, 0, 1, 1], [], []>} : vector<32x2xf32>, vector<2x32xf32>, vector<32x32xf32> -> vector<32x32xf32>
    %cst_209 = arith.constant 0.000000e+00 : f32
    %407 = vector.broadcast %cst_209 : f32 to vector<32x32xf32>
    %408 = arith.cmpf ogt, %393, %407 : vector<32x32xf32>
    %cst_210 = arith.constant 0.000000e+00 : f32
    %409 = vector.broadcast %cst_210 : f32 to vector<32x32xf32>
    %410 = arith.select %408, %406, %409 : vector<32x32xi1>, vector<32x32xf32>
    %cst_211 = arith.constant dense<0.000000e+00> : vector<32x5xf32>
    %411 = tpu.matmul %410, %9, %cst_211 {dimension_numbers = #tpu.dot_dimension_numbers<[1], [0], [0], [1], [0, 0, 1, 1], [], []>} : vector<32x32xf32>, vector<32x5xf32>, vector<32x5xf32> -> vector<32x5xf32>
    %412 = arith.subf %390, %411 : vector<32x5xf32>
    %cst_212 = arith.constant 0.000000e+00 : f32
    %cst_213 = arith.constant 1.000000e+00 : f32
    %413 = vector.broadcast %cst_212 : f32 to vector<32x5xf32>
    %414 = arith.maximumf %413, %412 : vector<32x5xf32>
    %415 = vector.broadcast %cst_213 : f32 to vector<32x5xf32>
    %416 = arith.minimumf %415, %414 : vector<32x5xf32>
    %417 = arith.select %12, %416, %412 : vector<32x5xi1>, vector<32x5xf32>
    %c15_i32 = arith.constant 15 : i32
    %cst_214 = arith.constant dense<0.000000e+00> : vector<32x32xf32>
    %418 = tpu.matmul %417, %4, %cst_214 {dimension_numbers = #tpu.dot_dimension_numbers<[1], [0], [0], [1], [0, 0, 1, 1], [], []>} : vector<32x5xf32>, vector<5x32xf32>, vector<32x32xf32> -> vector<32x32xf32>
    %419 = vector.broadcast %5 : vector<1x32xf32> to vector<32x32xf32>
    %420 = arith.addf %418, %419 : vector<32x32xf32>
    %cst_215 = arith.constant 0.000000e+00 : f32
    %421 = vector.broadcast %cst_215 : f32 to vector<32x32xf32>
    %422 = arith.maximumf %420, %421 : vector<32x32xf32>
    %cst_216 = arith.constant dense<0.000000e+00> : vector<2x32xf32>
    %423 = tpu.matmul %2, %422, %cst_216 {dimension_numbers = #tpu.dot_dimension_numbers<[1], [0], [0], [1], [0, 0, 1, 1], [], []>} : vector<2x32xf32>, vector<32x32xf32>, vector<2x32xf32> -> vector<2x32xf32>
    %cst_217 = arith.constant dense<0.000000e+00> : vector<2x32xf32>
    %424 = tpu.matmul %423, %6, %cst_217 {dimension_numbers = #tpu.dot_dimension_numbers<[1], [0], [0], [1], [0, 0, 1, 1], [], []>} : vector<2x32xf32>, vector<32x32xf32>, vector<2x32xf32> -> vector<2x32xf32>
    %425 = vector.broadcast %7 : vector<1x32xf32> to vector<2x32xf32>
    %426 = arith.addf %424, %425 : vector<2x32xf32>
    %427 = arith.subf %426, %1 : vector<2x32xf32>
    %cst_218 = arith.constant -1.000000e+00 : f32
    %cst_219 = arith.constant 1.000000e+00 : f32
    %428 = vector.broadcast %cst_218 : f32 to vector<2x32xf32>
    %429 = arith.maximumf %428, %427 : vector<2x32xf32>
    %430 = vector.broadcast %cst_219 : f32 to vector<2x32xf32>
    %431 = arith.minimumf %430, %429 : vector<2x32xf32>
    %cst_220 = arith.constant dense<0.000000e+00> : vector<2x32xf32>
    %432 = tpu.matmul %431, %8, %cst_220 {dimension_numbers = #tpu.dot_dimension_numbers<[1], [0], [0], [1], [0, 0, 1, 1], [], []>} : vector<2x32xf32>, vector<32x32xf32>, vector<2x32xf32> -> vector<2x32xf32>
    %cst_221 = arith.constant dense<0.000000e+00> : vector<32x32xf32>
    %433 = tpu.matmul %3, %432, %cst_221 {dimension_numbers = #tpu.dot_dimension_numbers<[1], [0], [0], [1], [0, 0, 1, 1], [], []>} : vector<32x2xf32>, vector<2x32xf32>, vector<32x32xf32> -> vector<32x32xf32>
    %cst_222 = arith.constant 0.000000e+00 : f32
    %434 = vector.broadcast %cst_222 : f32 to vector<32x32xf32>
    %435 = arith.cmpf ogt, %420, %434 : vector<32x32xf32>
    %cst_223 = arith.constant 0.000000e+00 : f32
    %436 = vector.broadcast %cst_223 : f32 to vector<32x32xf32>
    %437 = arith.select %435, %433, %436 : vector<32x32xi1>, vector<32x32xf32>
    %cst_224 = arith.constant dense<0.000000e+00> : vector<32x5xf32>
    %438 = tpu.matmul %437, %9, %cst_224 {dimension_numbers = #tpu.dot_dimension_numbers<[1], [0], [0], [1], [0, 0, 1, 1], [], []>} : vector<32x32xf32>, vector<32x5xf32>, vector<32x5xf32> -> vector<32x5xf32>
    %439 = arith.subf %417, %438 : vector<32x5xf32>
    %cst_225 = arith.constant 0.000000e+00 : f32
    %cst_226 = arith.constant 1.000000e+00 : f32
    %440 = vector.broadcast %cst_225 : f32 to vector<32x5xf32>
    %441 = arith.maximumf %440, %439 : vector<32x5xf32>
    %442 = vector.broadcast %cst_226 : f32 to vector<32x5xf32>
    %443 = arith.minimumf %442, %441 : vector<32x5xf32>
    %444 = arith.select %12, %443, %439 : vector<32x5xi1>, vector<32x5xf32>
    %c16_i32 = arith.constant 16 : i32
    %cst_227 = arith.constant dense<0.000000e+00> : vector<32x32xf32>
    %445 = tpu.matmul %444, %4, %cst_227 {dimension_numbers = #tpu.dot_dimension_numbers<[1], [0], [0], [1], [0, 0, 1, 1], [], []>} : vector<32x5xf32>, vector<5x32xf32>, vector<32x32xf32> -> vector<32x32xf32>
    %446 = vector.broadcast %5 : vector<1x32xf32> to vector<32x32xf32>
    %447 = arith.addf %445, %446 : vector<32x32xf32>
    %cst_228 = arith.constant 0.000000e+00 : f32
    %448 = vector.broadcast %cst_228 : f32 to vector<32x32xf32>
    %449 = arith.maximumf %447, %448 : vector<32x32xf32>
    %cst_229 = arith.constant dense<0.000000e+00> : vector<2x32xf32>
    %450 = tpu.matmul %2, %449, %cst_229 {dimension_numbers = #tpu.dot_dimension_numbers<[1], [0], [0], [1], [0, 0, 1, 1], [], []>} : vector<2x32xf32>, vector<32x32xf32>, vector<2x32xf32> -> vector<2x32xf32>
    %cst_230 = arith.constant dense<0.000000e+00> : vector<2x32xf32>
    %451 = tpu.matmul %450, %6, %cst_230 {dimension_numbers = #tpu.dot_dimension_numbers<[1], [0], [0], [1], [0, 0, 1, 1], [], []>} : vector<2x32xf32>, vector<32x32xf32>, vector<2x32xf32> -> vector<2x32xf32>
    %452 = vector.broadcast %7 : vector<1x32xf32> to vector<2x32xf32>
    %453 = arith.addf %451, %452 : vector<2x32xf32>
    %454 = arith.subf %453, %1 : vector<2x32xf32>
    %cst_231 = arith.constant -1.000000e+00 : f32
    %cst_232 = arith.constant 1.000000e+00 : f32
    %455 = vector.broadcast %cst_231 : f32 to vector<2x32xf32>
    %456 = arith.maximumf %455, %454 : vector<2x32xf32>
    %457 = vector.broadcast %cst_232 : f32 to vector<2x32xf32>
    %458 = arith.minimumf %457, %456 : vector<2x32xf32>
    %cst_233 = arith.constant dense<0.000000e+00> : vector<2x32xf32>
    %459 = tpu.matmul %458, %8, %cst_233 {dimension_numbers = #tpu.dot_dimension_numbers<[1], [0], [0], [1], [0, 0, 1, 1], [], []>} : vector<2x32xf32>, vector<32x32xf32>, vector<2x32xf32> -> vector<2x32xf32>
    %cst_234 = arith.constant dense<0.000000e+00> : vector<32x32xf32>
    %460 = tpu.matmul %3, %459, %cst_234 {dimension_numbers = #tpu.dot_dimension_numbers<[1], [0], [0], [1], [0, 0, 1, 1], [], []>} : vector<32x2xf32>, vector<2x32xf32>, vector<32x32xf32> -> vector<32x32xf32>
    %cst_235 = arith.constant 0.000000e+00 : f32
    %461 = vector.broadcast %cst_235 : f32 to vector<32x32xf32>
    %462 = arith.cmpf ogt, %447, %461 : vector<32x32xf32>
    %cst_236 = arith.constant 0.000000e+00 : f32
    %463 = vector.broadcast %cst_236 : f32 to vector<32x32xf32>
    %464 = arith.select %462, %460, %463 : vector<32x32xi1>, vector<32x32xf32>
    %cst_237 = arith.constant dense<0.000000e+00> : vector<32x5xf32>
    %465 = tpu.matmul %464, %9, %cst_237 {dimension_numbers = #tpu.dot_dimension_numbers<[1], [0], [0], [1], [0, 0, 1, 1], [], []>} : vector<32x32xf32>, vector<32x5xf32>, vector<32x5xf32> -> vector<32x5xf32>
    %466 = arith.subf %444, %465 : vector<32x5xf32>
    %cst_238 = arith.constant 0.000000e+00 : f32
    %cst_239 = arith.constant 1.000000e+00 : f32
    %467 = vector.broadcast %cst_238 : f32 to vector<32x5xf32>
    %468 = arith.maximumf %467, %466 : vector<32x5xf32>
    %469 = vector.broadcast %cst_239 : f32 to vector<32x5xf32>
    %470 = arith.minimumf %469, %468 : vector<32x5xf32>
    %471 = arith.select %12, %470, %466 : vector<32x5xi1>, vector<32x5xf32>
    %c17_i32 = arith.constant 17 : i32
    %cst_240 = arith.constant dense<0.000000e+00> : vector<32x32xf32>
    %472 = tpu.matmul %471, %4, %cst_240 {dimension_numbers = #tpu.dot_dimension_numbers<[1], [0], [0], [1], [0, 0, 1, 1], [], []>} : vector<32x5xf32>, vector<5x32xf32>, vector<32x32xf32> -> vector<32x32xf32>
    %473 = vector.broadcast %5 : vector<1x32xf32> to vector<32x32xf32>
    %474 = arith.addf %472, %473 : vector<32x32xf32>
    %cst_241 = arith.constant 0.000000e+00 : f32
    %475 = vector.broadcast %cst_241 : f32 to vector<32x32xf32>
    %476 = arith.maximumf %474, %475 : vector<32x32xf32>
    %cst_242 = arith.constant dense<0.000000e+00> : vector<2x32xf32>
    %477 = tpu.matmul %2, %476, %cst_242 {dimension_numbers = #tpu.dot_dimension_numbers<[1], [0], [0], [1], [0, 0, 1, 1], [], []>} : vector<2x32xf32>, vector<32x32xf32>, vector<2x32xf32> -> vector<2x32xf32>
    %cst_243 = arith.constant dense<0.000000e+00> : vector<2x32xf32>
    %478 = tpu.matmul %477, %6, %cst_243 {dimension_numbers = #tpu.dot_dimension_numbers<[1], [0], [0], [1], [0, 0, 1, 1], [], []>} : vector<2x32xf32>, vector<32x32xf32>, vector<2x32xf32> -> vector<2x32xf32>
    %479 = vector.broadcast %7 : vector<1x32xf32> to vector<2x32xf32>
    %480 = arith.addf %478, %479 : vector<2x32xf32>
    %481 = arith.subf %480, %1 : vector<2x32xf32>
    %cst_244 = arith.constant -1.000000e+00 : f32
    %cst_245 = arith.constant 1.000000e+00 : f32
    %482 = vector.broadcast %cst_244 : f32 to vector<2x32xf32>
    %483 = arith.maximumf %482, %481 : vector<2x32xf32>
    %484 = vector.broadcast %cst_245 : f32 to vector<2x32xf32>
    %485 = arith.minimumf %484, %483 : vector<2x32xf32>
    %cst_246 = arith.constant dense<0.000000e+00> : vector<2x32xf32>
    %486 = tpu.matmul %485, %8, %cst_246 {dimension_numbers = #tpu.dot_dimension_numbers<[1], [0], [0], [1], [0, 0, 1, 1], [], []>} : vector<2x32xf32>, vector<32x32xf32>, vector<2x32xf32> -> vector<2x32xf32>
    %cst_247 = arith.constant dense<0.000000e+00> : vector<32x32xf32>
    %487 = tpu.matmul %3, %486, %cst_247 {dimension_numbers = #tpu.dot_dimension_numbers<[1], [0], [0], [1], [0, 0, 1, 1], [], []>} : vector<32x2xf32>, vector<2x32xf32>, vector<32x32xf32> -> vector<32x32xf32>
    %cst_248 = arith.constant 0.000000e+00 : f32
    %488 = vector.broadcast %cst_248 : f32 to vector<32x32xf32>
    %489 = arith.cmpf ogt, %474, %488 : vector<32x32xf32>
    %cst_249 = arith.constant 0.000000e+00 : f32
    %490 = vector.broadcast %cst_249 : f32 to vector<32x32xf32>
    %491 = arith.select %489, %487, %490 : vector<32x32xi1>, vector<32x32xf32>
    %cst_250 = arith.constant dense<0.000000e+00> : vector<32x5xf32>
    %492 = tpu.matmul %491, %9, %cst_250 {dimension_numbers = #tpu.dot_dimension_numbers<[1], [0], [0], [1], [0, 0, 1, 1], [], []>} : vector<32x32xf32>, vector<32x5xf32>, vector<32x5xf32> -> vector<32x5xf32>
    %493 = arith.subf %471, %492 : vector<32x5xf32>
    %cst_251 = arith.constant 0.000000e+00 : f32
    %cst_252 = arith.constant 1.000000e+00 : f32
    %494 = vector.broadcast %cst_251 : f32 to vector<32x5xf32>
    %495 = arith.maximumf %494, %493 : vector<32x5xf32>
    %496 = vector.broadcast %cst_252 : f32 to vector<32x5xf32>
    %497 = arith.minimumf %496, %495 : vector<32x5xf32>
    %498 = arith.select %12, %497, %493 : vector<32x5xi1>, vector<32x5xf32>
    %c18_i32 = arith.constant 18 : i32
    %cst_253 = arith.constant dense<0.000000e+00> : vector<32x32xf32>
    %499 = tpu.matmul %498, %4, %cst_253 {dimension_numbers = #tpu.dot_dimension_numbers<[1], [0], [0], [1], [0, 0, 1, 1], [], []>} : vector<32x5xf32>, vector<5x32xf32>, vector<32x32xf32> -> vector<32x32xf32>
    %500 = vector.broadcast %5 : vector<1x32xf32> to vector<32x32xf32>
    %501 = arith.addf %499, %500 : vector<32x32xf32>
    %cst_254 = arith.constant 0.000000e+00 : f32
    %502 = vector.broadcast %cst_254 : f32 to vector<32x32xf32>
    %503 = arith.maximumf %501, %502 : vector<32x32xf32>
    %cst_255 = arith.constant dense<0.000000e+00> : vector<2x32xf32>
    %504 = tpu.matmul %2, %503, %cst_255 {dimension_numbers = #tpu.dot_dimension_numbers<[1], [0], [0], [1], [0, 0, 1, 1], [], []>} : vector<2x32xf32>, vector<32x32xf32>, vector<2x32xf32> -> vector<2x32xf32>
    %cst_256 = arith.constant dense<0.000000e+00> : vector<2x32xf32>
    %505 = tpu.matmul %504, %6, %cst_256 {dimension_numbers = #tpu.dot_dimension_numbers<[1], [0], [0], [1], [0, 0, 1, 1], [], []>} : vector<2x32xf32>, vector<32x32xf32>, vector<2x32xf32> -> vector<2x32xf32>
    %506 = vector.broadcast %7 : vector<1x32xf32> to vector<2x32xf32>
    %507 = arith.addf %505, %506 : vector<2x32xf32>
    %508 = arith.subf %507, %1 : vector<2x32xf32>
    %cst_257 = arith.constant -1.000000e+00 : f32
    %cst_258 = arith.constant 1.000000e+00 : f32
    %509 = vector.broadcast %cst_257 : f32 to vector<2x32xf32>
    %510 = arith.maximumf %509, %508 : vector<2x32xf32>
    %511 = vector.broadcast %cst_258 : f32 to vector<2x32xf32>
    %512 = arith.minimumf %511, %510 : vector<2x32xf32>
    %cst_259 = arith.constant dense<0.000000e+00> : vector<2x32xf32>
    %513 = tpu.matmul %512, %8, %cst_259 {dimension_numbers = #tpu.dot_dimension_numbers<[1], [0], [0], [1], [0, 0, 1, 1], [], []>} : vector<2x32xf32>, vector<32x32xf32>, vector<2x32xf32> -> vector<2x32xf32>
    %cst_260 = arith.constant dense<0.000000e+00> : vector<32x32xf32>
    %514 = tpu.matmul %3, %513, %cst_260 {dimension_numbers = #tpu.dot_dimension_numbers<[1], [0], [0], [1], [0, 0, 1, 1], [], []>} : vector<32x2xf32>, vector<2x32xf32>, vector<32x32xf32> -> vector<32x32xf32>
    %cst_261 = arith.constant 0.000000e+00 : f32
    %515 = vector.broadcast %cst_261 : f32 to vector<32x32xf32>
    %516 = arith.cmpf ogt, %501, %515 : vector<32x32xf32>
    %cst_262 = arith.constant 0.000000e+00 : f32
    %517 = vector.broadcast %cst_262 : f32 to vector<32x32xf32>
    %518 = arith.select %516, %514, %517 : vector<32x32xi1>, vector<32x32xf32>
    %cst_263 = arith.constant dense<0.000000e+00> : vector<32x5xf32>
    %519 = tpu.matmul %518, %9, %cst_263 {dimension_numbers = #tpu.dot_dimension_numbers<[1], [0], [0], [1], [0, 0, 1, 1], [], []>} : vector<32x32xf32>, vector<32x5xf32>, vector<32x5xf32> -> vector<32x5xf32>
    %520 = arith.subf %498, %519 : vector<32x5xf32>
    %cst_264 = arith.constant 0.000000e+00 : f32
    %cst_265 = arith.constant 1.000000e+00 : f32
    %521 = vector.broadcast %cst_264 : f32 to vector<32x5xf32>
    %522 = arith.maximumf %521, %520 : vector<32x5xf32>
    %523 = vector.broadcast %cst_265 : f32 to vector<32x5xf32>
    %524 = arith.minimumf %523, %522 : vector<32x5xf32>
    %525 = arith.select %12, %524, %520 : vector<32x5xi1>, vector<32x5xf32>
    %c19_i32 = arith.constant 19 : i32
    %cst_266 = arith.constant dense<0.000000e+00> : vector<32x32xf32>
    %526 = tpu.matmul %525, %4, %cst_266 {dimension_numbers = #tpu.dot_dimension_numbers<[1], [0], [0], [1], [0, 0, 1, 1], [], []>} : vector<32x5xf32>, vector<5x32xf32>, vector<32x32xf32> -> vector<32x32xf32>
    %527 = vector.broadcast %5 : vector<1x32xf32> to vector<32x32xf32>
    %528 = arith.addf %526, %527 : vector<32x32xf32>
    %cst_267 = arith.constant 0.000000e+00 : f32
    %529 = vector.broadcast %cst_267 : f32 to vector<32x32xf32>
    %530 = arith.maximumf %528, %529 : vector<32x32xf32>
    %cst_268 = arith.constant dense<0.000000e+00> : vector<2x32xf32>
    %531 = tpu.matmul %2, %530, %cst_268 {dimension_numbers = #tpu.dot_dimension_numbers<[1], [0], [0], [1], [0, 0, 1, 1], [], []>} : vector<2x32xf32>, vector<32x32xf32>, vector<2x32xf32> -> vector<2x32xf32>
    %cst_269 = arith.constant dense<0.000000e+00> : vector<2x32xf32>
    %532 = tpu.matmul %531, %6, %cst_269 {dimension_numbers = #tpu.dot_dimension_numbers<[1], [0], [0], [1], [0, 0, 1, 1], [], []>} : vector<2x32xf32>, vector<32x32xf32>, vector<2x32xf32> -> vector<2x32xf32>
    %533 = vector.broadcast %7 : vector<1x32xf32> to vector<2x32xf32>
    %534 = arith.addf %532, %533 : vector<2x32xf32>
    %535 = arith.subf %534, %1 : vector<2x32xf32>
    %cst_270 = arith.constant -1.000000e+00 : f32
    %cst_271 = arith.constant 1.000000e+00 : f32
    %536 = vector.broadcast %cst_270 : f32 to vector<2x32xf32>
    %537 = arith.maximumf %536, %535 : vector<2x32xf32>
    %538 = vector.broadcast %cst_271 : f32 to vector<2x32xf32>
    %539 = arith.minimumf %538, %537 : vector<2x32xf32>
    %cst_272 = arith.constant dense<0.000000e+00> : vector<2x32xf32>
    %540 = tpu.matmul %539, %8, %cst_272 {dimension_numbers = #tpu.dot_dimension_numbers<[1], [0], [0], [1], [0, 0, 1, 1], [], []>} : vector<2x32xf32>, vector<32x32xf32>, vector<2x32xf32> -> vector<2x32xf32>
    %cst_273 = arith.constant dense<0.000000e+00> : vector<32x32xf32>
    %541 = tpu.matmul %3, %540, %cst_273 {dimension_numbers = #tpu.dot_dimension_numbers<[1], [0], [0], [1], [0, 0, 1, 1], [], []>} : vector<32x2xf32>, vector<2x32xf32>, vector<32x32xf32> -> vector<32x32xf32>
    %cst_274 = arith.constant 0.000000e+00 : f32
    %542 = vector.broadcast %cst_274 : f32 to vector<32x32xf32>
    %543 = arith.cmpf ogt, %528, %542 : vector<32x32xf32>
    %cst_275 = arith.constant 0.000000e+00 : f32
    %544 = vector.broadcast %cst_275 : f32 to vector<32x32xf32>
    %545 = arith.select %543, %541, %544 : vector<32x32xi1>, vector<32x32xf32>
    %cst_276 = arith.constant dense<0.000000e+00> : vector<32x5xf32>
    %546 = tpu.matmul %545, %9, %cst_276 {dimension_numbers = #tpu.dot_dimension_numbers<[1], [0], [0], [1], [0, 0, 1, 1], [], []>} : vector<32x32xf32>, vector<32x5xf32>, vector<32x5xf32> -> vector<32x5xf32>
    %547 = arith.subf %525, %546 : vector<32x5xf32>
    %cst_277 = arith.constant 0.000000e+00 : f32
    %cst_278 = arith.constant 1.000000e+00 : f32
    %548 = vector.broadcast %cst_277 : f32 to vector<32x5xf32>
    %549 = arith.maximumf %548, %547 : vector<32x5xf32>
    %550 = vector.broadcast %cst_278 : f32 to vector<32x5xf32>
    %551 = arith.minimumf %550, %549 : vector<32x5xf32>
    %552 = arith.select %12, %551, %547 : vector<32x5xi1>, vector<32x5xf32>
    %c0_279 = arith.constant 0 : index
    %c0_280 = arith.constant 0 : index
    %553 = vector.load %arg10[%c0_279, %c0_280] : memref<32x5xf32, #tpu.memory_space<vmem>>, vector<32x5xf32>
    tpu.vector_store %arg10[%c0_279, %c0_280], %552 {strides = array<i32>} : memref<32x5xf32, #tpu.memory_space<vmem>>, vector<32x5xf32>,
    return
  }
}

</mosaic_0001>

<llo_original>
// kernel: eq.8
$region0: #{eq.8}
  %s0 = inlined_call_operand.vmem [shape: s32[2,16], index: 0, kind: input, shape index: {}]
  %s1 = inlined_call_operand.vmem [shape: s32[32], index: 1, kind: output, shape index: {}]
  $region1: #{eq.8} parent=0
    #allocation0 [shape = 'u8[4096]{0}', space=vmem, size = 0x1000, scoped, tag = 'scoped mem for output reshape']
    #allocation1 [shape = 'u8[4096]{0}', space=vmem, size = 0x1000, scoped, tag = 'scoped mem for input reshape']
    %s3 = ssub.s32 4, 1
    %v4 = vld [vmem:[%s0] sm:%s3]
    %5 = vst [vmem:[#allocation1] sm:%s3] %v4
    %v6 = vld [vmem:[#allocation1] sm:$0x1]
    %vm7 = vcmask 130048
    %8 = vst.msk [vmem:[#allocation0] sm:$0x1] %vm7, %v6
    %s9 = scalar_lea.vmem [#allocation1], 1
    %v10 = vld [vmem:[%s9] sm:$0x1]
    %11 = vrot.lane.b32.xlu0 %v10, 16
    %v12 = vpop.permute.xlu0 %11
    %vm13 = vcmask 261248
    %14 = vst.msk [vmem:[#allocation0] sm:$0x1] %vm13, %v12
    %s16 = ssub.s32 2, 1
    %v17 = vld [vmem:[#allocation0] sm:%s16]
    %s19 = ssub.s32 2, 1
    %20 = vst [vmem:[%s1] sm:%s19] %v17

// kernel: dspn_forward.1
$region0: #{dspn_forward.1}
  #allocation0 [shape = 'u32[]', space=smem, size = 0x4, offset = 0x4, fixed_abs, tag = 'smem constant byte address 0x4 - core index']
  #allocation1 [shape = 'u32[72,128]{1,0:T(1,128)}', space=vmem, size = 0x9000, scoped, tag = 'internal scratch']
  %s0 = inlined_call_operand.vmem [shape: f32[32,5], index: 0, kind: input, shape index: {}, may-alias: {0,10}]
  %s1 = inlined_call_operand.vmem [shape: f32[2,32], index: 1, kind: input, shape index: {}]
  %s2 = inlined_call_operand.vmem [shape: f32[2,32], index: 2, kind: input, shape index: {}]
  %s3 = inlined_call_operand.vmem [shape: f32[32,2], index: 3, kind: input, shape index: {}]
  %s4 = inlined_call_operand.vmem [shape: f32[5,32], index: 4, kind: input, shape index: {}]
  %s5 = inlined_call_operand.vmem [shape: f32[1,32], index: 5, kind: input, shape index: {}]
  %s6 = inlined_call_operand.vmem [shape: f32[32,32], index: 6, kind: input, shape index: {}]
  %s7 = inlined_call_operand.vmem [shape: f32[1,32], index: 7, kind: input, shape index: {}]
  %s8 = inlined_call_operand.vmem [shape: f32[32,32], index: 8, kind: input, shape index: {}]
  %s9 = inlined_call_operand.vmem [shape: f32[32,5], index: 9, kind: input, shape index: {}]
  %s10 = inlined_call_operand.vmem [shape: f32[32,5], index: 10, kind: output, shape index: {}, may-alias: {0,10}]
  %s11 = sld [smem:[#allocation0]]
  $region50: #{dspn_forward.1} parent=0
    _
  %s13 = ssub.s32 1, %s11
  %s14 = scalar_select 0, %s13, %s11
  // Predicated region
  $region2: #{dspn_forward.1} parent=0 // pred_check
    _
  $region3: #{dspn_forward.1} parent=0 // pred_check_branch
    %16 = sbr.rel (0) target = $region5
  $region4: #{dspn_forward.1} parent=0 // pred_region
    _
  $region5: #{dspn_forward.1} parent=0 // pred_fallthru
    _
  // Predicated region
  $region6: #{dspn_forward.1} parent=0 // pred_check
    _
  $region7: #{dspn_forward.1} parent=0 // pred_check_branch
    %18 = sbr.rel (0) target = $region9
  $region8: #{dspn_forward.1} parent=0 // pred_region
    _
  $region9: #{dspn_forward.1} parent=0 // pred_fallthru
    _
  // Predicated region
  $region10: #{dspn_forward.1} parent=0 // pred_check
    _
  $region11: #{dspn_forward.1} parent=0 // pred_check_branch
    %20 = sbr.rel (0) target = $region13
  $region12: #{dspn_forward.1} parent=0 // pred_region
    _
  $region13: #{dspn_forward.1} parent=0 // pred_fallthru
    _
  // Predicated region
  $region14: #{dspn_forward.1} parent=0 // pred_check
    _
  $region15: #{dspn_forward.1} parent=0 // pred_check_branch
    %22 = sbr.rel (0) target = $region17
  $region16: #{dspn_forward.1} parent=0 // pred_region
    _
  $region17: #{dspn_forward.1} parent=0 // pred_fallthru
    _
  // Predicated region
  $region18: #{dspn_forward.1} parent=0 // pred_check
    _
  $region19: #{dspn_forward.1} parent=0 // pred_check_branch
    %24 = sbr.rel (0) target = $region21
  $region20: #{dspn_forward.1} parent=0 // pred_region
    _
  $region21: #{dspn_forward.1} parent=0 // pred_fallthru
    _
  // Predicated region
  $region22: #{dspn_forward.1} parent=0 // pred_check
    _
  $region23: #{dspn_forward.1} parent=0 // pred_check_branch
    %26 = sbr.rel (0) target = $region25
  $region24: #{dspn_forward.1} parent=0 // pred_region
    _
  $region25: #{dspn_forward.1} parent=0 // pred_fallthru
    _
  // Predicated region
  $region26: #{dspn_forward.1} parent=0 // pred_check
    _
  $region27: #{dspn_forward.1} parent=0 // pred_check_branch
    %28 = sbr.rel (0) target = $region29
  $region28: #{dspn_forward.1} parent=0 // pred_region
    _
  $region29: #{dspn_forward.1} parent=0 // pred_fallthru
    _
  // Predicated region
  $region30: #{dspn_forward.1} parent=0 // pred_check
    _
  $region31: #{dspn_forward.1} parent=0 // pred_check_branch
    %30 = sbr.rel (0) target = $region33
  $region32: #{dspn_forward.1} parent=0 // pred_region
    _
  $region33: #{dspn_forward.1} parent=0 // pred_fallthru
    _
  // Predicated region
  $region34: #{dspn_forward.1} parent=0 // pred_check
    _
  $region35: #{dspn_forward.1} parent=0 // pred_check_branch
    %32 = sbr.rel (0) target = $region37
  $region36: #{dspn_forward.1} parent=0 // pred_region
    _
  $region37: #{dspn_forward.1} parent=0 // pred_fallthru
    _
  // Predicated region
  $region38: #{dspn_forward.1} parent=0 // pred_check
    _
  $region39: #{dspn_forward.1} parent=0 // pred_check_branch
    %34 = sbr.rel (0) target = $region41
  $region40: #{dspn_forward.1} parent=0 // pred_region
    _
  $region41: #{dspn_forward.1} parent=0 // pred_fallthru
    _
  %v35 = vld [vmem:[%s0] sm:$0xff]
  %v36 = vld [vmem:[%s0 + $0x8] sm:$0xff]
  %v37 = vld [vmem:[%s0 + $0x10] sm:$0xff]
  %v38 = vld [vmem:[%s0 + $0x18] sm:$0xff]
  %v39 = vld [vmem:[%s1] sm:$0x3]
  %v40 = vld [vmem:[%s2] sm:$0x3]
  %v41 = vld [vmem:[%s3] sm:$0xff]
  %v42 = vld [vmem:[%s3 + $0x8] sm:$0xff]
  %v43 = vld [vmem:[%s3 + $0x10] sm:$0xff]
  %v44 = vld [vmem:[%s3 + $0x18] sm:$0xff]
  %v45 = vld [vmem:[%s4] sm:$0x1f]
  %v46 = vld [vmem:[%s5] sm:$0x1]
  %v47 = vld [vmem:[%s6] sm:$0xff]
  %v48 = vld [vmem:[%s6 + $0x8] sm:$0xff]
  %v49 = vld [vmem:[%s6 + $0x10] sm:$0xff]
  %v50 = vld [vmem:[%s6 + $0x18] sm:$0xff]
  %v51 = vld [vmem:[%s7] sm:$0x1]
  %v52 = vld [vmem:[%s8] sm:$0xff]
  %v53 = vld [vmem:[%s8 + $0x8] sm:$0xff]
  %v54 = vld [vmem:[%s8 + $0x10] sm:$0xff]
  %v55 = vld [vmem:[%s8 + $0x18] sm:$0xff]
  %v56 = vld [vmem:[%s9] sm:$0xff]
  %v57 = vld [vmem:[%s9 + $0x8] sm:$0xff]
  %v58 = vld [vmem:[%s9 + $0x10] sm:$0xff]
  %v59 = vld [vmem:[%s9 + $0x18] sm:$0xff]
  %v60 = vlaneseq
  %v61 = vand.u32 %v60, 127
  %vm62 = vcmp.eq.s32.totalorder %v61, 4
  %v64 = vperm.slane %v46, 0
  %vm66 = vcmask 39936
  %v68 = vsel %vm66, %v35, 0
  %v71 = vsel %vm66, %v36, 0
  %v74 = vsel %vm66, %v37, 0
  %v77 = vsel %vm66, %v38, 0
  %vm79 = vcmask 1044480
  %v81 = vsel %vm79, %v45, 0
  %83 = vmatpush.msra.mxu0 0.0
  %84 = vmatpush.msra.mxu0 0.0
  %85 = vmatpush.msra.mxu0 0.0
  %86 = vmatpush.msra.mxu0 0.0
  %87 = vmatpush.msra.mxu0 0.0
  %88 = vmatpush.msra.mxu0 0.0
  %89 = vmatpush.msra.mxu0 0.0
  %90 = vmatpush.msra.mxu0 0.0
  %91 = vmatpush.msra.mxu0 0.0
  %92 = vmatpush.msra.mxu0 0.0
  %93 = vmatpush.msra.mxu0 0.0
  %94 = vmatpush.msra.mxu0 0.0
  %95 = vmatpush.msra.mxu0 0.0
  %96 = vmatpush.msra.mxu0 0.0
  %97 = vmatpush.msra.mxu0 0.0
  %98 = vmatpush.msra.mxu0 %v81
  %99 = vmatmul.f32.gmra.mxu0 %v68
  %v100 = vpop.f32.mrf.mxu0
  %v101 = vadd.f32 %v64, %v100
  %102 = vmatmul.f32.gmra.mxu0 %v71
  %v103 = vpop.f32.mrf.mxu0
  %v104 = vadd.f32 %v64, %v103
  %105 = vmatmul.f32.gmra.mxu0 %v74
  %v106 = vpop.f32.mrf.mxu0
  %v107 = vadd.f32 %v64, %v106
  %108 = vmatmul.f32.gmra.mxu0 %v77
  %v109 = vpop.f32.mrf.mxu0
  %v110 = vadd.f32 %v64, %v109
  %111 = vdwg.mxu0
  %v112 = vmax.f32 %v101, 0.0
  %v113 = vmax.f32 %v104, 0.0
  %v114 = vmax.f32 %v107, 0.0
  %v115 = vmax.f32 %v110, 0.0
  %vm116 = vcmask 261120
  %v118 = vsel %vm116, %v40, 0
  %120 = vmatpush.msra.mxu0 0.0
  %121 = vmatpush.msra.mxu0 0.0
  %122 = vmatpush.msra.mxu0 0.0
  %123 = vmatpush.msra.mxu0 0.0
  %124 = vmatpush.msra.mxu0 0.0
  %125 = vmatpush.msra.mxu0 0.0
  %126 = vmatpush.msra.mxu0 0.0
  %127 = vmatpush.msra.mxu0 0.0
  %128 = vmatpush.msra.mxu0 0.0
  %129 = vmatpush.msra.mxu0 0.0
  %130 = vmatpush.msra.mxu0 0.0
  %131 = vmatpush.msra.mxu0 0.0
  %132 = vmatpush.msra.mxu0 %v115
  %133 = vmatpush.msra.mxu0 %v114
  %134 = vmatpush.msra.mxu0 %v113
  %135 = vmatpush.msra.mxu0 %v112
  %136 = vmatmul.f32.gmra.mxu0 %v118
  %v137 = vpop.f32.mrf.mxu0
  %v138 = vadd.f32 0.0, %v137
  %139 = vdwg.mxu0
  %v141 = vperm.slane %v51, 0
  %v144 = vsel %vm116, %v138, 0
  %146 = vmatpush.msra.mxu0 0.0
  %147 = vmatpush.msra.mxu0 0.0
  %148 = vmatpush.msra.mxu0 0.0
  %149 = vmatpush.msra.mxu0 0.0
  %150 = vmatpush.msra.mxu0 0.0
  %151 = vmatpush.msra.mxu0 0.0
  %152 = vmatpush.msra.mxu0 0.0
  %153 = vmatpush.msra.mxu0 0.0
  %154 = vmatpush.msra.mxu0 0.0
  %155 = vmatpush.msra.mxu0 0.0
  %156 = vmatpush.msra.mxu0 0.0
  %157 = vmatpush.msra.mxu0 0.0
  %158 = vmatpush.msra.mxu0 %v50
  %159 = vmatpush.msra.mxu0 %v49
  %160 = vmatpush.msra.mxu0 %v48
  %161 = vmatpush.msra.mxu0 %v47
  %162 = vmatmul.f32.gmra.mxu0 %v144
  %v163 = vpop.f32.mrf.mxu0
  %v164 = vadd.f32 %v141, %v163
  %165 = vdwg.mxu0
  %v166 = vsub.f32 %v164, %v39
  %v167 = vmax.f32 %v166, -1.0
  %v168 = vmin.f32 %v167, 1.0
  %v170 = vsel %vm116, %v168, 0
  %172 = vmatpush.msra.mxu0 0.0
  %173 = vmatpush.msra.mxu0 0.0
  %174 = vmatpush.msra.mxu0 0.0
  %175 = vmatpush.msra.mxu0 0.0
  %176 = vmatpush.msra.mxu0 0.0
  %177 = vmatpush.msra.mxu0 0.0
  %178 = vmatpush.msra.mxu0 0.0
  %179 = vmatpush.msra.mxu0 0.0
  %180 = vmatpush.msra.mxu0 0.0
  %181 = vmatpush.msra.mxu0 0.0
  %182 = vmatpush.msra.mxu0 0.0
  %183 = vmatpush.msra.mxu0 0.0
  %184 = vmatpush.msra.mxu0 %v55
  %185 = vmatpush.msra.mxu0 %v54
  %186 = vmatpush.msra.mxu0 %v53
  %187 = vmatpush.msra.mxu0 %v52
  %188 = vmatmul.f32.gmra.mxu0 %v170
  %v189 = vpop.f32.mrf.mxu0
  %v190 = vadd.f32 0.0, %v189
  %191 = vdwg.mxu0
  %vm192 = vcmask 15360
  %v194 = vsel %vm192, %v41, 0
  %v197 = vsel %vm192, %v42, 0
  %v200 = vsel %vm192, %v43, 0
  %v203 = vsel %vm192, %v44, 0
  %vm205 = vcmask 1041408
  %v207 = vsel %vm205, %v190, 0
  %209 = vmatpush.msra.mxu0 0.0
  %210 = vmatpush.msra.mxu0 0.0
  %211 = vmatpush.msra.mxu0 0.0
  %212 = vmatpush.msra.mxu0 0.0
  %213 = vmatpush.msra.mxu0 0.0
  %214 = vmatpush.msra.mxu0 0.0
  %215 = vmatpush.msra.mxu0 0.0
  %216 = vmatpush.msra.mxu0 0.0
  %217 = vmatpush.msra.mxu0 0.0
  %218 = vmatpush.msra.mxu0 0.0
  %219 = vmatpush.msra.mxu0 0.0
  %220 = vmatpush.msra.mxu0 0.0
  %221 = vmatpush.msra.mxu0 0.0
  %222 = vmatpush.msra.mxu0 0.0
  %223 = vmatpush.msra.mxu0 0.0
  %224 = vmatpush.msra.mxu0 %v207
  %225 = vmatmul.f32.gmra.mxu0 %v194
  %v226 = vpop.f32.mrf.mxu0
  %v227 = vadd.f32 0.0, %v226
  %228 = vmatmul.f32.gmra.mxu0 %v197
  %v229 = vpop.f32.mrf.mxu0
  %v230 = vadd.f32 0.0, %v229
  %231 = vmatmul.f32.gmra.mxu0 %v200
  %v232 = vpop.f32.mrf.mxu0
  %v233 = vadd.f32 0.0, %v232
  %234 = vmatmul.f32.gmra.mxu0 %v203
  %v235 = vpop.f32.mrf.mxu0
  %v236 = vadd.f32 0.0, %v235
  %237 = vdwg.mxu0
  %vm238 = vcmp.gt.f32.partialorder %v101, 0.0
  %vm239 = vcmp.gt.f32.partialorder %v104, 0.0
  %vm240 = vcmp.gt.f32.partialorder %v107, 0.0
  %vm241 = vcmp.gt.f32.partialorder %v110, 0.0
  %v242 = vsel %vm238, %v227, 0.0
  %v243 = vsel %vm239, %v230, 0.0
  %v244 = vsel %vm240, %v233, 0.0
  %v245 = vsel %vm241, %v236, 0.0
  %v247 = vsel %vm116, %v242, 0
  %v250 = vsel %vm116, %v243, 0
  %v253 = vsel %vm116, %v244, 0
  %v256 = vsel %vm116, %v245, 0
  %258 = vmatpush.msra.mxu0 0.0
  %259 = vmatpush.msra.mxu0 0.0
  %260 = vmatpush.msra.mxu0 0.0
  %261 = vmatpush.msra.mxu0 0.0
  %262 = vmatpush.msra.mxu0 0.0
  %263 = vmatpush.msra.mxu0 0.0
  %264 = vmatpush.msra.mxu0 0.0
  %265 = vmatpush.msra.mxu0 0.0
  %266 = vmatpush.msra.mxu0 0.0
  %267 = vmatpush.msra.mxu0 0.0
  %268 = vmatpush.msra.mxu0 0.0
  %269 = vmatpush.msra.mxu0 0.0
  %270 = vmatpush.msra.mxu0 %v59
  %271 = vmatpush.msra.mxu0 %v58
  %272 = vmatpush.msra.mxu0 %v57
  %273 = vmatpush.msra.mxu0 %v56
  %274 = vmatmul.f32.gmra.mxu0 %v247
  %v275 = vpop.f32.mrf.mxu0
  %v276 = vadd.f32 0.0, %v275
  %277 = vmatmul.f32.gmra.mxu0 %v250
  %v278 = vpop.f32.mrf.mxu0
  %v279 = vadd.f32 0.0, %v278
  %280 = vmatmul.f32.gmra.mxu0 %v253
  %v281 = vpop.f32.mrf.mxu0
  %v282 = vadd.f32 0.0, %v281
  %283 = vmatmul.f32.gmra.mxu0 %v256
  %v284 = vpop.f32.mrf.mxu0
  %v285 = vadd.f32 0.0, %v284
  %286 = vdwg.mxu0
  %v287 = vsub.f32 %v35, %v276
  %v288 = vsub.f32 %v36, %v279
  %v289 = vsub.f32 %v37, %v282
  %v290 = vsub.f32 %v38, %v285
  %v291 = vmax.f32 %v287, 0.0
  %v292 = vmax.f32 %v288, 0.0
  %v293 = vmax.f32 %v289, 0.0
  %v294 = vmax.f32 %v290, 0.0
  %v295 = vmin.f32 %v291, 1.0
  %v296 = vmin.f32 %v292, 1.0
  %v297 = vmin.f32 %v293, 1.0
  %v298 = vmin.f32 %v294, 1.0
  %v299 = vsel %vm62, %v295, %v287
  %v300 = vsel %vm62, %v296, %v288
  %v301 = vsel %vm62, %v297, %v289
  %v302 = vsel %vm62, %v298, %v290
  %v304 = vsel %vm66, %v299, 0
  %v307 = vsel %vm66, %v300, 0
  %v310 = vsel %vm66, %v301, 0
  %v313 = vsel %vm66, %v302, 0
  %315 = vmatpush.msra.mxu0 0.0
  %316 = vmatpush.msra.mxu0 0.0
  %317 = vmatpush.msra.mxu0 0.0
  %318 = vmatpush.msra.mxu0 0.0
  %319 = vmatpush.msra.mxu0 0.0
  %320 = vmatpush.msra.mxu0 0.0
  %321 = vmatpush.msra.mxu0 0.0
  %322 = vmatpush.msra.mxu0 0.0
  %323 = vmatpush.msra.mxu0 0.0
  %324 = vmatpush.msra.mxu0 0.0
  %325 = vmatpush.msra.mxu0 0.0
  %326 = vmatpush.msra.mxu0 0.0
  %327 = vmatpush.msra.mxu0 0.0
  %328 = vmatpush.msra.mxu0 0.0
  %329 = vmatpush.msra.mxu0 0.0
  %330 = vmatpush.msra.mxu0 %v81
  %331 = vmatmul.f32.gmra.mxu0 %v304
  %v332 = vpop.f32.mrf.mxu0
  %v333 = vadd.f32 %v64, %v332
  %334 = vmatmul.f32.gmra.mxu0 %v307
  %v335 = vpop.f32.mrf.mxu0
  %v336 = vadd.f32 %v64, %v335
  %337 = vmatmul.f32.gmra.mxu0 %v310
  %v338 = vpop.f32.mrf.mxu0
  %v339 = vadd.f32 %v64, %v338
  %340 = vmatmul.f32.gmra.mxu0 %v313
  %v341 = vpop.f32.mrf.mxu0
  %v342 = vadd.f32 %v64, %v341
  %343 = vdwg.mxu0
  %v344 = vmax.f32 %v333, 0.0
  %v345 = vmax.f32 %v336, 0.0
  %v346 = vmax.f32 %v339, 0.0
  %v347 = vmax.f32 %v342, 0.0
  %348 = vmatpush.msra.mxu0 0.0
  %349 = vmatpush.msra.mxu0 0.0
  %350 = vmatpush.msra.mxu0 0.0
  %351 = vmatpush.msra.mxu0 0.0
  %352 = vmatpush.msra.mxu0 0.0
  %353 = vmatpush.msra.mxu0 0.0
  %354 = vmatpush.msra.mxu0 0.0
  %355 = vmatpush.msra.mxu0 0.0
  %356 = vmatpush.msra.mxu0 0.0
  %357 = vmatpush.msra.mxu0 0.0
  %358 = vmatpush.msra.mxu0 0.0
  %359 = vmatpush.msra.mxu0 0.0
  %360 = vmatpush.msra.mxu0 %v347
  %361 = vmatpush.msra.mxu0 %v346
  %362 = vmatpush.msra.mxu0 %v345
  %363 = vmatpush.msra.mxu0 %v344
  %364 = vmatmul.f32.gmra.mxu0 %v118
  %v365 = vpop.f32.mrf.mxu0
  %v366 = vadd.f32 0.0, %v365
  %367 = vdwg.mxu0
  %v369 = vsel %vm116, %v366, 0
  %371 = vmatpush.msra.mxu0 0.0
  %372 = vmatpush.msra.mxu0 0.0
  %373 = vmatpush.msra.mxu0 0.0
  %374 = vmatpush.msra.mxu0 0.0
  %375 = vmatpush.msra.mxu0 0.0
  %376 = vmatpush.msra.mxu0 0.0
  %377 = vmatpush.msra.mxu0 0.0
  %378 = vmatpush.msra.mxu0 0.0
  %379 = vmatpush.msra.mxu0 0.0
  %380 = vmatpush.msra.mxu0 0.0
  %381 = vmatpush.msra.mxu0 0.0
  %382 = vmatpush.msra.mxu0 0.0
  %383 = vmatpush.msra.mxu0 %v50
  %384 = vmatpush.msra.mxu0 %v49
  %385 = vmatpush.msra.mxu0 %v48
  %386 = vmatpush.msra.mxu0 %v47
  %387 = vmatmul.f32.gmra.mxu0 %v369
  %v388 = vpop.f32.mrf.mxu0
  %v389 = vadd.f32 %v141, %v388
  %390 = vdwg.mxu0
  %v391 = vsub.f32 %v389, %v39
  %v392 = vmax.f32 %v391, -1.0
  %v393 = vmin.f32 %v392, 1.0
  %v395 = vsel %vm116, %v393, 0
  %397 = vmatpush.msra.mxu0 0.0
  %398 = vmatpush.msra.mxu0 0.0
  %399 = vmatpush.msra.mxu0 0.0
  %400 = vmatpush.msra.mxu0 0.0
  %401 = vmatpush.msra.mxu0 0.0
  %402 = vmatpush.msra.mxu0 0.0
  %403 = vmatpush.msra.mxu0 0.0
  %404 = vmatpush.msra.mxu0 0.0
  %405 = vmatpush.msra.mxu0 0.0
  %406 = vmatpush.msra.mxu0 0.0
  %407 = vmatpush.msra.mxu0 0.0
  %408 = vmatpush.msra.mxu0 0.0
  %409 = vmatpush.msra.mxu0 %v55
  %410 = vmatpush.msra.mxu0 %v54
  %411 = vmatpush.msra.mxu0 %v53
  %412 = vmatpush.msra.mxu0 %v52
  %413 = vmatmul.f32.gmra.mxu0 %v395
  %v414 = vpop.f32.mrf.mxu0
  %v415 = vadd.f32 0.0, %v414
  %416 = vdwg.mxu0
  %v418 = vsel %vm205, %v415, 0
  %420 = vmatpush.msra.mxu0 0.0
  %421 = vmatpush.msra.mxu0 0.0
  %422 = vmatpush.msra.mxu0 0.0
  %423 = vmatpush.msra.mxu0 0.0
  %424 = vmatpush.msra.mxu0 0.0
  %425 = vmatpush.msra.mxu0 0.0
  %426 = vmatpush.msra.mxu0 0.0
  %427 = vmatpush.msra.mxu0 0.0
  %428 = vmatpush.msra.mxu0 0.0
  %429 = vmatpush.msra.mxu0 0.0
  %430 = vmatpush.msra.mxu0 0.0
  %431 = vmatpush.msra.mxu0 0.0
  %432 = vmatpush.msra.mxu0 0.0
  %433 = vmatpush.msra.mxu0 0.0
  %434 = vmatpush.msra.mxu0 0.0
  %435 = vmatpush.msra.mxu0 %v418
  %436 = vmatmul.f32.gmra.mxu0 %v194
  %v437 = vpop.f32.mrf.mxu0
  %v438 = vadd.f32 0.0, %v437
  %439 = vmatmul.f32.gmra.mxu0 %v197
  %v440 = vpop.f32.mrf.mxu0
  %v441 = vadd.f32 0.0, %v440
  %442 = vmatmul.f32.gmra.mxu0 %v200
  %v443 = vpop.f32.mrf.mxu0
  %v444 = vadd.f32 0.0, %v443
  %445 = vmatmul.f32.gmra.mxu0 %v203
  %v446 = vpop.f32.mrf.mxu0
  %v447 = vadd.f32 0.0, %v446
  %448 = vdwg.mxu0
  %vm449 = vcmp.gt.f32.partialorder %v333, 0.0
  %vm450 = vcmp.gt.f32.partialorder %v336, 0.0
  %vm451 = vcmp.gt.f32.partialorder %v339, 0.0
  %vm452 = vcmp.gt.f32.partialorder %v342, 0.0
  %v453 = vsel %vm449, %v438, 0.0
  %v454 = vsel %vm450, %v441, 0.0
  %v455 = vsel %vm451, %v444, 0.0
  %v456 = vsel %vm452, %v447, 0.0
  %v458 = vsel %vm116, %v453, 0
  %v461 = vsel %vm116, %v454, 0
  %v464 = vsel %vm116, %v455, 0
  %v467 = vsel %vm116, %v456, 0
  %469 = vmatpush.msra.mxu0 0.0
  %470 = vmatpush.msra.mxu0 0.0
  %471 = vmatpush.msra.mxu0 0.0
  %472 = vmatpush.msra.mxu0 0.0
  %473 = vmatpush.msra.mxu0 0.0
  %474 = vmatpush.msra.mxu0 0.0
  %475 = vmatpush.msra.mxu0 0.0
  %476 = vmatpush.msra.mxu0 0.0
  %477 = vmatpush.msra.mxu0 0.0
  %478 = vmatpush.msra.mxu0 0.0
  %479 = vmatpush.msra.mxu0 0.0
  %480 = vmatpush.msra.mxu0 0.0
  %481 = vmatpush.msra.mxu0 %v59
  %482 = vmatpush.msra.mxu0 %v58
  %483 = vmatpush.msra.mxu0 %v57
  %484 = vmatpush.msra.mxu0 %v56
  %485 = vmatmul.f32.gmra.mxu0 %v458
  %v486 = vpop.f32.mrf.mxu0
  %v487 = vadd.f32 0.0, %v486
  %488 = vmatmul.f32.gmra.mxu0 %v461
  %v489 = vpop.f32.mrf.mxu0
  %v490 = vadd.f32 0.0, %v489
  %491 = vmatmul.f32.gmra.mxu0 %v464
  %v492 = vpop.f32.mrf.mxu0
  %v493 = vadd.f32 0.0, %v492
  %494 = vmatmul.f32.gmra.mxu0 %v467
  %v495 = vpop.f32.mrf.mxu0
  %v496 = vadd.f32 0.0, %v495
  %497 = vdwg.mxu0
  %v498 = vsub.f32 %v299, %v487
  %v499 = vsub.f32 %v300, %v490
  %v500 = vsub.f32 %v301, %v493
  %v501 = vsub.f32 %v302, %v496
  %v502 = vmax.f32 %v498, 0.0
  %v503 = vmax.f32 %v499, 0.0
  %v504 = vmax.f32 %v500, 0.0
  %v505 = vmax.f32 %v501, 0.0
  %v506 = vmin.f32 %v502, 1.0
  %v507 = vmin.f32 %v503, 1.0
  %v508 = vmin.f32 %v504, 1.0
  %v509 = vmin.f32 %v505, 1.0
  %v510 = vsel %vm62, %v506, %v498
  %v511 = vsel %vm62, %v507, %v499
  %v512 = vsel %vm62, %v508, %v500
  %v513 = vsel %vm62, %v509, %v501
  %v515 = vsel %vm66, %v510, 0
  %v518 = vsel %vm66, %v511, 0
  %v521 = vsel %vm66, %v512, 0
  %v524 = vsel %vm66, %v513, 0
  %526 = vmatpush.msra.mxu0 0.0
  %527 = vmatpush.msra.mxu0 0.0
  %528 = vmatpush.msra.mxu0 0.0
  %529 = vmatpush.msra.mxu0 0.0
  %530 = vmatpush.msra.mxu0 0.0
  %531 = vmatpush.msra.mxu0 0.0
  %532 = vmatpush.msra.mxu0 0.0
  %533 = vmatpush.msra.mxu0 0.0
  %534 = vmatpush.msra.mxu0 0.0
  %535 = vmatpush.msra.mxu0 0.0
  %536 = vmatpush.msra.mxu0 0.0
  %537 = vmatpush.msra.mxu0 0.0
  %538 = vmatpush.msra.mxu0 0.0
  %539 = vmatpush.msra.mxu0 0.0
  %540 = vmatpush.msra.mxu0 0.0
  %541 = vmatpush.msra.mxu0 %v81
  %542 = vmatmul.f32.gmra.mxu0 %v515
  %v543 = vpop.f32.mrf.mxu0
  %v544 = vadd.f32 %v64, %v543
  %545 = vmatmul.f32.gmra.mxu0 %v518
  %v546 = vpop.f32.mrf.mxu0
  %v547 = vadd.f32 %v64, %v546
  %548 = vmatmul.f32.gmra.mxu0 %v521
  %v549 = vpop.f32.mrf.mxu0
  %v550 = vadd.f32 %v64, %v549
  %551 = vmatmul.f32.gmra.mxu0 %v524
  %v552 = vpop.f32.mrf.mxu0
  %v553 = vadd.f32 %v64, %v552
  %554 = vdwg.mxu0
  %v555 = vmax.f32 %v544, 0.0
  %v556 = vmax.f32 %v547, 0.0
  %v557 = vmax.f32 %v550, 0.0
  %v558 = vmax.f32 %v553, 0.0
  %559 = vmatpush.msra.mxu0 0.0
  %560 = vmatpush.msra.mxu0 0.0
  %561 = vmatpush.msra.mxu0 0.0
  %562 = vmatpush.msra.mxu0 0.0
  %563 = vmatpush.msra.mxu0 0.0
  %564 = vmatpush.msra.mxu0 0.0
  %565 = vmatpush.msra.mxu0 0.0
  %566 = vmatpush.msra.mxu0 0.0
  %567 = vmatpush.msra.mxu0 0.0
  %568 = vmatpush.msra.mxu0 0.0
  %569 = vmatpush.msra.mxu0 0.0
  %570 = vmatpush.msra.mxu0 0.0
  %571 = vmatpush.msra.mxu0 %v558
  %572 = vmatpush.msra.mxu0 %v557
  %573 = vmatpush.msra.mxu0 %v556
  %574 = vmatpush.msra.mxu0 %v555
  %575 = vmatmul.f32.gmra.mxu0 %v118
  %v576 = vpop.f32.mrf.mxu0
  %v577 = vadd.f32 0.0, %v576
  %578 = vdwg.mxu0
  %v580 = vsel %vm116, %v577, 0
  %582 = vmatpush.msra.mxu0 0.0
  %583 = vmatpush.msra.mxu0 0.0
  %584 = vmatpush.msra.mxu0 0.0
  %585 = vmatpush.msra.mxu0 0.0
  %586 = vmatpush.msra.mxu0 0.0
  %587 = vmatpush.msra.mxu0 0.0
  %588 = vmatpush.msra.mxu0 0.0
  %589 = vmatpush.msra.mxu0 0.0
  %590 = vmatpush.msra.mxu0 0.0
  %591 = vmatpush.msra.mxu0 0.0
  %592 = vmatpush.msra.mxu0 0.0
  %593 = vmatpush.msra.mxu0 0.0
  %594 = vmatpush.msra.mxu0 %v50
  %595 = vmatpush.msra.mxu0 %v49
  %596 = vmatpush.msra.mxu0 %v48
  %597 = vmatpush.msra.mxu0 %v47
  %598 = vmatmul.f32.gmra.mxu0 %v580
  %v599 = vpop.f32.mrf.mxu0
  %v600 = vadd.f32 %v141, %v599
  %601 = vdwg.mxu0
  %v602 = vsub.f32 %v600, %v39
  %v603 = vmax.f32 %v602, -1.0
  %v604 = vmin.f32 %v603, 1.0
  %v606 = vsel %vm116, %v604, 0
  %608 = vmatpush.msra.mxu0 0.0
  %609 = vmatpush.msra.mxu0 0.0
  %610 = vmatpush.msra.mxu0 0.0
  %611 = vmatpush.msra.mxu0 0.0
  %612 = vmatpush.msra.mxu0 0.0
  %613 = vmatpush.msra.mxu0 0.0
  %614 = vmatpush.msra.mxu0 0.0
  %615 = vmatpush.msra.mxu0 0.0
  %616 = vmatpush.msra.mxu0 0.0
  %617 = vmatpush.msra.mxu0 0.0
  %618 = vmatpush.msra.mxu0 0.0
  %619 = vmatpush.msra.mxu0 0.0
  %620 = vmatpush.msra.mxu0 %v55
  %621 = vmatpush.msra.mxu0 %v54
  %622 = vmatpush.msra.mxu0 %v53
  %623 = vmatpush.msra.mxu0 %v52
  %624 = vmatmul.f32.gmra.mxu0 %v606
  %v625 = vpop.f32.mrf.mxu0
  %v626 = vadd.f32 0.0, %v625
  %627 = vdwg.mxu0
  %v629 = vsel %vm205, %v626, 0
  %631 = vmatpush.msra.mxu0 0.0
  %632 = vmatpush.msra.mxu0 0.0
  %633 = vmatpush.msra.mxu0 0.0
  %634 = vmatpush.msra.mxu0 0.0
  %635 = vmatpush.msra.mxu0 0.0
  %636 = vmatpush.msra.mxu0 0.0
  %637 = vmatpush.msra.mxu0 0.0
  %638 = vmatpush.msra.mxu0 0.0
  %639 = vmatpush.msra.mxu0 0.0
  %640 = vmatpush.msra.mxu0 0.0
  %641 = vmatpush.msra.mxu0 0.0
  %642 = vmatpush.msra.mxu0 0.0
  %643 = vmatpush.msra.mxu0 0.0
  %644 = vmatpush.msra.mxu0 0.0
  %645 = vmatpush.msra.mxu0 0.0
  %646 = vmatpush.msra.mxu0 %v629
  %647 = vmatmul.f32.gmra.mxu0 %v194
  %v648 = vpop.f32.mrf.mxu0
  %v649 = vadd.f32 0.0, %v648
  %650 = vmatmul.f32.gmra.mxu0 %v197
  %v651 = vpop.f32.mrf.mxu0
  %v652 = vadd.f32 0.0, %v651
  %653 = vmatmul.f32.gmra.mxu0 %v200
  %v654 = vpop.f32.mrf.mxu0
  %v655 = vadd.f32 0.0, %v654
  %656 = vmatmul.f32.gmra.mxu0 %v203
  %v657 = vpop.f32.mrf.mxu0
  %v658 = vadd.f32 0.0, %v657
  %659 = vdwg.mxu0
  %vm660 = vcmp.gt.f32.partialorder %v544, 0.0
  %vm661 = vcmp.gt.f32.partialorder %v547, 0.0
  %vm662 = vcmp.gt.f32.partialorder %v550, 0.0
  %vm663 = vcmp.gt.f32.partialorder %v553, 0.0
  %v664 = vsel %vm660, %v649, 0.0
  %v665 = vsel %vm661, %v652, 0.0
  %v666 = vsel %vm662, %v655, 0.0
  %v667 = vsel %vm663, %v658, 0.0
  %v669 = vsel %vm116, %v664, 0
  %v672 = vsel %vm116, %v665, 0
  %v675 = vsel %vm116, %v666, 0
  %v678 = vsel %vm116, %v667, 0
  %680 = vmatpush.msra.mxu0 0.0
  %681 = vmatpush.msra.mxu0 0.0
  %682 = vmatpush.msra.mxu0 0.0
  %683 = vmatpush.msra.mxu0 0.0
  %684 = vmatpush.msra.mxu0 0.0
  %685 = vmatpush.msra.mxu0 0.0
  %686 = vmatpush.msra.mxu0 0.0
  %687 = vmatpush.msra.mxu0 0.0
  %688 = vmatpush.msra.mxu0 0.0
  %689 = vmatpush.msra.mxu0 0.0
  %690 = vmatpush.msra.mxu0 0.0
  %691 = vmatpush.msra.mxu0 0.0
  %692 = vmatpush.msra.mxu0 %v59
  %693 = vmatpush.msra.mxu0 %v58
  %694 = vmatpush.msra.mxu0 %v57
  %695 = vmatpush.msra.mxu0 %v56
  %696 = vmatmul.f32.gmra.mxu0 %v669
  %v697 = vpop.f32.mrf.mxu0
  %v698 = vadd.f32 0.0, %v697
  %699 = vmatmul.f32.gmra.mxu0 %v672
  %v700 = vpop.f32.mrf.mxu0
  %v701 = vadd.f32 0.0, %v700
  %702 = vmatmul.f32.gmra.mxu0 %v675
  %v703 = vpop.f32.mrf.mxu0
  %v704 = vadd.f32 0.0, %v703
  %705 = vmatmul.f32.gmra.mxu0 %v678
  %v706 = vpop.f32.mrf.mxu0
  %v707 = vadd.f32 0.0, %v706
  %708 = vdwg.mxu0
  %v709 = vsub.f32 %v510, %v698
  %v710 = vsub.f32 %v511, %v701
  %v711 = vsub.f32 %v512, %v704
  %v712 = vsub.f32 %v513, %v707
  %v713 = vmax.f32 %v709, 0.0
  %v714 = vmax.f32 %v710, 0.0
  %v715 = vmax.f32 %v711, 0.0
  %v716 = vmax.f32 %v712, 0.0
  %v717 = vmin.f32 %v713, 1.0
  %v718 = vmin.f32 %v714, 1.0
  %v719 = vmin.f32 %v715, 1.0
  %v720 = vmin.f32 %v716, 1.0
  %v721 = vsel %vm62, %v717, %v709
  %v722 = vsel %vm62, %v718, %v710
  %v723 = vsel %vm62, %v719, %v711
  %v724 = vsel %vm62, %v720, %v712
  %v726 = vsel %vm66, %v721, 0
  %v729 = vsel %vm66, %v722, 0
  %v732 = vsel %vm66, %v723, 0
  %v735 = vsel %vm66, %v724, 0
  %737 = vmatpush.msra.mxu0 0.0
  %738 = vmatpush.msra.mxu0 0.0
  %739 = vmatpush.msra.mxu0 0.0
  %740 = vmatpush.msra.mxu0 0.0
  %741 = vmatpush.msra.mxu0 0.0
  %742 = vmatpush.msra.mxu0 0.0
  %743 = vmatpush.msra.mxu0 0.0
  %744 = vmatpush.msra.mxu0 0.0
  %745 = vmatpush.msra.mxu0 0.0
  %746 = vmatpush.msra.mxu0 0.0
  %747 = vmatpush.msra.mxu0 0.0
  %748 = vmatpush.msra.mxu0 0.0
  %749 = vmatpush.msra.mxu0 0.0
  %750 = vmatpush.msra.mxu0 0.0
  %751 = vmatpush.msra.mxu0 0.0
  %752 = vmatpush.msra.mxu0 %v81
  %753 = vmatmul.f32.gmra.mxu0 %v726
  %v754 = vpop.f32.mrf.mxu0
  %v755 = vadd.f32 %v64, %v754
  %756 = vmatmul.f32.gmra.mxu0 %v729
  %v757 = vpop.f32.mrf.mxu0
  %v758 = vadd.f32 %v64, %v757
  %759 = vmatmul.f32.gmra.mxu0 %v732
  %v760 = vpop.f32.mrf.mxu0
  %v761 = vadd.f32 %v64, %v760
  %762 = vmatmul.f32.gmra.mxu0 %v735
  %v763 = vpop.f32.mrf.mxu0
  %v764 = vadd.f32 %v64, %v763
  %765 = vdwg.mxu0
  %v766 = vmax.f32 %v755, 0.0
  %v767 = vmax.f32 %v758, 0.0
  %v768 = vmax.f32 %v761, 0.0
  %v769 = vmax.f32 %v764, 0.0
  %770 = vmatpush.msra.mxu0 0.0
  %771 = vmatpush.msra.mxu0 0.0
  %772 = vmatpush.msra.mxu0 0.0
  %773 = vmatpush.msra.mxu0 0.0
  %774 = vmatpush.msra.mxu0 0.0
  %775 = vmatpush.msra.mxu0 0.0
  %776 = vmatpush.msra.mxu0 0.0
  %777 = vmatpush.msra.mxu0 0.0
  %778 = vmatpush.msra.mxu0 0.0
  %779 = vmatpush.msra.mxu0 0.0
  %780 = vmatpush.msra.mxu0 0.0
  %781 = vmatpush.msra.mxu0 0.0
  %782 = vmatpush.msra.mxu0 %v769
  %783 = vmatpush.msra.mxu0 %v768
  %784 = vmatpush.msra.mxu0 %v767
  %785 = vmatpush.msra.mxu0 %v766
  %786 = vmatmul.f32.gmra.mxu0 %v118
  %v787 = vpop.f32.mrf.mxu0
  %v788 = vadd.f32 0.0, %v787
  %789 = vdwg.mxu0
  %v791 = vsel %vm116, %v788, 0
  %793 = vmatpush.msra.mxu0 0.0
  %794 = vmatpush.msra.mxu0 0.0
  %795 = vmatpush.msra.mxu0 0.0
  %796 = vmatpush.msra.mxu0 0.0
  %797 = vmatpush.msra.mxu0 0.0
  %798 = vmatpush.msra.mxu0 0.0
  %799 = vmatpush.msra.mxu0 0.0
  %800 = vmatpush.msra.mxu0 0.0
  %801 = vmatpush.msra.mxu0 0.0
  %802 = vmatpush.msra.mxu0 0.0
  %803 = vmatpush.msra.mxu0 0.0
  %804 = vmatpush.msra.mxu0 0.0
  %805 = vmatpush.msra.mxu0 %v50
  %806 = vmatpush.msra.mxu0 %v49
  %807 = vmatpush.msra.mxu0 %v48
  %808 = vmatpush.msra.mxu0 %v47
  %809 = vmatmul.f32.gmra.mxu0 %v791
  %v810 = vpop.f32.mrf.mxu0
  %v811 = vadd.f32 %v141, %v810
  %812 = vdwg.mxu0
  %v813 = vsub.f32 %v811, %v39
  %v814 = vmax.f32 %v813, -1.0
  %v815 = vmin.f32 %v814, 1.0
  %v817 = vsel %vm116, %v815, 0
  %819 = vmatpush.msra.mxu0 0.0
  %820 = vmatpush.msra.mxu0 0.0
  %821 = vmatpush.msra.mxu0 0.0
  %822 = vmatpush.msra.mxu0 0.0
  %823 = vmatpush.msra.mxu0 0.0
  %824 = vmatpush.msra.mxu0 0.0
  %825 = vmatpush.msra.mxu0 0.0
  %826 = vmatpush.msra.mxu0 0.0
  %827 = vmatpush.msra.mxu0 0.0
  %828 = vmatpush.msra.mxu0 0.0
  %829 = vmatpush.msra.mxu0 0.0
  %830 = vmatpush.msra.mxu0 0.0
  %831 = vmatpush.msra.mxu0 %v55
  %832 = vmatpush.msra.mxu0 %v54
  %833 = vmatpush.msra.mxu0 %v53
  %834 = vmatpush.msra.mxu0 %v52
  %835 = vmatmul.f32.gmra.mxu0 %v817
  %v836 = vpop.f32.mrf.mxu0
  %v837 = vadd.f32 0.0, %v836
  %838 = vdwg.mxu0
  %v840 = vsel %vm205, %v837, 0
  %842 = vmatpush.msra.mxu0 0.0
  %843 = vmatpush.msra.mxu0 0.0
  %844 = vmatpush.msra.mxu0 0.0
  %845 = vmatpush.msra.mxu0 0.0
  %846 = vmatpush.msra.mxu0 0.0
  %847 = vmatpush.msra.mxu0 0.0
  %848 = vmatpush.msra.mxu0 0.0
  %849 = vmatpush.msra.mxu0 0.0
  %850 = vmatpush.msra.mxu0 0.0
  %851 = vmatpush.msra.mxu0 0.0
  %852 = vmatpush.msra.mxu0 0.0
  %853 = vmatpush.msra.mxu0 0.0
  %854 = vmatpush.msra.mxu0 0.0
  %855 = vmatpush.msra.mxu0 0.0
  %856 = vmatpush.msra.mxu0 0.0
  %857 = vmatpush.msra.mxu0 %v840
  %858 = vmatmul.f32.gmra.mxu0 %v194
  %v859 = vpop.f32.mrf.mxu0
  %v860 = vadd.f32 0.0, %v859
  %861 = vmatmul.f32.gmra.mxu0 %v197
  %v862 = vpop.f32.mrf.mxu0
  %v863 = vadd.f32 0.0, %v862
  %864 = vmatmul.f32.gmra.mxu0 %v200
  %v865 = vpop.f32.mrf.mxu0
  %v866 = vadd.f32 0.0, %v865
  %867 = vmatmul.f32.gmra.mxu0 %v203
  %v868 = vpop.f32.mrf.mxu0
  %v869 = vadd.f32 0.0, %v868
  %870 = vdwg.mxu0
  %vm871 = vcmp.gt.f32.partialorder %v755, 0.0
  %vm872 = vcmp.gt.f32.partialorder %v758, 0.0
  %vm873 = vcmp.gt.f32.partialorder %v761, 0.0
  %vm874 = vcmp.gt.f32.partialorder %v764, 0.0
  %v875 = vsel %vm871, %v860, 0.0
  %v876 = vsel %vm872, %v863, 0.0
  %v877 = vsel %vm873, %v866, 0.0
  %v878 = vsel %vm874, %v869, 0.0
  %v880 = vsel %vm116, %v875, 0
  %v883 = vsel %vm116, %v876, 0
  %v886 = vsel %vm116, %v877, 0
  %v889 = vsel %vm116, %v878, 0
  %891 = vmatpush.msra.mxu0 0.0
  %892 = vmatpush.msra.mxu0 0.0
  %893 = vmatpush.msra.mxu0 0.0
  %894 = vmatpush.msra.mxu0 0.0
  %895 = vmatpush.msra.mxu0 0.0
  %896 = vmatpush.msra.mxu0 0.0
  %897 = vmatpush.msra.mxu0 0.0
  %898 = vmatpush.msra.mxu0 0.0
  %899 = vmatpush.msra.mxu0 0.0
  %900 = vmatpush.msra.mxu0 0.0
  %901 = vmatpush.msra.mxu0 0.0
  %902 = vmatpush.msra.mxu0 0.0
  %903 = vmatpush.msra.mxu0 %v59
  %904 = vmatpush.msra.mxu0 %v58
  %905 = vmatpush.msra.mxu0 %v57
  %906 = vmatpush.msra.mxu0 %v56
  %907 = vmatmul.f32.gmra.mxu0 %v880
  %v908 = vpop.f32.mrf.mxu0
  %v909 = vadd.f32 0.0, %v908
  %910 = vmatmul.f32.gmra.mxu0 %v883
  %v911 = vpop.f32.mrf.mxu0
  %v912 = vadd.f32 0.0, %v911
  %913 = vmatmul.f32.gmra.mxu0 %v886
  %v914 = vpop.f32.mrf.mxu0
  %v915 = vadd.f32 0.0, %v914
  %916 = vmatmul.f32.gmra.mxu0 %v889
  %v917 = vpop.f32.mrf.mxu0
  %v918 = vadd.f32 0.0, %v917
  %919 = vdwg.mxu0
  %v920 = vsub.f32 %v721, %v909
  %v921 = vsub.f32 %v722, %v912
  %v922 = vsub.f32 %v723, %v915
  %v923 = vsub.f32 %v724, %v918
  %v924 = vmax.f32 %v920, 0.0
  %v925 = vmax.f32 %v921, 0.0
  %v926 = vmax.f32 %v922, 0.0
  %v927 = vmax.f32 %v923, 0.0
  %v928 = vmin.f32 %v924, 1.0
  %v929 = vmin.f32 %v925, 1.0
  %v930 = vmin.f32 %v926, 1.0
  %v931 = vmin.f32 %v927, 1.0
  %v932 = vsel %vm62, %v928, %v920
  %v933 = vsel %vm62, %v929, %v921
  %v934 = vsel %vm62, %v930, %v922
  %v935 = vsel %vm62, %v931, %v923
  %v937 = vsel %vm66, %v932, 0
  %v940 = vsel %vm66, %v933, 0
  %v943 = vsel %vm66, %v934, 0
  %v946 = vsel %vm66, %v935, 0
  %948 = vmatpush.msra.mxu0 0.0
  %949 = vmatpush.msra.mxu0 0.0
  %950 = vmatpush.msra.mxu0 0.0
  %951 = vmatpush.msra.mxu0 0.0
  %952 = vmatpush.msra.mxu0 0.0
  %953 = vmatpush.msra.mxu0 0.0
  %954 = vmatpush.msra.mxu0 0.0
  %955 = vmatpush.msra.mxu0 0.0
  %956 = vmatpush.msra.mxu0 0.0
  %957 = vmatpush.msra.mxu0 0.0
  %958 = vmatpush.msra.mxu0 0.0
  %959 = vmatpush.msra.mxu0 0.0
  %960 = vmatpush.msra.mxu0 0.0
  %961 = vmatpush.msra.mxu0 0.0
  %962 = vmatpush.msra.mxu0 0.0
  %963 = vmatpush.msra.mxu0 %v81
  %964 = vmatmul.f32.gmra.mxu0 %v937
  %v965 = vpop.f32.mrf.mxu0
  %v966 = vadd.f32 %v64, %v965
  %967 = vmatmul.f32.gmra.mxu0 %v940
  %v968 = vpop.f32.mrf.mxu0
  %v969 = vadd.f32 %v64, %v968
  %970 = vmatmul.f32.gmra.mxu0 %v943
  %v971 = vpop.f32.mrf.mxu0
  %v972 = vadd.f32 %v64, %v971
  %973 = vmatmul.f32.gmra.mxu0 %v946
  %v974 = vpop.f32.mrf.mxu0
  %v975 = vadd.f32 %v64, %v974
  %976 = vdwg.mxu0
  %v977 = vmax.f32 %v966, 0.0
  %v978 = vmax.f32 %v969, 0.0
  %v979 = vmax.f32 %v972, 0.0
  %v980 = vmax.f32 %v975, 0.0
  %981 = vmatpush.msra.mxu0 0.0
  %982 = vmatpush.msra.mxu0 0.0
  %983 = vmatpush.msra.mxu0 0.0
  %984 = vmatpush.msra.mxu0 0.0
  %985 = vmatpush.msra.mxu0 0.0
  %986 = vmatpush.msra.mxu0 0.0
  %987 = vmatpush.msra.mxu0 0.0
  %988 = vmatpush.msra.mxu0 0.0
  %989 = vmatpush.msra.mxu0 0.0
  %990 = vmatpush.msra.mxu0 0.0
  %991 = vmatpush.msra.mxu0 0.0
  %992 = vmatpush.msra.mxu0 0.0
  %993 = vmatpush.msra.mxu0 %v980
  %994 = vmatpush.msra.mxu0 %v979
  %995 = vmatpush.msra.mxu0 %v978
  %996 = vmatpush.msra.mxu0 %v977
  %997 = vmatmul.f32.gmra.mxu0 %v118
  %v998 = vpop.f32.mrf.mxu0
  %v999 = vadd.f32 0.0, %v998
  %1000 = vdwg.mxu0
  %v1002 = vsel %vm116, %v999, 0
  %1004 = vmatpush.msra.mxu0 0.0
  %1005 = vmatpush.msra.mxu0 0.0
  %1006 = vmatpush.msra.mxu0 0.0
  %1007 = vmatpush.msra.mxu0 0.0
  %1008 = vmatpush.msra.mxu0 0.0
  %1009 = vmatpush.msra.mxu0 0.0
  %1010 = vmatpush.msra.mxu0 0.0
  %1011 = vmatpush.msra.mxu0 0.0
  %1012 = vmatpush.msra.mxu0 0.0
  %1013 = vmatpush.msra.mxu0 0.0
  %1014 = vmatpush.msra.mxu0 0.0
  %1015 = vmatpush.msra.mxu0 0.0
  %1016 = vmatpush.msra.mxu0 %v50
  %1017 = vmatpush.msra.mxu0 %v49
  %1018 = vmatpush.msra.mxu0 %v48
  %1019 = vmatpush.msra.mxu0 %v47
  %1020 = vmatmul.f32.gmra.mxu0 %v1002
  %v1021 = vpop.f32.mrf.mxu0
  %v1022 = vadd.f32 %v141, %v1021
  %1023 = vdwg.mxu0
  %v1024 = vsub.f32 %v1022, %v39
  %v1025 = vmax.f32 %v1024, -1.0
  %v1026 = vmin.f32 %v1025, 1.0
  %v1028 = vsel %vm116, %v1026, 0
  %1030 = vmatpush.msra.mxu0 0.0
  %1031 = vmatpush.msra.mxu0 0.0
  %1032 = vmatpush.msra.mxu0 0.0
  %1033 = vmatpush.msra.mxu0 0.0
  %1034 = vmatpush.msra.mxu0 0.0
  %1035 = vmatpush.msra.mxu0 0.0
  %1036 = vmatpush.msra.mxu0 0.0
  %1037 = vmatpush.msra.mxu0 0.0
  %1038 = vmatpush.msra.mxu0 0.0
  %1039 = vmatpush.msra.mxu0 0.0
  %1040 = vmatpush.msra.mxu0 0.0
  %1041 = vmatpush.msra.mxu0 0.0
  %1042 = vmatpush.msra.mxu0 %v55
  %1043 = vmatpush.msra.mxu0 %v54
  %1044 = vmatpush.msra.mxu0 %v53
  %1045 = vmatpush.msra.mxu0 %v52
  %1046 = vmatmul.f32.gmra.mxu0 %v1028
  %v1047 = vpop.f32.mrf.mxu0
  %v1048 = vadd.f32 0.0, %v1047
  %1049 = vdwg.mxu0
  %v1051 = vsel %vm205, %v1048, 0
  %1053 = vmatpush.msra.mxu0 0.0
  %1054 = vmatpush.msra.mxu0 0.0
  %1055 = vmatpush.msra.mxu0 0.0
  %1056 = vmatpush.msra.mxu0 0.0
  %1057 = vmatpush.msra.mxu0 0.0
  %1058 = vmatpush.msra.mxu0 0.0
  %1059 = vmatpush.msra.mxu0 0.0
  %1060 = vmatpush.msra.mxu0 0.0
  %1061 = vmatpush.msra.mxu0 0.0
  %1062 = vmatpush.msra.mxu0 0.0
  %1063 = vmatpush.msra.mxu0 0.0
  %1064 = vmatpush.msra.mxu0 0.0
  %1065 = vmatpush.msra.mxu0 0.0
  %1066 = vmatpush.msra.mxu0 0.0
  %1067 = vmatpush.msra.mxu0 0.0
  %1068 = vmatpush.msra.mxu0 %v1051
  %1069 = vmatmul.f32.gmra.mxu0 %v194
  %v1070 = vpop.f32.mrf.mxu0
  %v1071 = vadd.f32 0.0, %v1070
  %1072 = vmatmul.f32.gmra.mxu0 %v197
  %v1073 = vpop.f32.mrf.mxu0
  %v1074 = vadd.f32 0.0, %v1073
  %1075 = vmatmul.f32.gmra.mxu0 %v200
  %v1076 = vpop.f32.mrf.mxu0
  %v1077 = vadd.f32 0.0, %v1076
  %1078 = vmatmul.f32.gmra.mxu0 %v203
  %v1079 = vpop.f32.mrf.mxu0
  %v1080 = vadd.f32 0.0, %v1079
  %1081 = vdwg.mxu0
  %vm1082 = vcmp.gt.f32.partialorder %v966, 0.0
  %vm1083 = vcmp.gt.f32.partialorder %v969, 0.0
  %vm1084 = vcmp.gt.f32.partialorder %v972, 0.0
  %vm1085 = vcmp.gt.f32.partialorder %v975, 0.0
  %v1086 = vsel %vm1082, %v1071, 0.0
  %v1087 = vsel %vm1083, %v1074, 0.0
  %v1088 = vsel %vm1084, %v1077, 0.0
  %v1089 = vsel %vm1085, %v1080, 0.0
  %v1091 = vsel %vm116, %v1086, 0
  %v1094 = vsel %vm116, %v1087, 0
  %v1097 = vsel %vm116, %v1088, 0
  %v1100 = vsel %vm116, %v1089, 0
  %1102 = vmatpush.msra.mxu0 0.0
  %1103 = vmatpush.msra.mxu0 0.0
  %1104 = vmatpush.msra.mxu0 0.0
  %1105 = vmatpush.msra.mxu0 0.0
  %1106 = vmatpush.msra.mxu0 0.0
  %1107 = vmatpush.msra.mxu0 0.0
  %1108 = vmatpush.msra.mxu0 0.0
  %1109 = vmatpush.msra.mxu0 0.0
  %1110 = vmatpush.msra.mxu0 0.0
  %1111 = vmatpush.msra.mxu0 0.0
  %1112 = vmatpush.msra.mxu0 0.0
  %1113 = vmatpush.msra.mxu0 0.0
  %1114 = vmatpush.msra.mxu0 %v59
  %1115 = vmatpush.msra.mxu0 %v58
  %1116 = vmatpush.msra.mxu0 %v57
  %1117 = vmatpush.msra.mxu0 %v56
  %1118 = vmatmul.f32.gmra.mxu0 %v1091
  %v1119 = vpop.f32.mrf.mxu0
  %v1120 = vadd.f32 0.0, %v1119
  %1121 = vmatmul.f32.gmra.mxu0 %v1094
  %v1122 = vpop.f32.mrf.mxu0
  %v1123 = vadd.f32 0.0, %v1122
  %1124 = vmatmul.f32.gmra.mxu0 %v1097
  %v1125 = vpop.f32.mrf.mxu0
  %v1126 = vadd.f32 0.0, %v1125
  %1127 = vmatmul.f32.gmra.mxu0 %v1100
  %v1128 = vpop.f32.mrf.mxu0
  %v1129 = vadd.f32 0.0, %v1128
  %1130 = vdwg.mxu0
  %v1131 = vsub.f32 %v932, %v1120
  %v1132 = vsub.f32 %v933, %v1123
  %v1133 = vsub.f32 %v934, %v1126
  %v1134 = vsub.f32 %v935, %v1129
  %v1135 = vmax.f32 %v1131, 0.0
  %v1136 = vmax.f32 %v1132, 0.0
  %v1137 = vmax.f32 %v1133, 0.0
  %v1138 = vmax.f32 %v1134, 0.0
  %v1139 = vmin.f32 %v1135, 1.0
  %v1140 = vmin.f32 %v1136, 1.0
  %v1141 = vmin.f32 %v1137, 1.0
  %v1142 = vmin.f32 %v1138, 1.0
  %v1143 = vsel %vm62, %v1139, %v1131
  %v1144 = vsel %vm62, %v1140, %v1132
  %v1145 = vsel %vm62, %v1141, %v1133
  %v1146 = vsel %vm62, %v1142, %v1134
  %v1148 = vsel %vm66, %v1143, 0
  %v1151 = vsel %vm66, %v1144, 0
  %v1154 = vsel %vm66, %v1145, 0
  %v1157 = vsel %vm66, %v1146, 0
  %1159 = vmatpush.msra.mxu0 0.0
  %1160 = vmatpush.msra.mxu0 0.0
  %1161 = vmatpush.msra.mxu0 0.0
  %1162 = vmatpush.msra.mxu0 0.0
  %1163 = vmatpush.msra.mxu0 0.0
  %1164 = vmatpush.msra.mxu0 0.0
  %1165 = vmatpush.msra.mxu0 0.0
  %1166 = vmatpush.msra.mxu0 0.0
  %1167 = vmatpush.msra.mxu0 0.0
  %1168 = vmatpush.msra.mxu0 0.0
  %1169 = vmatpush.msra.mxu0 0.0
  %1170 = vmatpush.msra.mxu0 0.0
  %1171 = vmatpush.msra.mxu0 0.0
  %1172 = vmatpush.msra.mxu0 0.0
  %1173 = vmatpush.msra.mxu0 0.0
  %1174 = vmatpush.msra.mxu0 %v81
  %1175 = vmatmul.f32.gmra.mxu0 %v1148
  %v1176 = vpop.f32.mrf.mxu0
  %v1177 = vadd.f32 %v64, %v1176
  %1178 = vmatmul.f32.gmra.mxu0 %v1151
  %v1179 = vpop.f32.mrf.mxu0
  %v1180 = vadd.f32 %v64, %v1179
  %1181 = vmatmul.f32.gmra.mxu0 %v1154
  %v1182 = vpop.f32.mrf.mxu0
  %v1183 = vadd.f32 %v64, %v1182
  %1184 = vmatmul.f32.gmra.mxu0 %v1157
  %v1185 = vpop.f32.mrf.mxu0
  %v1186 = vadd.f32 %v64, %v1185
  %1187 = vdwg.mxu0
  %v1188 = vmax.f32 %v1177, 0.0
  %v1189 = vmax.f32 %v1180, 0.0
  %v1190 = vmax.f32 %v1183, 0.0
  %v1191 = vmax.f32 %v1186, 0.0
  %1192 = vmatpush.msra.mxu0 0.0
  %1193 = vmatpush.msra.mxu0 0.0
  %1194 = vmatpush.msra.mxu0 0.0
  %1195 = vmatpush.msra.mxu0 0.0
  %1196 = vmatpush.msra.mxu0 0.0
  %1197 = vmatpush.msra.mxu0 0.0
  %1198 = vmatpush.msra.mxu0 0.0
  %1199 = vmatpush.msra.mxu0 0.0
  %1200 = vmatpush.msra.mxu0 0.0
  %1201 = vmatpush.msra.mxu0 0.0
  %1202 = vmatpush.msra.mxu0 0.0
  %1203 = vmatpush.msra.mxu0 0.0
  %1204 = vmatpush.msra.mxu0 %v1191
  %1205 = vmatpush.msra.mxu0 %v1190
  %1206 = vmatpush.msra.mxu0 %v1189
  %1207 = vmatpush.msra.mxu0 %v1188
  %1208 = vmatmul.f32.gmra.mxu0 %v118
  %v1209 = vpop.f32.mrf.mxu0
  %v1210 = vadd.f32 0.0, %v1209
  %1211 = vdwg.mxu0
  %v1213 = vsel %vm116, %v1210, 0
  %1215 = vmatpush.msra.mxu0 0.0
  %1216 = vmatpush.msra.mxu0 0.0
  %1217 = vmatpush.msra.mxu0 0.0
  %1218 = vmatpush.msra.mxu0 0.0
  %1219 = vmatpush.msra.mxu0 0.0
  %1220 = vmatpush.msra.mxu0 0.0
  %1221 = vmatpush.msra.mxu0 0.0
  %1222 = vmatpush.msra.mxu0 0.0
  %1223 = vmatpush.msra.mxu0 0.0
  %1224 = vmatpush.msra.mxu0 0.0
  %1225 = vmatpush.msra.mxu0 0.0
  %1226 = vmatpush.msra.mxu0 0.0
  %1227 = vmatpush.msra.mxu0 %v50
  %1228 = vmatpush.msra.mxu0 %v49
  %1229 = vmatpush.msra.mxu0 %v48
  %1230 = vmatpush.msra.mxu0 %v47
  %1231 = vmatmul.f32.gmra.mxu0 %v1213
  %v1232 = vpop.f32.mrf.mxu0
  %v1233 = vadd.f32 %v141, %v1232
  %1234 = vdwg.mxu0
  %v1235 = vsub.f32 %v1233, %v39
  %v1236 = vmax.f32 %v1235, -1.0
  %v1237 = vmin.f32 %v1236, 1.0
  %v1239 = vsel %vm116, %v1237, 0
  %1241 = vmatpush.msra.mxu0 0.0
  %1242 = vmatpush.msra.mxu0 0.0
  %1243 = vmatpush.msra.mxu0 0.0
  %1244 = vmatpush.msra.mxu0 0.0
  %1245 = vmatpush.msra.mxu0 0.0
  %1246 = vmatpush.msra.mxu0 0.0
  %1247 = vmatpush.msra.mxu0 0.0
  %1248 = vmatpush.msra.mxu0 0.0
  %1249 = vmatpush.msra.mxu0 0.0
  %1250 = vmatpush.msra.mxu0 0.0
  %1251 = vmatpush.msra.mxu0 0.0
  %1252 = vmatpush.msra.mxu0 0.0
  %1253 = vmatpush.msra.mxu0 %v55
  %1254 = vmatpush.msra.mxu0 %v54
  %1255 = vmatpush.msra.mxu0 %v53
  %1256 = vmatpush.msra.mxu0 %v52
  %1257 = vmatmul.f32.gmra.mxu0 %v1239
  %v1258 = vpop.f32.mrf.mxu0
  %v1259 = vadd.f32 0.0, %v1258
  %1260 = vdwg.mxu0
  %v1262 = vsel %vm205, %v1259, 0
  %1264 = vmatpush.msra.mxu0 0.0
  %1265 = vmatpush.msra.mxu0 0.0
  %1266 = vmatpush.msra.mxu0 0.0
  %1267 = vmatpush.msra.mxu0 0.0
  %1268 = vmatpush.msra.mxu0 0.0
  %1269 = vmatpush.msra.mxu0 0.0
  %1270 = vmatpush.msra.mxu0 0.0
  %1271 = vmatpush.msra.mxu0 0.0
  %1272 = vmatpush.msra.mxu0 0.0
  %1273 = vmatpush.msra.mxu0 0.0
  %1274 = vmatpush.msra.mxu0 0.0
  %1275 = vmatpush.msra.mxu0 0.0
  %1276 = vmatpush.msra.mxu0 0.0
  %1277 = vmatpush.msra.mxu0 0.0
  %1278 = vmatpush.msra.mxu0 0.0
  %1279 = vmatpush.msra.mxu0 %v1262
  %1280 = vmatmul.f32.gmra.mxu0 %v194
  %v1281 = vpop.f32.mrf.mxu0
  %v1282 = vadd.f32 0.0, %v1281
  %1283 = vmatmul.f32.gmra.mxu0 %v197
  %v1284 = vpop.f32.mrf.mxu0
  %v1285 = vadd.f32 0.0, %v1284
  %1286 = vmatmul.f32.gmra.mxu0 %v200
  %v1287 = vpop.f32.mrf.mxu0
  %v1288 = vadd.f32 0.0, %v1287
  %1289 = vmatmul.f32.gmra.mxu0 %v203
  %v1290 = vpop.f32.mrf.mxu0
  %v1291 = vadd.f32 0.0, %v1290
  %1292 = vdwg.mxu0
  %vm1293 = vcmp.gt.f32.partialorder %v1177, 0.0
  %vm1294 = vcmp.gt.f32.partialorder %v1180, 0.0
  %vm1295 = vcmp.gt.f32.partialorder %v1183, 0.0
  %vm1296 = vcmp.gt.f32.partialorder %v1186, 0.0
  %v1297 = vsel %vm1293, %v1282, 0.0
  %v1298 = vsel %vm1294, %v1285, 0.0
  %v1299 = vsel %vm1295, %v1288, 0.0
  %v1300 = vsel %vm1296, %v1291, 0.0
  %v1302 = vsel %vm116, %v1297, 0
  %v1305 = vsel %vm116, %v1298, 0
  %v1308 = vsel %vm116, %v1299, 0
  %v1311 = vsel %vm116, %v1300, 0
  %1313 = vmatpush.msra.mxu0 0.0
  %1314 = vmatpush.msra.mxu0 0.0
  %1315 = vmatpush.msra.mxu0 0.0
  %1316 = vmatpush.msra.mxu0 0.0
  %1317 = vmatpush.msra.mxu0 0.0
  %1318 = vmatpush.msra.mxu0 0.0
  %1319 = vmatpush.msra.mxu0 0.0
  %1320 = vmatpush.msra.mxu0 0.0
  %1321 = vmatpush.msra.mxu0 0.0
  %1322 = vmatpush.msra.mxu0 0.0
  %1323 = vmatpush.msra.mxu0 0.0
  %1324 = vmatpush.msra.mxu0 0.0
  %1325 = vmatpush.msra.mxu0 %v59
  %1326 = vmatpush.msra.mxu0 %v58
  %1327 = vmatpush.msra.mxu0 %v57
  %1328 = vmatpush.msra.mxu0 %v56
  %1329 = vmatmul.f32.gmra.mxu0 %v1302
  %v1330 = vpop.f32.mrf.mxu0
  %v1331 = vadd.f32 0.0, %v1330
  %1332 = vmatmul.f32.gmra.mxu0 %v1305
  %v1333 = vpop.f32.mrf.mxu0
  %v1334 = vadd.f32 0.0, %v1333
  %1335 = vmatmul.f32.gmra.mxu0 %v1308
  %v1336 = vpop.f32.mrf.mxu0
  %v1337 = vadd.f32 0.0, %v1336
  %1338 = vmatmul.f32.gmra.mxu0 %v1311
  %v1339 = vpop.f32.mrf.mxu0
  %v1340 = vadd.f32 0.0, %v1339
  %1341 = vdwg.mxu0
  %v1342 = vsub.f32 %v1143, %v1331
  %v1343 = vsub.f32 %v1144, %v1334
  %v1344 = vsub.f32 %v1145, %v1337
  %v1345 = vsub.f32 %v1146, %v1340
  %v1346 = vmax.f32 %v1342, 0.0
  %v1347 = vmax.f32 %v1343, 0.0
  %v1348 = vmax.f32 %v1344, 0.0
  %v1349 = vmax.f32 %v1345, 0.0
  %v1350 = vmin.f32 %v1346, 1.0
  %v1351 = vmin.f32 %v1347, 1.0
  %v1352 = vmin.f32 %v1348, 1.0
  %v1353 = vmin.f32 %v1349, 1.0
  %v1354 = vsel %vm62, %v1350, %v1342
  %v1355 = vsel %vm62, %v1351, %v1343
  %v1356 = vsel %vm62, %v1352, %v1344
  %v1357 = vsel %vm62, %v1353, %v1345
  %v1359 = vsel %vm66, %v1354, 0
  %v1362 = vsel %vm66, %v1355, 0
  %v1365 = vsel %vm66, %v1356, 0
  %v1368 = vsel %vm66, %v1357, 0
  %1370 = vmatpush.msra.mxu0 0.0
  %1371 = vmatpush.msra.mxu0 0.0
  %1372 = vmatpush.msra.mxu0 0.0
  %1373 = vmatpush.msra.mxu0 0.0
  %1374 = vmatpush.msra.mxu0 0.0
  %1375 = vmatpush.msra.mxu0 0.0
  %1376 = vmatpush.msra.mxu0 0.0
  %1377 = vmatpush.msra.mxu0 0.0
  %1378 = vmatpush.msra.mxu0 0.0
  %1379 = vmatpush.msra.mxu0 0.0
  %1380 = vmatpush.msra.mxu0 0.0
  %1381 = vmatpush.msra.mxu0 0.0
  %1382 = vmatpush.msra.mxu0 0.0
  %1383 = vmatpush.msra.mxu0 0.0
  %1384 = vmatpush.msra.mxu0 0.0
  %1385 = vmatpush.msra.mxu0 %v81
  %1386 = vmatmul.f32.gmra.mxu0 %v1359
  %v1387 = vpop.f32.mrf.mxu0
  %v1388 = vadd.f32 %v64, %v1387
  %1389 = vmatmul.f32.gmra.mxu0 %v1362
  %v1390 = vpop.f32.mrf.mxu0
  %v1391 = vadd.f32 %v64, %v1390
  %1392 = vmatmul.f32.gmra.mxu0 %v1365
  %v1393 = vpop.f32.mrf.mxu0
  %v1394 = vadd.f32 %v64, %v1393
  %1395 = vmatmul.f32.gmra.mxu0 %v1368
  %v1396 = vpop.f32.mrf.mxu0
  %v1397 = vadd.f32 %v64, %v1396
  %1398 = vdwg.mxu0
  %v1399 = vmax.f32 %v1388, 0.0
  %v1400 = vmax.f32 %v1391, 0.0
  %v1401 = vmax.f32 %v1394, 0.0
  %v1402 = vmax.f32 %v1397, 0.0
  %1403 = vmatpush.msra.mxu0 0.0
  %1404 = vmatpush.msra.mxu0 0.0
  %1405 = vmatpush.msra.mxu0 0.0
  %1406 = vmatpush.msra.mxu0 0.0
  %1407 = vmatpush.msra.mxu0 0.0
  %1408 = vmatpush.msra.mxu0 0.0
  %1409 = vmatpush.msra.mxu0 0.0
  %1410 = vmatpush.msra.mxu0 0.0
  %1411 = vmatpush.msra.mxu0 0.0
  %1412 = vmatpush.msra.mxu0 0.0
  %1413 = vmatpush.msra.mxu0 0.0
  %1414 = vmatpush.msra.mxu0 0.0
  %1415 = vmatpush.msra.mxu0 %v1402
  %1416 = vmatpush.msra.mxu0 %v1401
  %1417 = vmatpush.msra.mxu0 %v1400
  %1418 = vmatpush.msra.mxu0 %v1399
  %1419 = vmatmul.f32.gmra.mxu0 %v118
  %v1420 = vpop.f32.mrf.mxu0
  %v1421 = vadd.f32 0.0, %v1420
  %1422 = vdwg.mxu0
  %v1424 = vsel %vm116, %v1421, 0
  %1426 = vmatpush.msra.mxu0 0.0
  %1427 = vmatpush.msra.mxu0 0.0
  %1428 = vmatpush.msra.mxu0 0.0
  %1429 = vmatpush.msra.mxu0 0.0
  %1430 = vmatpush.msra.mxu0 0.0
  %1431 = vmatpush.msra.mxu0 0.0
  %1432 = vmatpush.msra.mxu0 0.0
  %1433 = vmatpush.msra.mxu0 0.0
  %1434 = vmatpush.msra.mxu0 0.0
  %1435 = vmatpush.msra.mxu0 0.0
  %1436 = vmatpush.msra.mxu0 0.0
  %1437 = vmatpush.msra.mxu0 0.0
  %1438 = vmatpush.msra.mxu0 %v50
  %1439 = vmatpush.msra.mxu0 %v49
  %1440 = vmatpush.msra.mxu0 %v48
  %1441 = vmatpush.msra.mxu0 %v47
  %1442 = vmatmul.f32.gmra.mxu0 %v1424
  %v1443 = vpop.f32.mrf.mxu0
  %v1444 = vadd.f32 %v141, %v1443
  %1445 = vdwg.mxu0
  %v1446 = vsub.f32 %v1444, %v39
  %v1447 = vmax.f32 %v1446, -1.0
  %v1448 = vmin.f32 %v1447, 1.0
  %v1450 = vsel %vm116, %v1448, 0
  %1452 = vmatpush.msra.mxu0 0.0
  %1453 = vmatpush.msra.mxu0 0.0
  %1454 = vmatpush.msra.mxu0 0.0
  %1455 = vmatpush.msra.mxu0 0.0
  %1456 = vmatpush.msra.mxu0 0.0
  %1457 = vmatpush.msra.mxu0 0.0
  %1458 = vmatpush.msra.mxu0 0.0
  %1459 = vmatpush.msra.mxu0 0.0
  %1460 = vmatpush.msra.mxu0 0.0
  %1461 = vmatpush.msra.mxu0 0.0
  %1462 = vmatpush.msra.mxu0 0.0
  %1463 = vmatpush.msra.mxu0 0.0
  %1464 = vmatpush.msra.mxu0 %v55
  %1465 = vmatpush.msra.mxu0 %v54
  %1466 = vmatpush.msra.mxu0 %v53
  %1467 = vmatpush.msra.mxu0 %v52
  %1468 = vmatmul.f32.gmra.mxu0 %v1450
  %v1469 = vpop.f32.mrf.mxu0
  %v1470 = vadd.f32 0.0, %v1469
  %1471 = vdwg.mxu0
  %v1473 = vsel %vm205, %v1470, 0
  %1475 = vmatpush.msra.mxu0 0.0
  %1476 = vmatpush.msra.mxu0 0.0
  %1477 = vmatpush.msra.mxu0 0.0
  %1478 = vmatpush.msra.mxu0 0.0
  %1479 = vmatpush.msra.mxu0 0.0
  %1480 = vmatpush.msra.mxu0 0.0
  %1481 = vmatpush.msra.mxu0 0.0
  %1482 = vmatpush.msra.mxu0 0.0
  %1483 = vmatpush.msra.mxu0 0.0
  %1484 = vmatpush.msra.mxu0 0.0
  %1485 = vmatpush.msra.mxu0 0.0
  %1486 = vmatpush.msra.mxu0 0.0
  %1487 = vmatpush.msra.mxu0 0.0
  %1488 = vmatpush.msra.mxu0 0.0
  %1489 = vmatpush.msra.mxu0 0.0
  %1490 = vmatpush.msra.mxu0 %v1473
  %1491 = vmatmul.f32.gmra.mxu0 %v194
  %v1492 = vpop.f32.mrf.mxu0
  %v1493 = vadd.f32 0.0, %v1492
  %1494 = vmatmul.f32.gmra.mxu0 %v197
  %v1495 = vpop.f32.mrf.mxu0
  %v1496 = vadd.f32 0.0, %v1495
  %1497 = vmatmul.f32.gmra.mxu0 %v200
  %v1498 = vpop.f32.mrf.mxu0
  %v1499 = vadd.f32 0.0, %v1498
  %1500 = vmatmul.f32.gmra.mxu0 %v203
  %v1501 = vpop.f32.mrf.mxu0
  %v1502 = vadd.f32 0.0, %v1501
  %1503 = vdwg.mxu0
  %vm1504 = vcmp.gt.f32.partialorder %v1388, 0.0
  %vm1505 = vcmp.gt.f32.partialorder %v1391, 0.0
  %vm1506 = vcmp.gt.f32.partialorder %v1394, 0.0
  %vm1507 = vcmp.gt.f32.partialorder %v1397, 0.0
  %v1508 = vsel %vm1504, %v1493, 0.0
  %v1509 = vsel %vm1505, %v1496, 0.0
  %v1510 = vsel %vm1506, %v1499, 0.0
  %v1511 = vsel %vm1507, %v1502, 0.0
  %v1513 = vsel %vm116, %v1508, 0
  %v1516 = vsel %vm116, %v1509, 0
  %v1519 = vsel %vm116, %v1510, 0
  %v1522 = vsel %vm116, %v1511, 0
  %1524 = vmatpush.msra.mxu0 0.0
  %1525 = vmatpush.msra.mxu0 0.0
  %1526 = vmatpush.msra.mxu0 0.0
  %1527 = vmatpush.msra.mxu0 0.0
  %1528 = vmatpush.msra.mxu0 0.0
  %1529 = vmatpush.msra.mxu0 0.0
  %1530 = vmatpush.msra.mxu0 0.0
  %1531 = vmatpush.msra.mxu0 0.0
  %1532 = vmatpush.msra.mxu0 0.0
  %1533 = vmatpush.msra.mxu0 0.0
  %1534 = vmatpush.msra.mxu0 0.0
  %1535 = vmatpush.msra.mxu0 0.0
  %1536 = vmatpush.msra.mxu0 %v59
  %1537 = vmatpush.msra.mxu0 %v58
  %1538 = vmatpush.msra.mxu0 %v57
  %1539 = vmatpush.msra.mxu0 %v56
  %1540 = vmatmul.f32.gmra.mxu0 %v1513
  %v1541 = vpop.f32.mrf.mxu0
  %v1542 = vadd.f32 0.0, %v1541
  %1543 = vmatmul.f32.gmra.mxu0 %v1516
  %v1544 = vpop.f32.mrf.mxu0
  %v1545 = vadd.f32 0.0, %v1544
  %1546 = vmatmul.f32.gmra.mxu0 %v1519
  %v1547 = vpop.f32.mrf.mxu0
  %v1548 = vadd.f32 0.0, %v1547
  %1549 = vmatmul.f32.gmra.mxu0 %v1522
  %v1550 = vpop.f32.mrf.mxu0
  %v1551 = vadd.f32 0.0, %v1550
  %1552 = vdwg.mxu0
  %v1553 = vsub.f32 %v1354, %v1542
  %v1554 = vsub.f32 %v1355, %v1545
  %v1555 = vsub.f32 %v1356, %v1548
  %v1556 = vsub.f32 %v1357, %v1551
  %v1557 = vmax.f32 %v1553, 0.0
  %v1558 = vmax.f32 %v1554, 0.0
  %v1559 = vmax.f32 %v1555, 0.0
  %v1560 = vmax.f32 %v1556, 0.0
  %v1561 = vmin.f32 %v1557, 1.0
  %v1562 = vmin.f32 %v1558, 1.0
  %v1563 = vmin.f32 %v1559, 1.0
  %v1564 = vmin.f32 %v1560, 1.0
  %v1565 = vsel %vm62, %v1561, %v1553
  %v1566 = vsel %vm62, %v1562, %v1554
  %v1567 = vsel %vm62, %v1563, %v1555
  %v1568 = vsel %vm62, %v1564, %v1556
  %v1570 = vsel %vm66, %v1565, 0
  %v1573 = vsel %vm66, %v1566, 0
  %v1576 = vsel %vm66, %v1567, 0
  %v1579 = vsel %vm66, %v1568, 0
  %1581 = vmatpush.msra.mxu0 0.0
  %1582 = vmatpush.msra.mxu0 0.0
  %1583 = vmatpush.msra.mxu0 0.0
  %1584 = vmatpush.msra.mxu0 0.0
  %1585 = vmatpush.msra.mxu0 0.0
  %1586 = vmatpush.msra.mxu0 0.0
  %1587 = vmatpush.msra.mxu0 0.0
  %1588 = vmatpush.msra.mxu0 0.0
  %1589 = vmatpush.msra.mxu0 0.0
  %1590 = vmatpush.msra.mxu0 0.0
  %1591 = vmatpush.msra.mxu0 0.0
  %1592 = vmatpush.msra.mxu0 0.0
  %1593 = vmatpush.msra.mxu0 0.0
  %1594 = vmatpush.msra.mxu0 0.0
  %1595 = vmatpush.msra.mxu0 0.0
  %1596 = vmatpush.msra.mxu0 %v81
  %1597 = vmatmul.f32.gmra.mxu0 %v1570
  %v1598 = vpop.f32.mrf.mxu0
  %v1599 = vadd.f32 %v64, %v1598
  %1600 = vmatmul.f32.gmra.mxu0 %v1573
  %v1601 = vpop.f32.mrf.mxu0
  %v1602 = vadd.f32 %v64, %v1601
  %1603 = vmatmul.f32.gmra.mxu0 %v1576
  %v1604 = vpop.f32.mrf.mxu0
  %v1605 = vadd.f32 %v64, %v1604
  %1606 = vmatmul.f32.gmra.mxu0 %v1579
  %v1607 = vpop.f32.mrf.mxu0
  %v1608 = vadd.f32 %v64, %v1607
  %1609 = vdwg.mxu0
  %v1610 = vmax.f32 %v1599, 0.0
  %v1611 = vmax.f32 %v1602, 0.0
  %v1612 = vmax.f32 %v1605, 0.0
  %v1613 = vmax.f32 %v1608, 0.0
  %1614 = vmatpush.msra.mxu0 0.0
  %1615 = vmatpush.msra.mxu0 0.0
  %1616 = vmatpush.msra.mxu0 0.0
  %1617 = vmatpush.msra.mxu0 0.0
  %1618 = vmatpush.msra.mxu0 0.0
  %1619 = vmatpush.msra.mxu0 0.0
  %1620 = vmatpush.msra.mxu0 0.0
  %1621 = vmatpush.msra.mxu0 0.0
  %1622 = vmatpush.msra.mxu0 0.0
  %1623 = vmatpush.msra.mxu0 0.0
  %1624 = vmatpush.msra.mxu0 0.0
  %1625 = vmatpush.msra.mxu0 0.0
  %1626 = vmatpush.msra.mxu0 %v1613
  %1627 = vmatpush.msra.mxu0 %v1612
  %1628 = vmatpush.msra.mxu0 %v1611
  %1629 = vmatpush.msra.mxu0 %v1610
  %1630 = vmatmul.f32.gmra.mxu0 %v118
  %v1631 = vpop.f32.mrf.mxu0
  %v1632 = vadd.f32 0.0, %v1631
  %1633 = vdwg.mxu0
  %v1635 = vsel %vm116, %v1632, 0
  %1637 = vmatpush.msra.mxu0 0.0
  %1638 = vmatpush.msra.mxu0 0.0
  %1639 = vmatpush.msra.mxu0 0.0
  %1640 = vmatpush.msra.mxu0 0.0
  %1641 = vmatpush.msra.mxu0 0.0
  %1642 = vmatpush.msra.mxu0 0.0
  %1643 = vmatpush.msra.mxu0 0.0
  %1644 = vmatpush.msra.mxu0 0.0
  %1645 = vmatpush.msra.mxu0 0.0
  %1646 = vmatpush.msra.mxu0 0.0
  %1647 = vmatpush.msra.mxu0 0.0
  %1648 = vmatpush.msra.mxu0 0.0
  %1649 = vmatpush.msra.mxu0 %v50
  %1650 = vmatpush.msra.mxu0 %v49
  %1651 = vmatpush.msra.mxu0 %v48
  %1652 = vmatpush.msra.mxu0 %v47
  %1653 = vmatmul.f32.gmra.mxu0 %v1635
  %v1654 = vpop.f32.mrf.mxu0
  %v1655 = vadd.f32 %v141, %v1654
  %1656 = vdwg.mxu0
  %v1657 = vsub.f32 %v1655, %v39
  %v1658 = vmax.f32 %v1657, -1.0
  %v1659 = vmin.f32 %v1658, 1.0
  %v1661 = vsel %vm116, %v1659, 0
  %1663 = vmatpush.msra.mxu0 0.0
  %1664 = vmatpush.msra.mxu0 0.0
  %1665 = vmatpush.msra.mxu0 0.0
  %1666 = vmatpush.msra.mxu0 0.0
  %1667 = vmatpush.msra.mxu0 0.0
  %1668 = vmatpush.msra.mxu0 0.0
  %1669 = vmatpush.msra.mxu0 0.0
  %1670 = vmatpush.msra.mxu0 0.0
  %1671 = vmatpush.msra.mxu0 0.0
  %1672 = vmatpush.msra.mxu0 0.0
  %1673 = vmatpush.msra.mxu0 0.0
  %1674 = vmatpush.msra.mxu0 0.0
  %1675 = vmatpush.msra.mxu0 %v55
  %1676 = vmatpush.msra.mxu0 %v54
  %1677 = vmatpush.msra.mxu0 %v53
  %1678 = vmatpush.msra.mxu0 %v52
  %1679 = vmatmul.f32.gmra.mxu0 %v1661
  %v1680 = vpop.f32.mrf.mxu0
  %v1681 = vadd.f32 0.0, %v1680
  %1682 = vdwg.mxu0
  %v1684 = vsel %vm205, %v1681, 0
  %1686 = vmatpush.msra.mxu0 0.0
  %1687 = vmatpush.msra.mxu0 0.0
  %1688 = vmatpush.msra.mxu0 0.0
  %1689 = vmatpush.msra.mxu0 0.0
  %1690 = vmatpush.msra.mxu0 0.0
  %1691 = vmatpush.msra.mxu0 0.0
  %1692 = vmatpush.msra.mxu0 0.0
  %1693 = vmatpush.msra.mxu0 0.0
  %1694 = vmatpush.msra.mxu0 0.0
  %1695 = vmatpush.msra.mxu0 0.0
  %1696 = vmatpush.msra.mxu0 0.0
  %1697 = vmatpush.msra.mxu0 0.0
  %1698 = vmatpush.msra.mxu0 0.0
  %1699 = vmatpush.msra.mxu0 0.0
  %1700 = vmatpush.msra.mxu0 0.0
  %1701 = vmatpush.msra.mxu0 %v1684
  %1702 = vmatmul.f32.gmra.mxu0 %v194
  %v1703 = vpop.f32.mrf.mxu0
  %v1704 = vadd.f32 0.0, %v1703
  %1705 = vmatmul.f32.gmra.mxu0 %v197
  %v1706 = vpop.f32.mrf.mxu0
  %v1707 = vadd.f32 0.0, %v1706
  %1708 = vmatmul.f32.gmra.mxu0 %v200
  %v1709 = vpop.f32.mrf.mxu0
  %v1710 = vadd.f32 0.0, %v1709
  %1711 = vmatmul.f32.gmra.mxu0 %v203
  %v1712 = vpop.f32.mrf.mxu0
  %v1713 = vadd.f32 0.0, %v1712
  %1714 = vdwg.mxu0
  %vm1715 = vcmp.gt.f32.partialorder %v1599, 0.0
  %vm1716 = vcmp.gt.f32.partialorder %v1602, 0.0
  %vm1717 = vcmp.gt.f32.partialorder %v1605, 0.0
  %vm1718 = vcmp.gt.f32.partialorder %v1608, 0.0
  %v1719 = vsel %vm1715, %v1704, 0.0
  %v1720 = vsel %vm1716, %v1707, 0.0
  %v1721 = vsel %vm1717, %v1710, 0.0
  %v1722 = vsel %vm1718, %v1713, 0.0
  %v1724 = vsel %vm116, %v1719, 0
  %v1727 = vsel %vm116, %v1720, 0
  %v1730 = vsel %vm116, %v1721, 0
  %v1733 = vsel %vm116, %v1722, 0
  %1735 = vmatpush.msra.mxu0 0.0
  %1736 = vmatpush.msra.mxu0 0.0
  %1737 = vmatpush.msra.mxu0 0.0
  %1738 = vmatpush.msra.mxu0 0.0
  %1739 = vmatpush.msra.mxu0 0.0
  %1740 = vmatpush.msra.mxu0 0.0
  %1741 = vmatpush.msra.mxu0 0.0
  %1742 = vmatpush.msra.mxu0 0.0
  %1743 = vmatpush.msra.mxu0 0.0
  %1744 = vmatpush.msra.mxu0 0.0
  %1745 = vmatpush.msra.mxu0 0.0
  %1746 = vmatpush.msra.mxu0 0.0
  %1747 = vmatpush.msra.mxu0 %v59
  %1748 = vmatpush.msra.mxu0 %v58
  %1749 = vmatpush.msra.mxu0 %v57
  %1750 = vmatpush.msra.mxu0 %v56
  %1751 = vmatmul.f32.gmra.mxu0 %v1724
  %v1752 = vpop.f32.mrf.mxu0
  %v1753 = vadd.f32 0.0, %v1752
  %1754 = vmatmul.f32.gmra.mxu0 %v1727
  %v1755 = vpop.f32.mrf.mxu0
  %v1756 = vadd.f32 0.0, %v1755
  %1757 = vmatmul.f32.gmra.mxu0 %v1730
  %v1758 = vpop.f32.mrf.mxu0
  %v1759 = vadd.f32 0.0, %v1758
  %1760 = vmatmul.f32.gmra.mxu0 %v1733
  %v1761 = vpop.f32.mrf.mxu0
  %v1762 = vadd.f32 0.0, %v1761
  %1763 = vdwg.mxu0
  %v1764 = vsub.f32 %v1565, %v1753
  %v1765 = vsub.f32 %v1566, %v1756
  %v1766 = vsub.f32 %v1567, %v1759
  %v1767 = vsub.f32 %v1568, %v1762
  %v1768 = vmax.f32 %v1764, 0.0
  %v1769 = vmax.f32 %v1765, 0.0
  %v1770 = vmax.f32 %v1766, 0.0
  %v1771 = vmax.f32 %v1767, 0.0
  %v1772 = vmin.f32 %v1768, 1.0
  %v1773 = vmin.f32 %v1769, 1.0
  %v1774 = vmin.f32 %v1770, 1.0
  %v1775 = vmin.f32 %v1771, 1.0
  %v1776 = vsel %vm62, %v1772, %v1764
  %v1777 = vsel %vm62, %v1773, %v1765
  %v1778 = vsel %vm62, %v1774, %v1766
  %v1779 = vsel %vm62, %v1775, %v1767
  %v1781 = vsel %vm66, %v1776, 0
  %v1784 = vsel %vm66, %v1777, 0
  %v1787 = vsel %vm66, %v1778, 0
  %v1790 = vsel %vm66, %v1779, 0
  %1792 = vmatpush.msra.mxu0 0.0
  %1793 = vmatpush.msra.mxu0 0.0
  %1794 = vmatpush.msra.mxu0 0.0
  %1795 = vmatpush.msra.mxu0 0.0
  %1796 = vmatpush.msra.mxu0 0.0
  %1797 = vmatpush.msra.mxu0 0.0
  %1798 = vmatpush.msra.mxu0 0.0
  %1799 = vmatpush.msra.mxu0 0.0
  %1800 = vmatpush.msra.mxu0 0.0
  %1801 = vmatpush.msra.mxu0 0.0
  %1802 = vmatpush.msra.mxu0 0.0
  %1803 = vmatpush.msra.mxu0 0.0
  %1804 = vmatpush.msra.mxu0 0.0
  %1805 = vmatpush.msra.mxu0 0.0
  %1806 = vmatpush.msra.mxu0 0.0
  %1807 = vmatpush.msra.mxu0 %v81
  %1808 = vmatmul.f32.gmra.mxu0 %v1781
  %v1809 = vpop.f32.mrf.mxu0
  %v1810 = vadd.f32 %v64, %v1809
  %1811 = vmatmul.f32.gmra.mxu0 %v1784
  %v1812 = vpop.f32.mrf.mxu0
  %v1813 = vadd.f32 %v64, %v1812
  %1814 = vmatmul.f32.gmra.mxu0 %v1787
  %v1815 = vpop.f32.mrf.mxu0
  %v1816 = vadd.f32 %v64, %v1815
  %1817 = vmatmul.f32.gmra.mxu0 %v1790
  %v1818 = vpop.f32.mrf.mxu0
  %v1819 = vadd.f32 %v64, %v1818
  %1820 = vdwg.mxu0
  %v1821 = vmax.f32 %v1810, 0.0
  %v1822 = vmax.f32 %v1813, 0.0
  %v1823 = vmax.f32 %v1816, 0.0
  %v1824 = vmax.f32 %v1819, 0.0
  %1825 = vmatpush.msra.mxu0 0.0
  %1826 = vmatpush.msra.mxu0 0.0
  %1827 = vmatpush.msra.mxu0 0.0
  %1828 = vmatpush.msra.mxu0 0.0
  %1829 = vmatpush.msra.mxu0 0.0
  %1830 = vmatpush.msra.mxu0 0.0
  %1831 = vmatpush.msra.mxu0 0.0
  %1832 = vmatpush.msra.mxu0 0.0
  %1833 = vmatpush.msra.mxu0 0.0
  %1834 = vmatpush.msra.mxu0 0.0
  %1835 = vmatpush.msra.mxu0 0.0
  %1836 = vmatpush.msra.mxu0 0.0
  %1837 = vmatpush.msra.mxu0 %v1824
  %1838 = vmatpush.msra.mxu0 %v1823
  %1839 = vmatpush.msra.mxu0 %v1822
  %1840 = vmatpush.msra.mxu0 %v1821
  %1841 = vmatmul.f32.gmra.mxu0 %v118
  %v1842 = vpop.f32.mrf.mxu0
  %v1843 = vadd.f32 0.0, %v1842
  %1844 = vdwg.mxu0
  %v1846 = vsel %vm116, %v1843, 0
  %1848 = vmatpush.msra.mxu0 0.0
  %1849 = vmatpush.msra.mxu0 0.0
  %1850 = vmatpush.msra.mxu0 0.0
  %1851 = vmatpush.msra.mxu0 0.0
  %1852 = vmatpush.msra.mxu0 0.0
  %1853 = vmatpush.msra.mxu0 0.0
  %1854 = vmatpush.msra.mxu0 0.0
  %1855 = vmatpush.msra.mxu0 0.0
  %1856 = vmatpush.msra.mxu0 0.0
  %1857 = vmatpush.msra.mxu0 0.0
  %1858 = vmatpush.msra.mxu0 0.0
  %1859 = vmatpush.msra.mxu0 0.0
  %1860 = vmatpush.msra.mxu0 %v50
  %1861 = vmatpush.msra.mxu0 %v49
  %1862 = vmatpush.msra.mxu0 %v48
  %1863 = vmatpush.msra.mxu0 %v47
  %1864 = vmatmul.f32.gmra.mxu0 %v1846
  %v1865 = vpop.f32.mrf.mxu0
  %v1866 = vadd.f32 %v141, %v1865
  %1867 = vdwg.mxu0
  %v1868 = vsub.f32 %v1866, %v39
  %v1869 = vmax.f32 %v1868, -1.0
  %v1870 = vmin.f32 %v1869, 1.0
  %v1872 = vsel %vm116, %v1870, 0
  %1874 = vmatpush.msra.mxu0 0.0
  %1875 = vmatpush.msra.mxu0 0.0
  %1876 = vmatpush.msra.mxu0 0.0
  %1877 = vmatpush.msra.mxu0 0.0
  %1878 = vmatpush.msra.mxu0 0.0
  %1879 = vmatpush.msra.mxu0 0.0
  %1880 = vmatpush.msra.mxu0 0.0
  %1881 = vmatpush.msra.mxu0 0.0
  %1882 = vmatpush.msra.mxu0 0.0
  %1883 = vmatpush.msra.mxu0 0.0
  %1884 = vmatpush.msra.mxu0 0.0
  %1885 = vmatpush.msra.mxu0 0.0
  %1886 = vmatpush.msra.mxu0 %v55
  %1887 = vmatpush.msra.mxu0 %v54
  %1888 = vmatpush.msra.mxu0 %v53
  %1889 = vmatpush.msra.mxu0 %v52
  %1890 = vmatmul.f32.gmra.mxu0 %v1872
  %v1891 = vpop.f32.mrf.mxu0
  %v1892 = vadd.f32 0.0, %v1891
  %1893 = vdwg.mxu0
  %v1895 = vsel %vm205, %v1892, 0
  %1897 = vmatpush.msra.mxu0 0.0
  %1898 = vmatpush.msra.mxu0 0.0
  %1899 = vmatpush.msra.mxu0 0.0
  %1900 = vmatpush.msra.mxu0 0.0
  %1901 = vmatpush.msra.mxu0 0.0
  %1902 = vmatpush.msra.mxu0 0.0
  %1903 = vmatpush.msra.mxu0 0.0
  %1904 = vmatpush.msra.mxu0 0.0
  %1905 = vmatpush.msra.mxu0 0.0
  %1906 = vmatpush.msra.mxu0 0.0
  %1907 = vmatpush.msra.mxu0 0.0
  %1908 = vmatpush.msra.mxu0 0.0
  %1909 = vmatpush.msra.mxu0 0.0
  %1910 = vmatpush.msra.mxu0 0.0
  %1911 = vmatpush.msra.mxu0 0.0
  %1912 = vmatpush.msra.mxu0 %v1895
  %1913 = vmatmul.f32.gmra.mxu0 %v194
  %v1914 = vpop.f32.mrf.mxu0
  %v1915 = vadd.f32 0.0, %v1914
  %1916 = vmatmul.f32.gmra.mxu0 %v197
  %v1917 = vpop.f32.mrf.mxu0
  %v1918 = vadd.f32 0.0, %v1917
  %1919 = vmatmul.f32.gmra.mxu0 %v200
  %v1920 = vpop.f32.mrf.mxu0
  %v1921 = vadd.f32 0.0, %v1920
  %1922 = vmatmul.f32.gmra.mxu0 %v203
  %v1923 = vpop.f32.mrf.mxu0
  %v1924 = vadd.f32 0.0, %v1923
  %1925 = vdwg.mxu0
  %vm1926 = vcmp.gt.f32.partialorder %v1810, 0.0
  %vm1927 = vcmp.gt.f32.partialorder %v1813, 0.0
  %vm1928 = vcmp.gt.f32.partialorder %v1816, 0.0
  %vm1929 = vcmp.gt.f32.partialorder %v1819, 0.0
  %v1930 = vsel %vm1926, %v1915, 0.0
  %v1931 = vsel %vm1927, %v1918, 0.0
  %v1932 = vsel %vm1928, %v1921, 0.0
  %v1933 = vsel %vm1929, %v1924, 0.0
  %v1935 = vsel %vm116, %v1930, 0
  %v1938 = vsel %vm116, %v1931, 0
  %v1941 = vsel %vm116, %v1932, 0
  %v1944 = vsel %vm116, %v1933, 0
  %1946 = vmatpush.msra.mxu0 0.0
  %1947 = vmatpush.msra.mxu0 0.0
  %1948 = vmatpush.msra.mxu0 0.0
  %1949 = vmatpush.msra.mxu0 0.0
  %1950 = vmatpush.msra.mxu0 0.0
  %1951 = vmatpush.msra.mxu0 0.0
  %1952 = vmatpush.msra.mxu0 0.0
  %1953 = vmatpush.msra.mxu0 0.0
  %1954 = vmatpush.msra.mxu0 0.0
  %1955 = vmatpush.msra.mxu0 0.0
  %1956 = vmatpush.msra.mxu0 0.0
  %1957 = vmatpush.msra.mxu0 0.0
  %1958 = vmatpush.msra.mxu0 %v59
  %1959 = vmatpush.msra.mxu0 %v58
  %1960 = vmatpush.msra.mxu0 %v57
  %1961 = vmatpush.msra.mxu0 %v56
  %1962 = vmatmul.f32.gmra.mxu0 %v1935
  %v1963 = vpop.f32.mrf.mxu0
  %v1964 = vadd.f32 0.0, %v1963
  %1965 = vmatmul.f32.gmra.mxu0 %v1938
  %v1966 = vpop.f32.mrf.mxu0
  %v1967 = vadd.f32 0.0, %v1966
  %1968 = vmatmul.f32.gmra.mxu0 %v1941
  %v1969 = vpop.f32.mrf.mxu0
  %v1970 = vadd.f32 0.0, %v1969
  %1971 = vmatmul.f32.gmra.mxu0 %v1944
  %v1972 = vpop.f32.mrf.mxu0
  %v1973 = vadd.f32 0.0, %v1972
  %1974 = vdwg.mxu0
  %v1975 = vsub.f32 %v1776, %v1964
  %v1976 = vsub.f32 %v1777, %v1967
  %v1977 = vsub.f32 %v1778, %v1970
  %v1978 = vsub.f32 %v1779, %v1973
  %v1979 = vmax.f32 %v1975, 0.0
  %v1980 = vmax.f32 %v1976, 0.0
  %v1981 = vmax.f32 %v1977, 0.0
  %v1982 = vmax.f32 %v1978, 0.0
  %v1983 = vmin.f32 %v1979, 1.0
  %v1984 = vmin.f32 %v1980, 1.0
  %v1985 = vmin.f32 %v1981, 1.0
  %v1986 = vmin.f32 %v1982, 1.0
  %v1987 = vsel %vm62, %v1983, %v1975
  %v1988 = vsel %vm62, %v1984, %v1976
  %v1989 = vsel %vm62, %v1985, %v1977
  %v1990 = vsel %vm62, %v1986, %v1978
  %v1992 = vsel %vm66, %v1987, 0
  %v1995 = vsel %vm66, %v1988, 0
  %v1998 = vsel %vm66, %v1989, 0
  %v2001 = vsel %vm66, %v1990, 0
  %2003 = vmatpush.msra.mxu0 0.0
  %2004 = vmatpush.msra.mxu0 0.0
  %2005 = vmatpush.msra.mxu0 0.0
  %2006 = vmatpush.msra.mxu0 0.0
  %2007 = vmatpush.msra.mxu0 0.0
  %2008 = vmatpush.msra.mxu0 0.0
  %2009 = vmatpush.msra.mxu0 0.0
  %2010 = vmatpush.msra.mxu0 0.0
  %2011 = vmatpush.msra.mxu0 0.0
  %2012 = vmatpush.msra.mxu0 0.0
  %2013 = vmatpush.msra.mxu0 0.0
  %2014 = vmatpush.msra.mxu0 0.0
  %2015 = vmatpush.msra.mxu0 0.0
  %2016 = vmatpush.msra.mxu0 0.0
  %2017 = vmatpush.msra.mxu0 0.0
  %2018 = vmatpush.msra.mxu0 %v81
  %2019 = vmatmul.f32.gmra.mxu0 %v1992
  %v2020 = vpop.f32.mrf.mxu0
  %v2021 = vadd.f32 %v64, %v2020
  %2022 = vmatmul.f32.gmra.mxu0 %v1995
  %v2023 = vpop.f32.mrf.mxu0
  %v2024 = vadd.f32 %v64, %v2023
  %2025 = vmatmul.f32.gmra.mxu0 %v1998
  %v2026 = vpop.f32.mrf.mxu0
  %v2027 = vadd.f32 %v64, %v2026
  %2028 = vmatmul.f32.gmra.mxu0 %v2001
  %v2029 = vpop.f32.mrf.mxu0
  %v2030 = vadd.f32 %v64, %v2029
  %2031 = vdwg.mxu0
  %v2032 = vmax.f32 %v2021, 0.0
  %v2033 = vmax.f32 %v2024, 0.0
  %v2034 = vmax.f32 %v2027, 0.0
  %v2035 = vmax.f32 %v2030, 0.0
  %2036 = vmatpush.msra.mxu0 0.0
  %2037 = vmatpush.msra.mxu0 0.0
  %2038 = vmatpush.msra.mxu0 0.0
  %2039 = vmatpush.msra.mxu0 0.0
  %2040 = vmatpush.msra.mxu0 0.0
  %2041 = vmatpush.msra.mxu0 0.0
  %2042 = vmatpush.msra.mxu0 0.0
  %2043 = vmatpush.msra.mxu0 0.0
  %2044 = vmatpush.msra.mxu0 0.0
  %2045 = vmatpush.msra.mxu0 0.0
  %2046 = vmatpush.msra.mxu0 0.0
  %2047 = vmatpush.msra.mxu0 0.0
  %2048 = vmatpush.msra.mxu0 %v2035
  %2049 = vmatpush.msra.mxu0 %v2034
  %2050 = vmatpush.msra.mxu0 %v2033
  %2051 = vmatpush.msra.mxu0 %v2032
  %2052 = vmatmul.f32.gmra.mxu0 %v118
  %v2053 = vpop.f32.mrf.mxu0
  %v2054 = vadd.f32 0.0, %v2053
  %2055 = vdwg.mxu0
  %v2057 = vsel %vm116, %v2054, 0
  %2059 = vmatpush.msra.mxu0 0.0
  %2060 = vmatpush.msra.mxu0 0.0
  %2061 = vmatpush.msra.mxu0 0.0
  %2062 = vmatpush.msra.mxu0 0.0
  %2063 = vmatpush.msra.mxu0 0.0
  %2064 = vmatpush.msra.mxu0 0.0
  %2065 = vmatpush.msra.mxu0 0.0
  %2066 = vmatpush.msra.mxu0 0.0
  %2067 = vmatpush.msra.mxu0 0.0
  %2068 = vmatpush.msra.mxu0 0.0
  %2069 = vmatpush.msra.mxu0 0.0
  %2070 = vmatpush.msra.mxu0 0.0
  %2071 = vmatpush.msra.mxu0 %v50
  %2072 = vmatpush.msra.mxu0 %v49
  %2073 = vmatpush.msra.mxu0 %v48
  %2074 = vmatpush.msra.mxu0 %v47
  %2075 = vmatmul.f32.gmra.mxu0 %v2057
  %v2076 = vpop.f32.mrf.mxu0
  %v2077 = vadd.f32 %v141, %v2076
  %2078 = vdwg.mxu0
  %v2079 = vsub.f32 %v2077, %v39
  %v2080 = vmax.f32 %v2079, -1.0
  %v2081 = vmin.f32 %v2080, 1.0
  %v2083 = vsel %vm116, %v2081, 0
  %2085 = vmatpush.msra.mxu0 0.0
  %2086 = vmatpush.msra.mxu0 0.0
  %2087 = vmatpush.msra.mxu0 0.0
  %2088 = vmatpush.msra.mxu0 0.0
  %2089 = vmatpush.msra.mxu0 0.0
  %2090 = vmatpush.msra.mxu0 0.0
  %2091 = vmatpush.msra.mxu0 0.0
  %2092 = vmatpush.msra.mxu0 0.0
  %2093 = vmatpush.msra.mxu0 0.0
  %2094 = vmatpush.msra.mxu0 0.0
  %2095 = vmatpush.msra.mxu0 0.0
  %2096 = vmatpush.msra.mxu0 0.0
  %2097 = vmatpush.msra.mxu0 %v55
  %2098 = vmatpush.msra.mxu0 %v54
  %2099 = vmatpush.msra.mxu0 %v53
  %2100 = vmatpush.msra.mxu0 %v52
  %2101 = vmatmul.f32.gmra.mxu0 %v2083
  %v2102 = vpop.f32.mrf.mxu0
  %v2103 = vadd.f32 0.0, %v2102
  %2104 = vdwg.mxu0
  %v2106 = vsel %vm205, %v2103, 0
  %2108 = vmatpush.msra.mxu0 0.0
  %2109 = vmatpush.msra.mxu0 0.0
  %2110 = vmatpush.msra.mxu0 0.0
  %2111 = vmatpush.msra.mxu0 0.0
  %2112 = vmatpush.msra.mxu0 0.0
  %2113 = vmatpush.msra.mxu0 0.0
  %2114 = vmatpush.msra.mxu0 0.0
  %2115 = vmatpush.msra.mxu0 0.0
  %2116 = vmatpush.msra.mxu0 0.0
  %2117 = vmatpush.msra.mxu0 0.0
  %2118 = vmatpush.msra.mxu0 0.0
  %2119 = vmatpush.msra.mxu0 0.0
  %2120 = vmatpush.msra.mxu0 0.0
  %2121 = vmatpush.msra.mxu0 0.0
  %2122 = vmatpush.msra.mxu0 0.0
  %2123 = vmatpush.msra.mxu0 %v2106
  %2124 = vmatmul.f32.gmra.mxu0 %v194
  %v2125 = vpop.f32.mrf.mxu0
  %v2126 = vadd.f32 0.0, %v2125
  %2127 = vmatmul.f32.gmra.mxu0 %v197
  %v2128 = vpop.f32.mrf.mxu0
  %v2129 = vadd.f32 0.0, %v2128
  %2130 = vmatmul.f32.gmra.mxu0 %v200
  %v2131 = vpop.f32.mrf.mxu0
  %v2132 = vadd.f32 0.0, %v2131
  %2133 = vmatmul.f32.gmra.mxu0 %v203
  %v2134 = vpop.f32.mrf.mxu0
  %v2135 = vadd.f32 0.0, %v2134
  %2136 = vdwg.mxu0
  %vm2137 = vcmp.gt.f32.partialorder %v2021, 0.0
  %vm2138 = vcmp.gt.f32.partialorder %v2024, 0.0
  %vm2139 = vcmp.gt.f32.partialorder %v2027, 0.0
  %vm2140 = vcmp.gt.f32.partialorder %v2030, 0.0
  %v2141 = vsel %vm2137, %v2126, 0.0
  %v2142 = vsel %vm2138, %v2129, 0.0
  %v2143 = vsel %vm2139, %v2132, 0.0
  %v2144 = vsel %vm2140, %v2135, 0.0
  %v2146 = vsel %vm116, %v2141, 0
  %v2149 = vsel %vm116, %v2142, 0
  %v2152 = vsel %vm116, %v2143, 0
  %v2155 = vsel %vm116, %v2144, 0
  %2157 = vmatpush.msra.mxu0 0.0
  %2158 = vmatpush.msra.mxu0 0.0
  %2159 = vmatpush.msra.mxu0 0.0
  %2160 = vmatpush.msra.mxu0 0.0
  %2161 = vmatpush.msra.mxu0 0.0
  %2162 = vmatpush.msra.mxu0 0.0
  %2163 = vmatpush.msra.mxu0 0.0
  %2164 = vmatpush.msra.mxu0 0.0
  %2165 = vmatpush.msra.mxu0 0.0
  %2166 = vmatpush.msra.mxu0 0.0
  %2167 = vmatpush.msra.mxu0 0.0
  %2168 = vmatpush.msra.mxu0 0.0
  %2169 = vmatpush.msra.mxu0 %v59
  %2170 = vmatpush.msra.mxu0 %v58
  %2171 = vmatpush.msra.mxu0 %v57
  %2172 = vmatpush.msra.mxu0 %v56
  %2173 = vmatmul.f32.gmra.mxu0 %v2146
  %v2174 = vpop.f32.mrf.mxu0
  %v2175 = vadd.f32 0.0, %v2174
  %2176 = vmatmul.f32.gmra.mxu0 %v2149
  %v2177 = vpop.f32.mrf.mxu0
  %v2178 = vadd.f32 0.0, %v2177
  %2179 = vmatmul.f32.gmra.mxu0 %v2152
  %v2180 = vpop.f32.mrf.mxu0
  %v2181 = vadd.f32 0.0, %v2180
  %2182 = vmatmul.f32.gmra.mxu0 %v2155
  %v2183 = vpop.f32.mrf.mxu0
  %v2184 = vadd.f32 0.0, %v2183
  %2185 = vdwg.mxu0
  %v2186 = vsub.f32 %v1987, %v2175
  %v2187 = vsub.f32 %v1988, %v2178
  %v2188 = vsub.f32 %v1989, %v2181
  %v2189 = vsub.f32 %v1990, %v2184
  %v2190 = vmax.f32 %v2186, 0.0
  %v2191 = vmax.f32 %v2187, 0.0
  %v2192 = vmax.f32 %v2188, 0.0
  %v2193 = vmax.f32 %v2189, 0.0
  %v2194 = vmin.f32 %v2190, 1.0
  %v2195 = vmin.f32 %v2191, 1.0
  %v2196 = vmin.f32 %v2192, 1.0
  %v2197 = vmin.f32 %v2193, 1.0
  %v2198 = vsel %vm62, %v2194, %v2186
  %v2199 = vsel %vm62, %v2195, %v2187
  %v2200 = vsel %vm62, %v2196, %v2188
  %v2201 = vsel %vm62, %v2197, %v2189
  %v2203 = vsel %vm66, %v2198, 0
  %v2206 = vsel %vm66, %v2199, 0
  %v2209 = vsel %vm66, %v2200, 0
  %v2212 = vsel %vm66, %v2201, 0
  %2214 = vmatpush.msra.mxu0 0.0
  %2215 = vmatpush.msra.mxu0 0.0
  %2216 = vmatpush.msra.mxu0 0.0
  %2217 = vmatpush.msra.mxu0 0.0
  %2218 = vmatpush.msra.mxu0 0.0
  %2219 = vmatpush.msra.mxu0 0.0
  %2220 = vmatpush.msra.mxu0 0.0
  %2221 = vmatpush.msra.mxu0 0.0
  %2222 = vmatpush.msra.mxu0 0.0
  %2223 = vmatpush.msra.mxu0 0.0
  %2224 = vmatpush.msra.mxu0 0.0
  %2225 = vmatpush.msra.mxu0 0.0
  %2226 = vmatpush.msra.mxu0 0.0
  %2227 = vmatpush.msra.mxu0 0.0
  %2228 = vmatpush.msra.mxu0 0.0
  %2229 = vmatpush.msra.mxu0 %v81
  %2230 = vmatmul.f32.gmra.mxu0 %v2203
  %v2231 = vpop.f32.mrf.mxu0
  %v2232 = vadd.f32 %v64, %v2231
  %2233 = vmatmul.f32.gmra.mxu0 %v2206
  %v2234 = vpop.f32.mrf.mxu0
  %v2235 = vadd.f32 %v64, %v2234
  %2236 = vmatmul.f32.gmra.mxu0 %v2209
  %v2237 = vpop.f32.mrf.mxu0
  %v2238 = vadd.f32 %v64, %v2237
  %2239 = vmatmul.f32.gmra.mxu0 %v2212
  %v2240 = vpop.f32.mrf.mxu0
  %v2241 = vadd.f32 %v64, %v2240
  %2242 = vdwg.mxu0
  %v2243 = vmax.f32 %v2232, 0.0
  %v2244 = vmax.f32 %v2235, 0.0
  %v2245 = vmax.f32 %v2238, 0.0
  %v2246 = vmax.f32 %v2241, 0.0
  %2247 = vmatpush.msra.mxu0 0.0
  %2248 = vmatpush.msra.mxu0 0.0
  %2249 = vmatpush.msra.mxu0 0.0
  %2250 = vmatpush.msra.mxu0 0.0
  %2251 = vmatpush.msra.mxu0 0.0
  %2252 = vmatpush.msra.mxu0 0.0
  %2253 = vmatpush.msra.mxu0 0.0
  %2254 = vmatpush.msra.mxu0 0.0
  %2255 = vmatpush.msra.mxu0 0.0
  %2256 = vmatpush.msra.mxu0 0.0
  %2257 = vmatpush.msra.mxu0 0.0
  %2258 = vmatpush.msra.mxu0 0.0
  %2259 = vmatpush.msra.mxu0 %v2246
  %2260 = vmatpush.msra.mxu0 %v2245
  %2261 = vmatpush.msra.mxu0 %v2244
  %2262 = vmatpush.msra.mxu0 %v2243
  %2263 = vmatmul.f32.gmra.mxu0 %v118
  %v2264 = vpop.f32.mrf.mxu0
  %v2265 = vadd.f32 0.0, %v2264
  %2266 = vdwg.mxu0
  %v2268 = vsel %vm116, %v2265, 0
  %2270 = vmatpush.msra.mxu0 0.0
  %2271 = vmatpush.msra.mxu0 0.0
  %2272 = vmatpush.msra.mxu0 0.0
  %2273 = vmatpush.msra.mxu0 0.0
  %2274 = vmatpush.msra.mxu0 0.0
  %2275 = vmatpush.msra.mxu0 0.0
  %2276 = vmatpush.msra.mxu0 0.0
  %2277 = vmatpush.msra.mxu0 0.0
  %2278 = vmatpush.msra.mxu0 0.0
  %2279 = vmatpush.msra.mxu0 0.0
  %2280 = vmatpush.msra.mxu0 0.0
  %2281 = vmatpush.msra.mxu0 0.0
  %2282 = vmatpush.msra.mxu0 %v50
  %2283 = vmatpush.msra.mxu0 %v49
  %2284 = vmatpush.msra.mxu0 %v48
  %2285 = vmatpush.msra.mxu0 %v47
  %2286 = vmatmul.f32.gmra.mxu0 %v2268
  %v2287 = vpop.f32.mrf.mxu0
  %v2288 = vadd.f32 %v141, %v2287
  %2289 = vdwg.mxu0
  %v2290 = vsub.f32 %v2288, %v39
  %v2291 = vmax.f32 %v2290, -1.0
  %v2292 = vmin.f32 %v2291, 1.0
  %v2294 = vsel %vm116, %v2292, 0
  %2296 = vmatpush.msra.mxu0 0.0
  %2297 = vmatpush.msra.mxu0 0.0
  %2298 = vmatpush.msra.mxu0 0.0
  %2299 = vmatpush.msra.mxu0 0.0
  %2300 = vmatpush.msra.mxu0 0.0
  %2301 = vmatpush.msra.mxu0 0.0
  %2302 = vmatpush.msra.mxu0 0.0
  %2303 = vmatpush.msra.mxu0 0.0
  %2304 = vmatpush.msra.mxu0 0.0
  %2305 = vmatpush.msra.mxu0 0.0
  %2306 = vmatpush.msra.mxu0 0.0
  %2307 = vmatpush.msra.mxu0 0.0
  %2308 = vmatpush.msra.mxu0 %v55
  %2309 = vmatpush.msra.mxu0 %v54
  %2310 = vmatpush.msra.mxu0 %v53
  %2311 = vmatpush.msra.mxu0 %v52
  %2312 = vmatmul.f32.gmra.mxu0 %v2294
  %v2313 = vpop.f32.mrf.mxu0
  %v2314 = vadd.f32 0.0, %v2313
  %2315 = vdwg.mxu0
  %v2317 = vsel %vm205, %v2314, 0
  %2319 = vmatpush.msra.mxu0 0.0
  %2320 = vmatpush.msra.mxu0 0.0
  %2321 = vmatpush.msra.mxu0 0.0
  %2322 = vmatpush.msra.mxu0 0.0
  %2323 = vmatpush.msra.mxu0 0.0
  %2324 = vmatpush.msra.mxu0 0.0
  %2325 = vmatpush.msra.mxu0 0.0
  %2326 = vmatpush.msra.mxu0 0.0
  %2327 = vmatpush.msra.mxu0 0.0
  %2328 = vmatpush.msra.mxu0 0.0
  %2329 = vmatpush.msra.mxu0 0.0
  %2330 = vmatpush.msra.mxu0 0.0
  %2331 = vmatpush.msra.mxu0 0.0
  %2332 = vmatpush.msra.mxu0 0.0
  %2333 = vmatpush.msra.mxu0 0.0
  %2334 = vmatpush.msra.mxu0 %v2317
  %2335 = vmatmul.f32.gmra.mxu0 %v194
  %v2336 = vpop.f32.mrf.mxu0
  %v2337 = vadd.f32 0.0, %v2336
  %2338 = vmatmul.f32.gmra.mxu0 %v197
  %v2339 = vpop.f32.mrf.mxu0
  %v2340 = vadd.f32 0.0, %v2339
  %2341 = vmatmul.f32.gmra.mxu0 %v200
  %v2342 = vpop.f32.mrf.mxu0
  %v2343 = vadd.f32 0.0, %v2342
  %2344 = vmatmul.f32.gmra.mxu0 %v203
  %v2345 = vpop.f32.mrf.mxu0
  %v2346 = vadd.f32 0.0, %v2345
  %2347 = vdwg.mxu0
  %vm2348 = vcmp.gt.f32.partialorder %v2232, 0.0
  %vm2349 = vcmp.gt.f32.partialorder %v2235, 0.0
  %vm2350 = vcmp.gt.f32.partialorder %v2238, 0.0
  %vm2351 = vcmp.gt.f32.partialorder %v2241, 0.0
  %v2352 = vsel %vm2348, %v2337, 0.0
  %v2353 = vsel %vm2349, %v2340, 0.0
  %v2354 = vsel %vm2350, %v2343, 0.0
  %v2355 = vsel %vm2351, %v2346, 0.0
  %v2357 = vsel %vm116, %v2352, 0
  %v2360 = vsel %vm116, %v2353, 0
  %v2363 = vsel %vm116, %v2354, 0
  %v2366 = vsel %vm116, %v2355, 0
  %2368 = vmatpush.msra.mxu0 0.0
  %2369 = vmatpush.msra.mxu0 0.0
  %2370 = vmatpush.msra.mxu0 0.0
  %2371 = vmatpush.msra.mxu0 0.0
  %2372 = vmatpush.msra.mxu0 0.0
  %2373 = vmatpush.msra.mxu0 0.0
  %2374 = vmatpush.msra.mxu0 0.0
  %2375 = vmatpush.msra.mxu0 0.0
  %2376 = vmatpush.msra.mxu0 0.0
  %2377 = vmatpush.msra.mxu0 0.0
  %2378 = vmatpush.msra.mxu0 0.0
  %2379 = vmatpush.msra.mxu0 0.0
  %2380 = vmatpush.msra.mxu0 %v59
  %2381 = vmatpush.msra.mxu0 %v58
  %2382 = vmatpush.msra.mxu0 %v57
  %2383 = vmatpush.msra.mxu0 %v56
  %2384 = vmatmul.f32.gmra.mxu0 %v2357
  %v2385 = vpop.f32.mrf.mxu0
  %v2386 = vadd.f32 0.0, %v2385
  %2387 = vmatmul.f32.gmra.mxu0 %v2360
  %v2388 = vpop.f32.mrf.mxu0
  %v2389 = vadd.f32 0.0, %v2388
  %2390 = vmatmul.f32.gmra.mxu0 %v2363
  %v2391 = vpop.f32.mrf.mxu0
  %v2392 = vadd.f32 0.0, %v2391
  %2393 = vmatmul.f32.gmra.mxu0 %v2366
  %v2394 = vpop.f32.mrf.mxu0
  %v2395 = vadd.f32 0.0, %v2394
  %2396 = vdwg.mxu0
  %v2397 = vsub.f32 %v2198, %v2386
  %v2398 = vsub.f32 %v2199, %v2389
  %v2399 = vsub.f32 %v2200, %v2392
  %v2400 = vsub.f32 %v2201, %v2395
  %v2401 = vmax.f32 %v2397, 0.0
  %v2402 = vmax.f32 %v2398, 0.0
  %v2403 = vmax.f32 %v2399, 0.0
  %v2404 = vmax.f32 %v2400, 0.0
  %v2405 = vmin.f32 %v2401, 1.0
  %v2406 = vmin.f32 %v2402, 1.0
  %v2407 = vmin.f32 %v2403, 1.0
  %v2408 = vmin.f32 %v2404, 1.0
  %v2409 = vsel %vm62, %v2405, %v2397
  %v2410 = vsel %vm62, %v2406, %v2398
  %v2411 = vsel %vm62, %v2407, %v2399
  %v2412 = vsel %vm62, %v2408, %v2400
  %v2414 = vsel %vm66, %v2409, 0
  %v2417 = vsel %vm66, %v2410, 0
  %v2420 = vsel %vm66, %v2411, 0
  %v2423 = vsel %vm66, %v2412, 0
  %2425 = vmatpush.msra.mxu0 0.0
  %2426 = vmatpush.msra.mxu0 0.0
  %2427 = vmatpush.msra.mxu0 0.0
  %2428 = vmatpush.msra.mxu0 0.0
  %2429 = vmatpush.msra.mxu0 0.0
  %2430 = vmatpush.msra.mxu0 0.0
  %2431 = vmatpush.msra.mxu0 0.0
  %2432 = vmatpush.msra.mxu0 0.0
  %2433 = vmatpush.msra.mxu0 0.0
  %2434 = vmatpush.msra.mxu0 0.0
  %2435 = vmatpush.msra.mxu0 0.0
  %2436 = vmatpush.msra.mxu0 0.0
  %2437 = vmatpush.msra.mxu0 0.0
  %2438 = vmatpush.msra.mxu0 0.0
  %2439 = vmatpush.msra.mxu0 0.0
  %2440 = vmatpush.msra.mxu0 %v81
  %2441 = vmatmul.f32.gmra.mxu0 %v2414
  %v2442 = vpop.f32.mrf.mxu0
  %v2443 = vadd.f32 %v64, %v2442
  %2444 = vmatmul.f32.gmra.mxu0 %v2417
  %v2445 = vpop.f32.mrf.mxu0
  %v2446 = vadd.f32 %v64, %v2445
  %2447 = vmatmul.f32.gmra.mxu0 %v2420
  %v2448 = vpop.f32.mrf.mxu0
  %v2449 = vadd.f32 %v64, %v2448
  %2450 = vmatmul.f32.gmra.mxu0 %v2423
  %v2451 = vpop.f32.mrf.mxu0
  %v2452 = vadd.f32 %v64, %v2451
  %2453 = vdwg.mxu0
  %v2454 = vmax.f32 %v2443, 0.0
  %v2455 = vmax.f32 %v2446, 0.0
  %v2456 = vmax.f32 %v2449, 0.0
  %v2457 = vmax.f32 %v2452, 0.0
  %2458 = vmatpush.msra.mxu0 0.0
  %2459 = vmatpush.msra.mxu0 0.0
  %2460 = vmatpush.msra.mxu0 0.0
  %2461 = vmatpush.msra.mxu0 0.0
  %2462 = vmatpush.msra.mxu0 0.0
  %2463 = vmatpush.msra.mxu0 0.0
  %2464 = vmatpush.msra.mxu0 0.0
  %2465 = vmatpush.msra.mxu0 0.0
  %2466 = vmatpush.msra.mxu0 0.0
  %2467 = vmatpush.msra.mxu0 0.0
  %2468 = vmatpush.msra.mxu0 0.0
  %2469 = vmatpush.msra.mxu0 0.0
  %2470 = vmatpush.msra.mxu0 %v2457
  %2471 = vmatpush.msra.mxu0 %v2456
  %2472 = vmatpush.msra.mxu0 %v2455
  %2473 = vmatpush.msra.mxu0 %v2454
  %2474 = vmatmul.f32.gmra.mxu0 %v118
  %v2475 = vpop.f32.mrf.mxu0
  %v2476 = vadd.f32 0.0, %v2475
  %2477 = vdwg.mxu0
  %v2479 = vsel %vm116, %v2476, 0
  %2481 = vmatpush.msra.mxu0 0.0
  %2482 = vmatpush.msra.mxu0 0.0
  %2483 = vmatpush.msra.mxu0 0.0
  %2484 = vmatpush.msra.mxu0 0.0
  %2485 = vmatpush.msra.mxu0 0.0
  %2486 = vmatpush.msra.mxu0 0.0
  %2487 = vmatpush.msra.mxu0 0.0
  %2488 = vmatpush.msra.mxu0 0.0
  %2489 = vmatpush.msra.mxu0 0.0
  %2490 = vmatpush.msra.mxu0 0.0
  %2491 = vmatpush.msra.mxu0 0.0
  %2492 = vmatpush.msra.mxu0 0.0
  %2493 = vmatpush.msra.mxu0 %v50
  %2494 = vmatpush.msra.mxu0 %v49
  %2495 = vmatpush.msra.mxu0 %v48
  %2496 = vmatpush.msra.mxu0 %v47
  %2497 = vmatmul.f32.gmra.mxu0 %v2479
  %v2498 = vpop.f32.mrf.mxu0
  %v2499 = vadd.f32 %v141, %v2498
  %2500 = vdwg.mxu0
  %v2501 = vsub.f32 %v2499, %v39
  %v2502 = vmax.f32 %v2501, -1.0
  %v2503 = vmin.f32 %v2502, 1.0
  %v2505 = vsel %vm116, %v2503, 0
  %2507 = vmatpush.msra.mxu0 0.0
  %2508 = vmatpush.msra.mxu0 0.0
  %2509 = vmatpush.msra.mxu0 0.0
  %2510 = vmatpush.msra.mxu0 0.0
  %2511 = vmatpush.msra.mxu0 0.0
  %2512 = vmatpush.msra.mxu0 0.0
  %2513 = vmatpush.msra.mxu0 0.0
  %2514 = vmatpush.msra.mxu0 0.0
  %2515 = vmatpush.msra.mxu0 0.0
  %2516 = vmatpush.msra.mxu0 0.0
  %2517 = vmatpush.msra.mxu0 0.0
  %2518 = vmatpush.msra.mxu0 0.0
  %2519 = vmatpush.msra.mxu0 %v55
  %2520 = vmatpush.msra.mxu0 %v54
  %2521 = vmatpush.msra.mxu0 %v53
  %2522 = vmatpush.msra.mxu0 %v52
  %2523 = vmatmul.f32.gmra.mxu0 %v2505
  %v2524 = vpop.f32.mrf.mxu0
  %v2525 = vadd.f32 0.0, %v2524
  %2526 = vdwg.mxu0
  %v2528 = vsel %vm205, %v2525, 0
  %2530 = vmatpush.msra.mxu0 0.0
  %2531 = vmatpush.msra.mxu0 0.0
  %2532 = vmatpush.msra.mxu0 0.0
  %2533 = vmatpush.msra.mxu0 0.0
  %2534 = vmatpush.msra.mxu0 0.0
  %2535 = vmatpush.msra.mxu0 0.0
  %2536 = vmatpush.msra.mxu0 0.0
  %2537 = vmatpush.msra.mxu0 0.0
  %2538 = vmatpush.msra.mxu0 0.0
  %2539 = vmatpush.msra.mxu0 0.0
  %2540 = vmatpush.msra.mxu0 0.0
  %2541 = vmatpush.msra.mxu0 0.0
  %2542 = vmatpush.msra.mxu0 0.0
  %2543 = vmatpush.msra.mxu0 0.0
  %2544 = vmatpush.msra.mxu0 0.0
  %2545 = vmatpush.msra.mxu0 %v2528
  %2546 = vmatmul.f32.gmra.mxu0 %v194
  %v2547 = vpop.f32.mrf.mxu0
  %v2548 = vadd.f32 0.0, %v2547
  %2549 = vmatmul.f32.gmra.mxu0 %v197
  %v2550 = vpop.f32.mrf.mxu0
  %v2551 = vadd.f32 0.0, %v2550
  %2552 = vmatmul.f32.gmra.mxu0 %v200
  %v2553 = vpop.f32.mrf.mxu0
  %v2554 = vadd.f32 0.0, %v2553
  %2555 = vmatmul.f32.gmra.mxu0 %v203
  %v2556 = vpop.f32.mrf.mxu0
  %v2557 = vadd.f32 0.0, %v2556
  %2558 = vdwg.mxu0
  %vm2559 = vcmp.gt.f32.partialorder %v2443, 0.0
  %vm2560 = vcmp.gt.f32.partialorder %v2446, 0.0
  %vm2561 = vcmp.gt.f32.partialorder %v2449, 0.0
  %vm2562 = vcmp.gt.f32.partialorder %v2452, 0.0
  %v2563 = vsel %vm2559, %v2548, 0.0
  %v2564 = vsel %vm2560, %v2551, 0.0
  %v2565 = vsel %vm2561, %v2554, 0.0
  %v2566 = vsel %vm2562, %v2557, 0.0
  %v2568 = vsel %vm116, %v2563, 0
  %v2571 = vsel %vm116, %v2564, 0
  %v2574 = vsel %vm116, %v2565, 0
  %v2577 = vsel %vm116, %v2566, 0
  %2579 = vmatpush.msra.mxu0 0.0
  %2580 = vmatpush.msra.mxu0 0.0
  %2581 = vmatpush.msra.mxu0 0.0
  %2582 = vmatpush.msra.mxu0 0.0
  %2583 = vmatpush.msra.mxu0 0.0
  %2584 = vmatpush.msra.mxu0 0.0
  %2585 = vmatpush.msra.mxu0 0.0
  %2586 = vmatpush.msra.mxu0 0.0
  %2587 = vmatpush.msra.mxu0 0.0
  %2588 = vmatpush.msra.mxu0 0.0
  %2589 = vmatpush.msra.mxu0 0.0
  %2590 = vmatpush.msra.mxu0 0.0
  %2591 = vmatpush.msra.mxu0 %v59
  %2592 = vmatpush.msra.mxu0 %v58
  %2593 = vmatpush.msra.mxu0 %v57
  %2594 = vmatpush.msra.mxu0 %v56
  %2595 = vmatmul.f32.gmra.mxu0 %v2568
  %v2596 = vpop.f32.mrf.mxu0
  %v2597 = vadd.f32 0.0, %v2596
  %2598 = vmatmul.f32.gmra.mxu0 %v2571
  %v2599 = vpop.f32.mrf.mxu0
  %v2600 = vadd.f32 0.0, %v2599
  %2601 = vmatmul.f32.gmra.mxu0 %v2574
  %v2602 = vpop.f32.mrf.mxu0
  %v2603 = vadd.f32 0.0, %v2602
  %2604 = vmatmul.f32.gmra.mxu0 %v2577
  %v2605 = vpop.f32.mrf.mxu0
  %v2606 = vadd.f32 0.0, %v2605
  %2607 = vdwg.mxu0
  %v2608 = vsub.f32 %v2409, %v2597
  %v2609 = vsub.f32 %v2410, %v2600
  %v2610 = vsub.f32 %v2411, %v2603
  %v2611 = vsub.f32 %v2412, %v2606
  %v2612 = vmax.f32 %v2608, 0.0
  %v2613 = vmax.f32 %v2609, 0.0
  %v2614 = vmax.f32 %v2610, 0.0
  %v2615 = vmax.f32 %v2611, 0.0
  %v2616 = vmin.f32 %v2612, 1.0
  %v2617 = vmin.f32 %v2613, 1.0
  %v2618 = vmin.f32 %v2614, 1.0
  %v2619 = vmin.f32 %v2615, 1.0
  %v2620 = vsel %vm62, %v2616, %v2608
  %v2621 = vsel %vm62, %v2617, %v2609
  %v2622 = vsel %vm62, %v2618, %v2610
  %v2623 = vsel %vm62, %v2619, %v2611
  %v2625 = vsel %vm66, %v2620, 0
  %v2628 = vsel %vm66, %v2621, 0
  %v2631 = vsel %vm66, %v2622, 0
  %v2634 = vsel %vm66, %v2623, 0
  %2636 = vmatpush.msra.mxu0 0.0
  %2637 = vmatpush.msra.mxu0 0.0
  %2638 = vmatpush.msra.mxu0 0.0
  %2639 = vmatpush.msra.mxu0 0.0
  %2640 = vmatpush.msra.mxu0 0.0
  %2641 = vmatpush.msra.mxu0 0.0
  %2642 = vmatpush.msra.mxu0 0.0
  %2643 = vmatpush.msra.mxu0 0.0
  %2644 = vmatpush.msra.mxu0 0.0
  %2645 = vmatpush.msra.mxu0 0.0
  %2646 = vmatpush.msra.mxu0 0.0
  %2647 = vmatpush.msra.mxu0 0.0
  %2648 = vmatpush.msra.mxu0 0.0
  %2649 = vmatpush.msra.mxu0 0.0
  %2650 = vmatpush.msra.mxu0 0.0
  %2651 = vmatpush.msra.mxu0 %v81
  %2652 = vmatmul.f32.gmra.mxu0 %v2625
  %v2653 = vpop.f32.mrf.mxu0
  %v2654 = vadd.f32 %v64, %v2653
  %2655 = vmatmul.f32.gmra.mxu0 %v2628
  %v2656 = vpop.f32.mrf.mxu0
  %v2657 = vadd.f32 %v64, %v2656
  %2658 = vmatmul.f32.gmra.mxu0 %v2631
  %v2659 = vpop.f32.mrf.mxu0
  %v2660 = vadd.f32 %v64, %v2659
  %2661 = vmatmul.f32.gmra.mxu0 %v2634
  %v2662 = vpop.f32.mrf.mxu0
  %v2663 = vadd.f32 %v64, %v2662
  %2664 = vdwg.mxu0
  %v2665 = vmax.f32 %v2654, 0.0
  %v2666 = vmax.f32 %v2657, 0.0
  %v2667 = vmax.f32 %v2660, 0.0
  %v2668 = vmax.f32 %v2663, 0.0
  %2669 = vmatpush.msra.mxu0 0.0
  %2670 = vmatpush.msra.mxu0 0.0
  %2671 = vmatpush.msra.mxu0 0.0
  %2672 = vmatpush.msra.mxu0 0.0
  %2673 = vmatpush.msra.mxu0 0.0
  %2674 = vmatpush.msra.mxu0 0.0
  %2675 = vmatpush.msra.mxu0 0.0
  %2676 = vmatpush.msra.mxu0 0.0
  %2677 = vmatpush.msra.mxu0 0.0
  %2678 = vmatpush.msra.mxu0 0.0
  %2679 = vmatpush.msra.mxu0 0.0
  %2680 = vmatpush.msra.mxu0 0.0
  %2681 = vmatpush.msra.mxu0 %v2668
  %2682 = vmatpush.msra.mxu0 %v2667
  %2683 = vmatpush.msra.mxu0 %v2666
  %2684 = vmatpush.msra.mxu0 %v2665
  %2685 = vmatmul.f32.gmra.mxu0 %v118
  %v2686 = vpop.f32.mrf.mxu0
  %v2687 = vadd.f32 0.0, %v2686
  %2688 = vdwg.mxu0
  %v2690 = vsel %vm116, %v2687, 0
  %2692 = vmatpush.msra.mxu0 0.0
  %2693 = vmatpush.msra.mxu0 0.0
  %2694 = vmatpush.msra.mxu0 0.0
  %2695 = vmatpush.msra.mxu0 0.0
  %2696 = vmatpush.msra.mxu0 0.0
  %2697 = vmatpush.msra.mxu0 0.0
  %2698 = vmatpush.msra.mxu0 0.0
  %2699 = vmatpush.msra.mxu0 0.0
  %2700 = vmatpush.msra.mxu0 0.0
  %2701 = vmatpush.msra.mxu0 0.0
  %2702 = vmatpush.msra.mxu0 0.0
  %2703 = vmatpush.msra.mxu0 0.0
  %2704 = vmatpush.msra.mxu0 %v50
  %2705 = vmatpush.msra.mxu0 %v49
  %2706 = vmatpush.msra.mxu0 %v48
  %2707 = vmatpush.msra.mxu0 %v47
  %2708 = vmatmul.f32.gmra.mxu0 %v2690
  %v2709 = vpop.f32.mrf.mxu0
  %v2710 = vadd.f32 %v141, %v2709
  %2711 = vdwg.mxu0
  %v2712 = vsub.f32 %v2710, %v39
  %v2713 = vmax.f32 %v2712, -1.0
  %v2714 = vmin.f32 %v2713, 1.0
  %v2716 = vsel %vm116, %v2714, 0
  %2718 = vmatpush.msra.mxu0 0.0
  %2719 = vmatpush.msra.mxu0 0.0
  %2720 = vmatpush.msra.mxu0 0.0
  %2721 = vmatpush.msra.mxu0 0.0
  %2722 = vmatpush.msra.mxu0 0.0
  %2723 = vmatpush.msra.mxu0 0.0
  %2724 = vmatpush.msra.mxu0 0.0
  %2725 = vmatpush.msra.mxu0 0.0
  %2726 = vmatpush.msra.mxu0 0.0
  %2727 = vmatpush.msra.mxu0 0.0
  %2728 = vmatpush.msra.mxu0 0.0
  %2729 = vmatpush.msra.mxu0 0.0
  %2730 = vmatpush.msra.mxu0 %v55
  %2731 = vmatpush.msra.mxu0 %v54
  %2732 = vmatpush.msra.mxu0 %v53
  %2733 = vmatpush.msra.mxu0 %v52
  %2734 = vmatmul.f32.gmra.mxu0 %v2716
  %v2735 = vpop.f32.mrf.mxu0
  %v2736 = vadd.f32 0.0, %v2735
  %2737 = vdwg.mxu0
  %v2739 = vsel %vm205, %v2736, 0
  %2741 = vmatpush.msra.mxu0 0.0
  %2742 = vmatpush.msra.mxu0 0.0
  %2743 = vmatpush.msra.mxu0 0.0
  %2744 = vmatpush.msra.mxu0 0.0
  %2745 = vmatpush.msra.mxu0 0.0
  %2746 = vmatpush.msra.mxu0 0.0
  %2747 = vmatpush.msra.mxu0 0.0
  %2748 = vmatpush.msra.mxu0 0.0
  %2749 = vmatpush.msra.mxu0 0.0
  %2750 = vmatpush.msra.mxu0 0.0
  %2751 = vmatpush.msra.mxu0 0.0
  %2752 = vmatpush.msra.mxu0 0.0
  %2753 = vmatpush.msra.mxu0 0.0
  %2754 = vmatpush.msra.mxu0 0.0
  %2755 = vmatpush.msra.mxu0 0.0
  %2756 = vmatpush.msra.mxu0 %v2739
  %2757 = vmatmul.f32.gmra.mxu0 %v194
  %v2758 = vpop.f32.mrf.mxu0
  %v2759 = vadd.f32 0.0, %v2758
  %2760 = vmatmul.f32.gmra.mxu0 %v197
  %v2761 = vpop.f32.mrf.mxu0
  %v2762 = vadd.f32 0.0, %v2761
  %2763 = vmatmul.f32.gmra.mxu0 %v200
  %v2764 = vpop.f32.mrf.mxu0
  %v2765 = vadd.f32 0.0, %v2764
  %2766 = vmatmul.f32.gmra.mxu0 %v203
  %v2767 = vpop.f32.mrf.mxu0
  %v2768 = vadd.f32 0.0, %v2767
  %2769 = vdwg.mxu0
  %vm2770 = vcmp.gt.f32.partialorder %v2654, 0.0
  %vm2771 = vcmp.gt.f32.partialorder %v2657, 0.0
  %vm2772 = vcmp.gt.f32.partialorder %v2660, 0.0
  %vm2773 = vcmp.gt.f32.partialorder %v2663, 0.0
  %v2774 = vsel %vm2770, %v2759, 0.0
  %v2775 = vsel %vm2771, %v2762, 0.0
  %v2776 = vsel %vm2772, %v2765, 0.0
  %v2777 = vsel %vm2773, %v2768, 0.0
  %v2779 = vsel %vm116, %v2774, 0
  %v2782 = vsel %vm116, %v2775, 0
  %v2785 = vsel %vm116, %v2776, 0
  %v2788 = vsel %vm116, %v2777, 0
  %2790 = vmatpush.msra.mxu0 0.0
  %2791 = vmatpush.msra.mxu0 0.0
  %2792 = vmatpush.msra.mxu0 0.0
  %2793 = vmatpush.msra.mxu0 0.0
  %2794 = vmatpush.msra.mxu0 0.0
  %2795 = vmatpush.msra.mxu0 0.0
  %2796 = vmatpush.msra.mxu0 0.0
  %2797 = vmatpush.msra.mxu0 0.0
  %2798 = vmatpush.msra.mxu0 0.0
  %2799 = vmatpush.msra.mxu0 0.0
  %2800 = vmatpush.msra.mxu0 0.0
  %2801 = vmatpush.msra.mxu0 0.0
  %2802 = vmatpush.msra.mxu0 %v59
  %2803 = vmatpush.msra.mxu0 %v58
  %2804 = vmatpush.msra.mxu0 %v57
  %2805 = vmatpush.msra.mxu0 %v56
  %2806 = vmatmul.f32.gmra.mxu0 %v2779
  %v2807 = vpop.f32.mrf.mxu0
  %v2808 = vadd.f32 0.0, %v2807
  %2809 = vmatmul.f32.gmra.mxu0 %v2782
  %v2810 = vpop.f32.mrf.mxu0
  %v2811 = vadd.f32 0.0, %v2810
  %2812 = vmatmul.f32.gmra.mxu0 %v2785
  %v2813 = vpop.f32.mrf.mxu0
  %v2814 = vadd.f32 0.0, %v2813
  %2815 = vmatmul.f32.gmra.mxu0 %v2788
  %v2816 = vpop.f32.mrf.mxu0
  %v2817 = vadd.f32 0.0, %v2816
  %2818 = vdwg.mxu0
  %v2819 = vsub.f32 %v2620, %v2808
  %v2820 = vsub.f32 %v2621, %v2811
  %v2821 = vsub.f32 %v2622, %v2814
  %v2822 = vsub.f32 %v2623, %v2817
  %v2823 = vmax.f32 %v2819, 0.0
  %v2824 = vmax.f32 %v2820, 0.0
  %v2825 = vmax.f32 %v2821, 0.0
  %v2826 = vmax.f32 %v2822, 0.0
  %v2827 = vmin.f32 %v2823, 1.0
  %v2828 = vmin.f32 %v2824, 1.0
  %v2829 = vmin.f32 %v2825, 1.0
  %v2830 = vmin.f32 %v2826, 1.0
  %v2831 = vsel %vm62, %v2827, %v2819
  %v2832 = vsel %vm62, %v2828, %v2820
  %v2833 = vsel %vm62, %v2829, %v2821
  %v2834 = vsel %vm62, %v2830, %v2822
  %v2836 = vsel %vm66, %v2831, 0
  %v2839 = vsel %vm66, %v2832, 0
  %v2842 = vsel %vm66, %v2833, 0
  %v2845 = vsel %vm66, %v2834, 0
  %2847 = vmatpush.msra.mxu0 0.0
  %2848 = vmatpush.msra.mxu0 0.0
  %2849 = vmatpush.msra.mxu0 0.0
  %2850 = vmatpush.msra.mxu0 0.0
  %2851 = vmatpush.msra.mxu0 0.0
  %2852 = vmatpush.msra.mxu0 0.0
  %2853 = vmatpush.msra.mxu0 0.0
  %2854 = vmatpush.msra.mxu0 0.0
  %2855 = vmatpush.msra.mxu0 0.0
  %2856 = vmatpush.msra.mxu0 0.0
  %2857 = vmatpush.msra.mxu0 0.0
  %2858 = vmatpush.msra.mxu0 0.0
  %2859 = vmatpush.msra.mxu0 0.0
  %2860 = vmatpush.msra.mxu0 0.0
  %2861 = vmatpush.msra.mxu0 0.0
  %2862 = vmatpush.msra.mxu0 %v81
  %2863 = vmatmul.f32.gmra.mxu0 %v2836
  %v2864 = vpop.f32.mrf.mxu0
  %v2865 = vadd.f32 %v64, %v2864
  %2866 = vmatmul.f32.gmra.mxu0 %v2839
  %v2867 = vpop.f32.mrf.mxu0
  %v2868 = vadd.f32 %v64, %v2867
  %2869 = vmatmul.f32.gmra.mxu0 %v2842
  %v2870 = vpop.f32.mrf.mxu0
  %v2871 = vadd.f32 %v64, %v2870
  %2872 = vmatmul.f32.gmra.mxu0 %v2845
  %v2873 = vpop.f32.mrf.mxu0
  %v2874 = vadd.f32 %v64, %v2873
  %2875 = vdwg.mxu0
  %v2876 = vmax.f32 %v2865, 0.0
  %v2877 = vmax.f32 %v2868, 0.0
  %v2878 = vmax.f32 %v2871, 0.0
  %v2879 = vmax.f32 %v2874, 0.0
  %2880 = vmatpush.msra.mxu0 0.0
  %2881 = vmatpush.msra.mxu0 0.0
  %2882 = vmatpush.msra.mxu0 0.0
  %2883 = vmatpush.msra.mxu0 0.0
  %2884 = vmatpush.msra.mxu0 0.0
  %2885 = vmatpush.msra.mxu0 0.0
  %2886 = vmatpush.msra.mxu0 0.0
  %2887 = vmatpush.msra.mxu0 0.0
  %2888 = vmatpush.msra.mxu0 0.0
  %2889 = vmatpush.msra.mxu0 0.0
  %2890 = vmatpush.msra.mxu0 0.0
  %2891 = vmatpush.msra.mxu0 0.0
  %2892 = vmatpush.msra.mxu0 %v2879
  %2893 = vmatpush.msra.mxu0 %v2878
  %2894 = vmatpush.msra.mxu0 %v2877
  %2895 = vmatpush.msra.mxu0 %v2876
  %2896 = vmatmul.f32.gmra.mxu0 %v118
  %v2897 = vpop.f32.mrf.mxu0
  %v2898 = vadd.f32 0.0, %v2897
  %2899 = vdwg.mxu0
  %v2901 = vsel %vm116, %v2898, 0
  %2903 = vmatpush.msra.mxu0 0.0
  %2904 = vmatpush.msra.mxu0 0.0
  %2905 = vmatpush.msra.mxu0 0.0
  %2906 = vmatpush.msra.mxu0 0.0
  %2907 = vmatpush.msra.mxu0 0.0
  %2908 = vmatpush.msra.mxu0 0.0
  %2909 = vmatpush.msra.mxu0 0.0
  %2910 = vmatpush.msra.mxu0 0.0
  %2911 = vmatpush.msra.mxu0 0.0
  %2912 = vmatpush.msra.mxu0 0.0
  %2913 = vmatpush.msra.mxu0 0.0
  %2914 = vmatpush.msra.mxu0 0.0
  %2915 = vmatpush.msra.mxu0 %v50
  %2916 = vmatpush.msra.mxu0 %v49
  %2917 = vmatpush.msra.mxu0 %v48
  %2918 = vmatpush.msra.mxu0 %v47
  %2919 = vmatmul.f32.gmra.mxu0 %v2901
  %v2920 = vpop.f32.mrf.mxu0
  %v2921 = vadd.f32 %v141, %v2920
  %2922 = vdwg.mxu0
  %v2923 = vsub.f32 %v2921, %v39
  %v2924 = vmax.f32 %v2923, -1.0
  %v2925 = vmin.f32 %v2924, 1.0
  %v2927 = vsel %vm116, %v2925, 0
  %2929 = vmatpush.msra.mxu0 0.0
  %2930 = vmatpush.msra.mxu0 0.0
  %2931 = vmatpush.msra.mxu0 0.0
  %2932 = vmatpush.msra.mxu0 0.0
  %2933 = vmatpush.msra.mxu0 0.0
  %2934 = vmatpush.msra.mxu0 0.0
  %2935 = vmatpush.msra.mxu0 0.0
  %2936 = vmatpush.msra.mxu0 0.0
  %2937 = vmatpush.msra.mxu0 0.0
  %2938 = vmatpush.msra.mxu0 0.0
  %2939 = vmatpush.msra.mxu0 0.0
  %2940 = vmatpush.msra.mxu0 0.0
  %2941 = vmatpush.msra.mxu0 %v55
  %2942 = vmatpush.msra.mxu0 %v54
  %2943 = vmatpush.msra.mxu0 %v53
  %2944 = vmatpush.msra.mxu0 %v52
  %2945 = vmatmul.f32.gmra.mxu0 %v2927
  %v2946 = vpop.f32.mrf.mxu0
  %v2947 = vadd.f32 0.0, %v2946
  %2948 = vdwg.mxu0
  %v2950 = vsel %vm205, %v2947, 0
  %2952 = vmatpush.msra.mxu0 0.0
  %2953 = vmatpush.msra.mxu0 0.0
  %2954 = vmatpush.msra.mxu0 0.0
  %2955 = vmatpush.msra.mxu0 0.0
  %2956 = vmatpush.msra.mxu0 0.0
  %2957 = vmatpush.msra.mxu0 0.0
  %2958 = vmatpush.msra.mxu0 0.0
  %2959 = vmatpush.msra.mxu0 0.0
  %2960 = vmatpush.msra.mxu0 0.0
  %2961 = vmatpush.msra.mxu0 0.0
  %2962 = vmatpush.msra.mxu0 0.0
  %2963 = vmatpush.msra.mxu0 0.0
  %2964 = vmatpush.msra.mxu0 0.0
  %2965 = vmatpush.msra.mxu0 0.0
  %2966 = vmatpush.msra.mxu0 0.0
  %2967 = vmatpush.msra.mxu0 %v2950
  %2968 = vmatmul.f32.gmra.mxu0 %v194
  %v2969 = vpop.f32.mrf.mxu0
  %v2970 = vadd.f32 0.0, %v2969
  %2971 = vmatmul.f32.gmra.mxu0 %v197
  %v2972 = vpop.f32.mrf.mxu0
  %v2973 = vadd.f32 0.0, %v2972
  %2974 = vmatmul.f32.gmra.mxu0 %v200
  %v2975 = vpop.f32.mrf.mxu0
  %v2976 = vadd.f32 0.0, %v2975
  %2977 = vmatmul.f32.gmra.mxu0 %v203
  %v2978 = vpop.f32.mrf.mxu0
  %v2979 = vadd.f32 0.0, %v2978
  %2980 = vdwg.mxu0
  %vm2981 = vcmp.gt.f32.partialorder %v2865, 0.0
  %vm2982 = vcmp.gt.f32.partialorder %v2868, 0.0
  %vm2983 = vcmp.gt.f32.partialorder %v2871, 0.0
  %vm2984 = vcmp.gt.f32.partialorder %v2874, 0.0
  %v2985 = vsel %vm2981, %v2970, 0.0
  %v2986 = vsel %vm2982, %v2973, 0.0
  %v2987 = vsel %vm2983, %v2976, 0.0
  %v2988 = vsel %vm2984, %v2979, 0.0
  %v2990 = vsel %vm116, %v2985, 0
  %v2993 = vsel %vm116, %v2986, 0
  %v2996 = vsel %vm116, %v2987, 0
  %v2999 = vsel %vm116, %v2988, 0
  %3001 = vmatpush.msra.mxu0 0.0
  %3002 = vmatpush.msra.mxu0 0.0
  %3003 = vmatpush.msra.mxu0 0.0
  %3004 = vmatpush.msra.mxu0 0.0
  %3005 = vmatpush.msra.mxu0 0.0
  %3006 = vmatpush.msra.mxu0 0.0
  %3007 = vmatpush.msra.mxu0 0.0
  %3008 = vmatpush.msra.mxu0 0.0
  %3009 = vmatpush.msra.mxu0 0.0
  %3010 = vmatpush.msra.mxu0 0.0
  %3011 = vmatpush.msra.mxu0 0.0
  %3012 = vmatpush.msra.mxu0 0.0
  %3013 = vmatpush.msra.mxu0 %v59
  %3014 = vmatpush.msra.mxu0 %v58
  %3015 = vmatpush.msra.mxu0 %v57
  %3016 = vmatpush.msra.mxu0 %v56
  %3017 = vmatmul.f32.gmra.mxu0 %v2990
  %v3018 = vpop.f32.mrf.mxu0
  %v3019 = vadd.f32 0.0, %v3018
  %3020 = vmatmul.f32.gmra.mxu0 %v2993
  %v3021 = vpop.f32.mrf.mxu0
  %v3022 = vadd.f32 0.0, %v3021
  %3023 = vmatmul.f32.gmra.mxu0 %v2996
  %v3024 = vpop.f32.mrf.mxu0
  %v3025 = vadd.f32 0.0, %v3024
  %3026 = vmatmul.f32.gmra.mxu0 %v2999
  %v3027 = vpop.f32.mrf.mxu0
  %v3028 = vadd.f32 0.0, %v3027
  %3029 = vdwg.mxu0
  %v3030 = vsub.f32 %v2831, %v3019
  %v3031 = vsub.f32 %v2832, %v3022
  %v3032 = vsub.f32 %v2833, %v3025
  %v3033 = vsub.f32 %v2834, %v3028
  %v3034 = vmax.f32 %v3030, 0.0
  %v3035 = vmax.f32 %v3031, 0.0
  %v3036 = vmax.f32 %v3032, 0.0
  %v3037 = vmax.f32 %v3033, 0.0
  %v3038 = vmin.f32 %v3034, 1.0
  %v3039 = vmin.f32 %v3035, 1.0
  %v3040 = vmin.f32 %v3036, 1.0
  %v3041 = vmin.f32 %v3037, 1.0
  %v3042 = vsel %vm62, %v3038, %v3030
  %v3043 = vsel %vm62, %v3039, %v3031
  %v3044 = vsel %vm62, %v3040, %v3032
  %v3045 = vsel %vm62, %v3041, %v3033
  %v3047 = vsel %vm66, %v3042, 0
  %v3050 = vsel %vm66, %v3043, 0
  %v3053 = vsel %vm66, %v3044, 0
  %v3056 = vsel %vm66, %v3045, 0
  %3058 = vmatpush.msra.mxu0 0.0
  %3059 = vmatpush.msra.mxu0 0.0
  %3060 = vmatpush.msra.mxu0 0.0
  %3061 = vmatpush.msra.mxu0 0.0
  %3062 = vmatpush.msra.mxu0 0.0
  %3063 = vmatpush.msra.mxu0 0.0
  %3064 = vmatpush.msra.mxu0 0.0
  %3065 = vmatpush.msra.mxu0 0.0
  %3066 = vmatpush.msra.mxu0 0.0
  %3067 = vmatpush.msra.mxu0 0.0
  %3068 = vmatpush.msra.mxu0 0.0
  %3069 = vmatpush.msra.mxu0 0.0
  %3070 = vmatpush.msra.mxu0 0.0
  %3071 = vmatpush.msra.mxu0 0.0
  %3072 = vmatpush.msra.mxu0 0.0
  %3073 = vmatpush.msra.mxu0 %v81
  %3074 = vmatmul.f32.gmra.mxu0 %v3047
  %v3075 = vpop.f32.mrf.mxu0
  %v3076 = vadd.f32 %v64, %v3075
  %3077 = vmatmul.f32.gmra.mxu0 %v3050
  %v3078 = vpop.f32.mrf.mxu0
  %v3079 = vadd.f32 %v64, %v3078
  %3080 = vmatmul.f32.gmra.mxu0 %v3053
  %v3081 = vpop.f32.mrf.mxu0
  %v3082 = vadd.f32 %v64, %v3081
  %3083 = vmatmul.f32.gmra.mxu0 %v3056
  %v3084 = vpop.f32.mrf.mxu0
  %v3085 = vadd.f32 %v64, %v3084
  %3086 = vdwg.mxu0
  %v3087 = vmax.f32 %v3076, 0.0
  %v3088 = vmax.f32 %v3079, 0.0
  %v3089 = vmax.f32 %v3082, 0.0
  %v3090 = vmax.f32 %v3085, 0.0
  %3091 = vmatpush.msra.mxu0 0.0
  %3092 = vmatpush.msra.mxu0 0.0
  %3093 = vmatpush.msra.mxu0 0.0
  %3094 = vmatpush.msra.mxu0 0.0
  %3095 = vmatpush.msra.mxu0 0.0
  %3096 = vmatpush.msra.mxu0 0.0
  %3097 = vmatpush.msra.mxu0 0.0
  %3098 = vmatpush.msra.mxu0 0.0
  %3099 = vmatpush.msra.mxu0 0.0
  %3100 = vmatpush.msra.mxu0 0.0
  %3101 = vmatpush.msra.mxu0 0.0
  %3102 = vmatpush.msra.mxu0 0.0
  %3103 = vmatpush.msra.mxu0 %v3090
  %3104 = vmatpush.msra.mxu0 %v3089
  %3105 = vmatpush.msra.mxu0 %v3088
  %3106 = vmatpush.msra.mxu0 %v3087
  %3107 = vmatmul.f32.gmra.mxu0 %v118
  %v3108 = vpop.f32.mrf.mxu0
  %v3109 = vadd.f32 0.0, %v3108
  %3110 = vdwg.mxu0
  %v3112 = vsel %vm116, %v3109, 0
  %3114 = vmatpush.msra.mxu0 0.0
  %3115 = vmatpush.msra.mxu0 0.0
  %3116 = vmatpush.msra.mxu0 0.0
  %3117 = vmatpush.msra.mxu0 0.0
  %3118 = vmatpush.msra.mxu0 0.0
  %3119 = vmatpush.msra.mxu0 0.0
  %3120 = vmatpush.msra.mxu0 0.0
  %3121 = vmatpush.msra.mxu0 0.0
  %3122 = vmatpush.msra.mxu0 0.0
  %3123 = vmatpush.msra.mxu0 0.0
  %3124 = vmatpush.msra.mxu0 0.0
  %3125 = vmatpush.msra.mxu0 0.0
  %3126 = vmatpush.msra.mxu0 %v50
  %3127 = vmatpush.msra.mxu0 %v49
  %3128 = vmatpush.msra.mxu0 %v48
  %3129 = vmatpush.msra.mxu0 %v47
  %3130 = vmatmul.f32.gmra.mxu0 %v3112
  %v3131 = vpop.f32.mrf.mxu0
  %v3132 = vadd.f32 %v141, %v3131
  %3133 = vdwg.mxu0
  %v3134 = vsub.f32 %v3132, %v39
  %v3135 = vmax.f32 %v3134, -1.0
  %v3136 = vmin.f32 %v3135, 1.0
  %v3138 = vsel %vm116, %v3136, 0
  %3140 = vmatpush.msra.mxu0 0.0
  %3141 = vmatpush.msra.mxu0 0.0
  %3142 = vmatpush.msra.mxu0 0.0
  %3143 = vmatpush.msra.mxu0 0.0
  %3144 = vmatpush.msra.mxu0 0.0
  %3145 = vmatpush.msra.mxu0 0.0
  %3146 = vmatpush.msra.mxu0 0.0
  %3147 = vmatpush.msra.mxu0 0.0
  %3148 = vmatpush.msra.mxu0 0.0
  %3149 = vmatpush.msra.mxu0 0.0
  %3150 = vmatpush.msra.mxu0 0.0
  %3151 = vmatpush.msra.mxu0 0.0
  %3152 = vmatpush.msra.mxu0 %v55
  %3153 = vmatpush.msra.mxu0 %v54
  %3154 = vmatpush.msra.mxu0 %v53
  %3155 = vmatpush.msra.mxu0 %v52
  %3156 = vmatmul.f32.gmra.mxu0 %v3138
  %v3157 = vpop.f32.mrf.mxu0
  %v3158 = vadd.f32 0.0, %v3157
  %3159 = vdwg.mxu0
  %v3161 = vsel %vm205, %v3158, 0
  %3163 = vmatpush.msra.mxu0 0.0
  %3164 = vmatpush.msra.mxu0 0.0
  %3165 = vmatpush.msra.mxu0 0.0
  %3166 = vmatpush.msra.mxu0 0.0
  %3167 = vmatpush.msra.mxu0 0.0
  %3168 = vmatpush.msra.mxu0 0.0
  %3169 = vmatpush.msra.mxu0 0.0
  %3170 = vmatpush.msra.mxu0 0.0
  %3171 = vmatpush.msra.mxu0 0.0
  %3172 = vmatpush.msra.mxu0 0.0
  %3173 = vmatpush.msra.mxu0 0.0
  %3174 = vmatpush.msra.mxu0 0.0
  %3175 = vmatpush.msra.mxu0 0.0
  %3176 = vmatpush.msra.mxu0 0.0
  %3177 = vmatpush.msra.mxu0 0.0
  %3178 = vmatpush.msra.mxu0 %v3161
  %3179 = vmatmul.f32.gmra.mxu0 %v194
  %v3180 = vpop.f32.mrf.mxu0
  %v3181 = vadd.f32 0.0, %v3180
  %3182 = vmatmul.f32.gmra.mxu0 %v197
  %v3183 = vpop.f32.mrf.mxu0
  %v3184 = vadd.f32 0.0, %v3183
  %3185 = vmatmul.f32.gmra.mxu0 %v200
  %v3186 = vpop.f32.mrf.mxu0
  %v3187 = vadd.f32 0.0, %v3186
  %3188 = vmatmul.f32.gmra.mxu0 %v203
  %v3189 = vpop.f32.mrf.mxu0
  %v3190 = vadd.f32 0.0, %v3189
  %3191 = vdwg.mxu0
  %vm3192 = vcmp.gt.f32.partialorder %v3076, 0.0
  %vm3193 = vcmp.gt.f32.partialorder %v3079, 0.0
  %vm3194 = vcmp.gt.f32.partialorder %v3082, 0.0
  %vm3195 = vcmp.gt.f32.partialorder %v3085, 0.0
  %v3196 = vsel %vm3192, %v3181, 0.0
  %v3197 = vsel %vm3193, %v3184, 0.0
  %v3198 = vsel %vm3194, %v3187, 0.0
  %v3199 = vsel %vm3195, %v3190, 0.0
  %v3201 = vsel %vm116, %v3196, 0
  %v3204 = vsel %vm116, %v3197, 0
  %v3207 = vsel %vm116, %v3198, 0
  %v3210 = vsel %vm116, %v3199, 0
  %3212 = vmatpush.msra.mxu0 0.0
  %3213 = vmatpush.msra.mxu0 0.0
  %3214 = vmatpush.msra.mxu0 0.0
  %3215 = vmatpush.msra.mxu0 0.0
  %3216 = vmatpush.msra.mxu0 0.0
  %3217 = vmatpush.msra.mxu0 0.0
  %3218 = vmatpush.msra.mxu0 0.0
  %3219 = vmatpush.msra.mxu0 0.0
  %3220 = vmatpush.msra.mxu0 0.0
  %3221 = vmatpush.msra.mxu0 0.0
  %3222 = vmatpush.msra.mxu0 0.0
  %3223 = vmatpush.msra.mxu0 0.0
  %3224 = vmatpush.msra.mxu0 %v59
  %3225 = vmatpush.msra.mxu0 %v58
  %3226 = vmatpush.msra.mxu0 %v57
  %3227 = vmatpush.msra.mxu0 %v56
  %3228 = vmatmul.f32.gmra.mxu0 %v3201
  %v3229 = vpop.f32.mrf.mxu0
  %v3230 = vadd.f32 0.0, %v3229
  %3231 = vmatmul.f32.gmra.mxu0 %v3204
  %v3232 = vpop.f32.mrf.mxu0
  %v3233 = vadd.f32 0.0, %v3232
  %3234 = vmatmul.f32.gmra.mxu0 %v3207
  %v3235 = vpop.f32.mrf.mxu0
  %v3236 = vadd.f32 0.0, %v3235
  %3237 = vmatmul.f32.gmra.mxu0 %v3210
  %v3238 = vpop.f32.mrf.mxu0
  %v3239 = vadd.f32 0.0, %v3238
  %3240 = vdwg.mxu0
  %v3241 = vsub.f32 %v3042, %v3230
  %v3242 = vsub.f32 %v3043, %v3233
  %v3243 = vsub.f32 %v3044, %v3236
  %v3244 = vsub.f32 %v3045, %v3239
  %v3245 = vmax.f32 %v3241, 0.0
  %v3246 = vmax.f32 %v3242, 0.0
  %v3247 = vmax.f32 %v3243, 0.0
  %v3248 = vmax.f32 %v3244, 0.0
  %v3249 = vmin.f32 %v3245, 1.0
  %v3250 = vmin.f32 %v3246, 1.0
  %v3251 = vmin.f32 %v3247, 1.0
  %v3252 = vmin.f32 %v3248, 1.0
  %v3253 = vsel %vm62, %v3249, %v3241
  %v3254 = vsel %vm62, %v3250, %v3242
  %v3255 = vsel %vm62, %v3251, %v3243
  %v3256 = vsel %vm62, %v3252, %v3244
  %v3258 = vsel %vm66, %v3253, 0
  %v3261 = vsel %vm66, %v3254, 0
  %v3264 = vsel %vm66, %v3255, 0
  %v3267 = vsel %vm66, %v3256, 0
  %3269 = vmatpush.msra.mxu0 0.0
  %3270 = vmatpush.msra.mxu0 0.0
  %3271 = vmatpush.msra.mxu0 0.0
  %3272 = vmatpush.msra.mxu0 0.0
  %3273 = vmatpush.msra.mxu0 0.0
  %3274 = vmatpush.msra.mxu0 0.0
  %3275 = vmatpush.msra.mxu0 0.0
  %3276 = vmatpush.msra.mxu0 0.0
  %3277 = vmatpush.msra.mxu0 0.0
  %3278 = vmatpush.msra.mxu0 0.0
  %3279 = vmatpush.msra.mxu0 0.0
  %3280 = vmatpush.msra.mxu0 0.0
  %3281 = vmatpush.msra.mxu0 0.0
  %3282 = vmatpush.msra.mxu0 0.0
  %3283 = vmatpush.msra.mxu0 0.0
  %3284 = vmatpush.msra.mxu0 %v81
  %3285 = vmatmul.f32.gmra.mxu0 %v3258
  %v3286 = vpop.f32.mrf.mxu0
  %v3287 = vadd.f32 %v64, %v3286
  %3288 = vmatmul.f32.gmra.mxu0 %v3261
  %v3289 = vpop.f32.mrf.mxu0
  %v3290 = vadd.f32 %v64, %v3289
  %3291 = vmatmul.f32.gmra.mxu0 %v3264
  %v3292 = vpop.f32.mrf.mxu0
  %v3293 = vadd.f32 %v64, %v3292
  %3294 = vmatmul.f32.gmra.mxu0 %v3267
  %v3295 = vpop.f32.mrf.mxu0
  %v3296 = vadd.f32 %v64, %v3295
  %3297 = vdwg.mxu0
  %v3298 = vmax.f32 %v3287, 0.0
  %v3299 = vmax.f32 %v3290, 0.0
  %v3300 = vmax.f32 %v3293, 0.0
  %v3301 = vmax.f32 %v3296, 0.0
  %3302 = vmatpush.msra.mxu0 0.0
  %3303 = vmatpush.msra.mxu0 0.0
  %3304 = vmatpush.msra.mxu0 0.0
  %3305 = vmatpush.msra.mxu0 0.0
  %3306 = vmatpush.msra.mxu0 0.0
  %3307 = vmatpush.msra.mxu0 0.0
  %3308 = vmatpush.msra.mxu0 0.0
  %3309 = vmatpush.msra.mxu0 0.0
  %3310 = vmatpush.msra.mxu0 0.0
  %3311 = vmatpush.msra.mxu0 0.0
  %3312 = vmatpush.msra.mxu0 0.0
  %3313 = vmatpush.msra.mxu0 0.0
  %3314 = vmatpush.msra.mxu0 %v3301
  %3315 = vmatpush.msra.mxu0 %v3300
  %3316 = vmatpush.msra.mxu0 %v3299
  %3317 = vmatpush.msra.mxu0 %v3298
  %3318 = vmatmul.f32.gmra.mxu0 %v118
  %v3319 = vpop.f32.mrf.mxu0
  %v3320 = vadd.f32 0.0, %v3319
  %3321 = vdwg.mxu0
  %v3323 = vsel %vm116, %v3320, 0
  %3325 = vmatpush.msra.mxu0 0.0
  %3326 = vmatpush.msra.mxu0 0.0
  %3327 = vmatpush.msra.mxu0 0.0
  %3328 = vmatpush.msra.mxu0 0.0
  %3329 = vmatpush.msra.mxu0 0.0
  %3330 = vmatpush.msra.mxu0 0.0
  %3331 = vmatpush.msra.mxu0 0.0
  %3332 = vmatpush.msra.mxu0 0.0
  %3333 = vmatpush.msra.mxu0 0.0
  %3334 = vmatpush.msra.mxu0 0.0
  %3335 = vmatpush.msra.mxu0 0.0
  %3336 = vmatpush.msra.mxu0 0.0
  %3337 = vmatpush.msra.mxu0 %v50
  %3338 = vmatpush.msra.mxu0 %v49
  %3339 = vmatpush.msra.mxu0 %v48
  %3340 = vmatpush.msra.mxu0 %v47
  %3341 = vmatmul.f32.gmra.mxu0 %v3323
  %v3342 = vpop.f32.mrf.mxu0
  %v3343 = vadd.f32 %v141, %v3342
  %3344 = vdwg.mxu0
  %v3345 = vsub.f32 %v3343, %v39
  %v3346 = vmax.f32 %v3345, -1.0
  %v3347 = vmin.f32 %v3346, 1.0
  %v3349 = vsel %vm116, %v3347, 0
  %3351 = vmatpush.msra.mxu0 0.0
  %3352 = vmatpush.msra.mxu0 0.0
  %3353 = vmatpush.msra.mxu0 0.0
  %3354 = vmatpush.msra.mxu0 0.0
  %3355 = vmatpush.msra.mxu0 0.0
  %3356 = vmatpush.msra.mxu0 0.0
  %3357 = vmatpush.msra.mxu0 0.0
  %3358 = vmatpush.msra.mxu0 0.0
  %3359 = vmatpush.msra.mxu0 0.0
  %3360 = vmatpush.msra.mxu0 0.0
  %3361 = vmatpush.msra.mxu0 0.0
  %3362 = vmatpush.msra.mxu0 0.0
  %3363 = vmatpush.msra.mxu0 %v55
  %3364 = vmatpush.msra.mxu0 %v54
  %3365 = vmatpush.msra.mxu0 %v53
  %3366 = vmatpush.msra.mxu0 %v52
  %3367 = vmatmul.f32.gmra.mxu0 %v3349
  %v3368 = vpop.f32.mrf.mxu0
  %v3369 = vadd.f32 0.0, %v3368
  %3370 = vdwg.mxu0
  %v3372 = vsel %vm205, %v3369, 0
  %3374 = vmatpush.msra.mxu0 0.0
  %3375 = vmatpush.msra.mxu0 0.0
  %3376 = vmatpush.msra.mxu0 0.0
  %3377 = vmatpush.msra.mxu0 0.0
  %3378 = vmatpush.msra.mxu0 0.0
  %3379 = vmatpush.msra.mxu0 0.0
  %3380 = vmatpush.msra.mxu0 0.0
  %3381 = vmatpush.msra.mxu0 0.0
  %3382 = vmatpush.msra.mxu0 0.0
  %3383 = vmatpush.msra.mxu0 0.0
  %3384 = vmatpush.msra.mxu0 0.0
  %3385 = vmatpush.msra.mxu0 0.0
  %3386 = vmatpush.msra.mxu0 0.0
  %3387 = vmatpush.msra.mxu0 0.0
  %3388 = vmatpush.msra.mxu0 0.0
  %3389 = vmatpush.msra.mxu0 %v3372
  %3390 = vmatmul.f32.gmra.mxu0 %v194
  %v3391 = vpop.f32.mrf.mxu0
  %v3392 = vadd.f32 0.0, %v3391
  %3393 = vmatmul.f32.gmra.mxu0 %v197
  %v3394 = vpop.f32.mrf.mxu0
  %v3395 = vadd.f32 0.0, %v3394
  %3396 = vmatmul.f32.gmra.mxu0 %v200
  %v3397 = vpop.f32.mrf.mxu0
  %v3398 = vadd.f32 0.0, %v3397
  %3399 = vmatmul.f32.gmra.mxu0 %v203
  %v3400 = vpop.f32.mrf.mxu0
  %v3401 = vadd.f32 0.0, %v3400
  %3402 = vdwg.mxu0
  %vm3403 = vcmp.gt.f32.partialorder %v3287, 0.0
  %vm3404 = vcmp.gt.f32.partialorder %v3290, 0.0
  %vm3405 = vcmp.gt.f32.partialorder %v3293, 0.0
  %vm3406 = vcmp.gt.f32.partialorder %v3296, 0.0
  %v3407 = vsel %vm3403, %v3392, 0.0
  %v3408 = vsel %vm3404, %v3395, 0.0
  %v3409 = vsel %vm3405, %v3398, 0.0
  %v3410 = vsel %vm3406, %v3401, 0.0
  %v3412 = vsel %vm116, %v3407, 0
  %v3415 = vsel %vm116, %v3408, 0
  %v3418 = vsel %vm116, %v3409, 0
  %v3421 = vsel %vm116, %v3410, 0
  %3423 = vmatpush.msra.mxu0 0.0
  %3424 = vmatpush.msra.mxu0 0.0
  %3425 = vmatpush.msra.mxu0 0.0
  %3426 = vmatpush.msra.mxu0 0.0
  %3427 = vmatpush.msra.mxu0 0.0
  %3428 = vmatpush.msra.mxu0 0.0
  %3429 = vmatpush.msra.mxu0 0.0
  %3430 = vmatpush.msra.mxu0 0.0
  %3431 = vmatpush.msra.mxu0 0.0
  %3432 = vmatpush.msra.mxu0 0.0
  %3433 = vmatpush.msra.mxu0 0.0
  %3434 = vmatpush.msra.mxu0 0.0
  %3435 = vmatpush.msra.mxu0 %v59
  %3436 = vmatpush.msra.mxu0 %v58
  %3437 = vmatpush.msra.mxu0 %v57
  %3438 = vmatpush.msra.mxu0 %v56
  %3439 = vmatmul.f32.gmra.mxu0 %v3412
  %v3440 = vpop.f32.mrf.mxu0
  %v3441 = vadd.f32 0.0, %v3440
  %3442 = vmatmul.f32.gmra.mxu0 %v3415
  %v3443 = vpop.f32.mrf.mxu0
  %v3444 = vadd.f32 0.0, %v3443
  %3445 = vmatmul.f32.gmra.mxu0 %v3418
  %v3446 = vpop.f32.mrf.mxu0
  %v3447 = vadd.f32 0.0, %v3446
  %3448 = vmatmul.f32.gmra.mxu0 %v3421
  %v3449 = vpop.f32.mrf.mxu0
  %v3450 = vadd.f32 0.0, %v3449
  %3451 = vdwg.mxu0
  %v3452 = vsub.f32 %v3253, %v3441
  %v3453 = vsub.f32 %v3254, %v3444
  %v3454 = vsub.f32 %v3255, %v3447
  %v3455 = vsub.f32 %v3256, %v3450
  %v3456 = vmax.f32 %v3452, 0.0
  %v3457 = vmax.f32 %v3453, 0.0
  %v3458 = vmax.f32 %v3454, 0.0
  %v3459 = vmax.f32 %v3455, 0.0
  %v3460 = vmin.f32 %v3456, 1.0
  %v3461 = vmin.f32 %v3457, 1.0
  %v3462 = vmin.f32 %v3458, 1.0
  %v3463 = vmin.f32 %v3459, 1.0
  %v3464 = vsel %vm62, %v3460, %v3452
  %v3465 = vsel %vm62, %v3461, %v3453
  %v3466 = vsel %vm62, %v3462, %v3454
  %v3467 = vsel %vm62, %v3463, %v3455
  %v3469 = vsel %vm66, %v3464, 0
  %v3472 = vsel %vm66, %v3465, 0
  %v3475 = vsel %vm66, %v3466, 0
  %v3478 = vsel %vm66, %v3467, 0
  %3480 = vmatpush.msra.mxu0 0.0
  %3481 = vmatpush.msra.mxu0 0.0
  %3482 = vmatpush.msra.mxu0 0.0
  %3483 = vmatpush.msra.mxu0 0.0
  %3484 = vmatpush.msra.mxu0 0.0
  %3485 = vmatpush.msra.mxu0 0.0
  %3486 = vmatpush.msra.mxu0 0.0
  %3487 = vmatpush.msra.mxu0 0.0
  %3488 = vmatpush.msra.mxu0 0.0
  %3489 = vmatpush.msra.mxu0 0.0
  %3490 = vmatpush.msra.mxu0 0.0
  %3491 = vmatpush.msra.mxu0 0.0
  %3492 = vmatpush.msra.mxu0 0.0
  %3493 = vmatpush.msra.mxu0 0.0
  %3494 = vmatpush.msra.mxu0 0.0
  %3495 = vmatpush.msra.mxu0 %v81
  %3496 = vmatmul.f32.gmra.mxu0 %v3469
  %v3497 = vpop.f32.mrf.mxu0
  %v3498 = vadd.f32 %v64, %v3497
  %3499 = vmatmul.f32.gmra.mxu0 %v3472
  %v3500 = vpop.f32.mrf.mxu0
  %v3501 = vadd.f32 %v64, %v3500
  %3502 = vmatmul.f32.gmra.mxu0 %v3475
  %v3503 = vpop.f32.mrf.mxu0
  %v3504 = vadd.f32 %v64, %v3503
  %3505 = vmatmul.f32.gmra.mxu0 %v3478
  %v3506 = vpop.f32.mrf.mxu0
  %v3507 = vadd.f32 %v64, %v3506
  %3508 = vdwg.mxu0
  %v3509 = vmax.f32 %v3498, 0.0
  %v3510 = vmax.f32 %v3501, 0.0
  %v3511 = vmax.f32 %v3504, 0.0
  %v3512 = vmax.f32 %v3507, 0.0
  %3513 = vmatpush.msra.mxu0 0.0
  %3514 = vmatpush.msra.mxu0 0.0
  %3515 = vmatpush.msra.mxu0 0.0
  %3516 = vmatpush.msra.mxu0 0.0
  %3517 = vmatpush.msra.mxu0 0.0
  %3518 = vmatpush.msra.mxu0 0.0
  %3519 = vmatpush.msra.mxu0 0.0
  %3520 = vmatpush.msra.mxu0 0.0
  %3521 = vmatpush.msra.mxu0 0.0
  %3522 = vmatpush.msra.mxu0 0.0
  %3523 = vmatpush.msra.mxu0 0.0
  %3524 = vmatpush.msra.mxu0 0.0
  %3525 = vmatpush.msra.mxu0 %v3512
  %3526 = vmatpush.msra.mxu0 %v3511
  %3527 = vmatpush.msra.mxu0 %v3510
  %3528 = vmatpush.msra.mxu0 %v3509
  %3529 = vmatmul.f32.gmra.mxu0 %v118
  %v3530 = vpop.f32.mrf.mxu0
  %v3531 = vadd.f32 0.0, %v3530
  %3532 = vdwg.mxu0
  %v3534 = vsel %vm116, %v3531, 0
  %3536 = vmatpush.msra.mxu0 0.0
  %3537 = vmatpush.msra.mxu0 0.0
  %3538 = vmatpush.msra.mxu0 0.0
  %3539 = vmatpush.msra.mxu0 0.0
  %3540 = vmatpush.msra.mxu0 0.0
  %3541 = vmatpush.msra.mxu0 0.0
  %3542 = vmatpush.msra.mxu0 0.0
  %3543 = vmatpush.msra.mxu0 0.0
  %3544 = vmatpush.msra.mxu0 0.0
  %3545 = vmatpush.msra.mxu0 0.0
  %3546 = vmatpush.msra.mxu0 0.0
  %3547 = vmatpush.msra.mxu0 0.0
  %3548 = vmatpush.msra.mxu0 %v50
  %3549 = vmatpush.msra.mxu0 %v49
  %3550 = vmatpush.msra.mxu0 %v48
  %3551 = vmatpush.msra.mxu0 %v47
  %3552 = vmatmul.f32.gmra.mxu0 %v3534
  %v3553 = vpop.f32.mrf.mxu0
  %v3554 = vadd.f32 %v141, %v3553
  %3555 = vdwg.mxu0
  %v3556 = vsub.f32 %v3554, %v39
  %v3557 = vmax.f32 %v3556, -1.0
  %v3558 = vmin.f32 %v3557, 1.0
  %v3560 = vsel %vm116, %v3558, 0
  %3562 = vmatpush.msra.mxu0 0.0
  %3563 = vmatpush.msra.mxu0 0.0
  %3564 = vmatpush.msra.mxu0 0.0
  %3565 = vmatpush.msra.mxu0 0.0
  %3566 = vmatpush.msra.mxu0 0.0
  %3567 = vmatpush.msra.mxu0 0.0
  %3568 = vmatpush.msra.mxu0 0.0
  %3569 = vmatpush.msra.mxu0 0.0
  %3570 = vmatpush.msra.mxu0 0.0
  %3571 = vmatpush.msra.mxu0 0.0
  %3572 = vmatpush.msra.mxu0 0.0
  %3573 = vmatpush.msra.mxu0 0.0
  %3574 = vmatpush.msra.mxu0 %v55
  %3575 = vmatpush.msra.mxu0 %v54
  %3576 = vmatpush.msra.mxu0 %v53
  %3577 = vmatpush.msra.mxu0 %v52
  %3578 = vmatmul.f32.gmra.mxu0 %v3560
  %v3579 = vpop.f32.mrf.mxu0
  %v3580 = vadd.f32 0.0, %v3579
  %3581 = vdwg.mxu0
  %v3583 = vsel %vm205, %v3580, 0
  %3585 = vmatpush.msra.mxu0 0.0
  %3586 = vmatpush.msra.mxu0 0.0
  %3587 = vmatpush.msra.mxu0 0.0
  %3588 = vmatpush.msra.mxu0 0.0
  %3589 = vmatpush.msra.mxu0 0.0
  %3590 = vmatpush.msra.mxu0 0.0
  %3591 = vmatpush.msra.mxu0 0.0
  %3592 = vmatpush.msra.mxu0 0.0
  %3593 = vmatpush.msra.mxu0 0.0
  %3594 = vmatpush.msra.mxu0 0.0
  %3595 = vmatpush.msra.mxu0 0.0
  %3596 = vmatpush.msra.mxu0 0.0
  %3597 = vmatpush.msra.mxu0 0.0
  %3598 = vmatpush.msra.mxu0 0.0
  %3599 = vmatpush.msra.mxu0 0.0
  %3600 = vmatpush.msra.mxu0 %v3583
  %3601 = vmatmul.f32.gmra.mxu0 %v194
  %v3602 = vpop.f32.mrf.mxu0
  %v3603 = vadd.f32 0.0, %v3602
  %3604 = vmatmul.f32.gmra.mxu0 %v197
  %v3605 = vpop.f32.mrf.mxu0
  %v3606 = vadd.f32 0.0, %v3605
  %3607 = vmatmul.f32.gmra.mxu0 %v200
  %v3608 = vpop.f32.mrf.mxu0
  %v3609 = vadd.f32 0.0, %v3608
  %3610 = vmatmul.f32.gmra.mxu0 %v203
  %v3611 = vpop.f32.mrf.mxu0
  %v3612 = vadd.f32 0.0, %v3611
  %3613 = vdwg.mxu0
  %vm3614 = vcmp.gt.f32.partialorder %v3498, 0.0
  %vm3615 = vcmp.gt.f32.partialorder %v3501, 0.0
  %vm3616 = vcmp.gt.f32.partialorder %v3504, 0.0
  %vm3617 = vcmp.gt.f32.partialorder %v3507, 0.0
  %v3618 = vsel %vm3614, %v3603, 0.0
  %v3619 = vsel %vm3615, %v3606, 0.0
  %v3620 = vsel %vm3616, %v3609, 0.0
  %v3621 = vsel %vm3617, %v3612, 0.0
  %v3623 = vsel %vm116, %v3618, 0
  %v3626 = vsel %vm116, %v3619, 0
  %v3629 = vsel %vm116, %v3620, 0
  %v3632 = vsel %vm116, %v3621, 0
  %3634 = vmatpush.msra.mxu0 0.0
  %3635 = vmatpush.msra.mxu0 0.0
  %3636 = vmatpush.msra.mxu0 0.0
  %3637 = vmatpush.msra.mxu0 0.0
  %3638 = vmatpush.msra.mxu0 0.0
  %3639 = vmatpush.msra.mxu0 0.0
  %3640 = vmatpush.msra.mxu0 0.0
  %3641 = vmatpush.msra.mxu0 0.0
  %3642 = vmatpush.msra.mxu0 0.0
  %3643 = vmatpush.msra.mxu0 0.0
  %3644 = vmatpush.msra.mxu0 0.0
  %3645 = vmatpush.msra.mxu0 0.0
  %3646 = vmatpush.msra.mxu0 %v59
  %3647 = vmatpush.msra.mxu0 %v58
  %3648 = vmatpush.msra.mxu0 %v57
  %3649 = vmatpush.msra.mxu0 %v56
  %3650 = vmatmul.f32.gmra.mxu0 %v3623
  %v3651 = vpop.f32.mrf.mxu0
  %v3652 = vadd.f32 0.0, %v3651
  %3653 = vmatmul.f32.gmra.mxu0 %v3626
  %v3654 = vpop.f32.mrf.mxu0
  %v3655 = vadd.f32 0.0, %v3654
  %3656 = vmatmul.f32.gmra.mxu0 %v3629
  %v3657 = vpop.f32.mrf.mxu0
  %v3658 = vadd.f32 0.0, %v3657
  %3659 = vmatmul.f32.gmra.mxu0 %v3632
  %v3660 = vpop.f32.mrf.mxu0
  %v3661 = vadd.f32 0.0, %v3660
  %3662 = vdwg.mxu0
  %v3663 = vsub.f32 %v3464, %v3652
  %v3664 = vsub.f32 %v3465, %v3655
  %v3665 = vsub.f32 %v3466, %v3658
  %v3666 = vsub.f32 %v3467, %v3661
  %v3667 = vmax.f32 %v3663, 0.0
  %v3668 = vmax.f32 %v3664, 0.0
  %v3669 = vmax.f32 %v3665, 0.0
  %v3670 = vmax.f32 %v3666, 0.0
  %v3671 = vmin.f32 %v3667, 1.0
  %v3672 = vmin.f32 %v3668, 1.0
  %v3673 = vmin.f32 %v3669, 1.0
  %v3674 = vmin.f32 %v3670, 1.0
  %v3675 = vsel %vm62, %v3671, %v3663
  %v3676 = vsel %vm62, %v3672, %v3664
  %v3677 = vsel %vm62, %v3673, %v3665
  %v3678 = vsel %vm62, %v3674, %v3666
  %v3680 = vsel %vm66, %v3675, 0
  %v3683 = vsel %vm66, %v3676, 0
  %v3686 = vsel %vm66, %v3677, 0
  %v3689 = vsel %vm66, %v3678, 0
  %3691 = vmatpush.msra.mxu0 0.0
  %3692 = vmatpush.msra.mxu0 0.0
  %3693 = vmatpush.msra.mxu0 0.0
  %3694 = vmatpush.msra.mxu0 0.0
  %3695 = vmatpush.msra.mxu0 0.0
  %3696 = vmatpush.msra.mxu0 0.0
  %3697 = vmatpush.msra.mxu0 0.0
  %3698 = vmatpush.msra.mxu0 0.0
  %3699 = vmatpush.msra.mxu0 0.0
  %3700 = vmatpush.msra.mxu0 0.0
  %3701 = vmatpush.msra.mxu0 0.0
  %3702 = vmatpush.msra.mxu0 0.0
  %3703 = vmatpush.msra.mxu0 0.0
  %3704 = vmatpush.msra.mxu0 0.0
  %3705 = vmatpush.msra.mxu0 0.0
  %3706 = vmatpush.msra.mxu0 %v81
  %3707 = vmatmul.f32.gmra.mxu0 %v3680
  %v3708 = vpop.f32.mrf.mxu0
  %v3709 = vadd.f32 %v64, %v3708
  %3710 = vmatmul.f32.gmra.mxu0 %v3683
  %v3711 = vpop.f32.mrf.mxu0
  %v3712 = vadd.f32 %v64, %v3711
  %3713 = vmatmul.f32.gmra.mxu0 %v3686
  %v3714 = vpop.f32.mrf.mxu0
  %v3715 = vadd.f32 %v64, %v3714
  %3716 = vmatmul.f32.gmra.mxu0 %v3689
  %v3717 = vpop.f32.mrf.mxu0
  %v3718 = vadd.f32 %v64, %v3717
  %3719 = vdwg.mxu0
  %v3720 = vmax.f32 %v3709, 0.0
  %v3721 = vmax.f32 %v3712, 0.0
  %v3722 = vmax.f32 %v3715, 0.0
  %v3723 = vmax.f32 %v3718, 0.0
  %3724 = vmatpush.msra.mxu0 0.0
  %3725 = vmatpush.msra.mxu0 0.0
  %3726 = vmatpush.msra.mxu0 0.0
  %3727 = vmatpush.msra.mxu0 0.0
  %3728 = vmatpush.msra.mxu0 0.0
  %3729 = vmatpush.msra.mxu0 0.0
  %3730 = vmatpush.msra.mxu0 0.0
  %3731 = vmatpush.msra.mxu0 0.0
  %3732 = vmatpush.msra.mxu0 0.0
  %3733 = vmatpush.msra.mxu0 0.0
  %3734 = vmatpush.msra.mxu0 0.0
  %3735 = vmatpush.msra.mxu0 0.0
  %3736 = vmatpush.msra.mxu0 %v3723
  %3737 = vmatpush.msra.mxu0 %v3722
  %3738 = vmatpush.msra.mxu0 %v3721
  %3739 = vmatpush.msra.mxu0 %v3720
  %3740 = vmatmul.f32.gmra.mxu0 %v118
  %v3741 = vpop.f32.mrf.mxu0
  %v3742 = vadd.f32 0.0, %v3741
  %3743 = vdwg.mxu0
  %v3745 = vsel %vm116, %v3742, 0
  %3747 = vmatpush.msra.mxu0 0.0
  %3748 = vmatpush.msra.mxu0 0.0
  %3749 = vmatpush.msra.mxu0 0.0
  %3750 = vmatpush.msra.mxu0 0.0
  %3751 = vmatpush.msra.mxu0 0.0
  %3752 = vmatpush.msra.mxu0 0.0
  %3753 = vmatpush.msra.mxu0 0.0
  %3754 = vmatpush.msra.mxu0 0.0
  %3755 = vmatpush.msra.mxu0 0.0
  %3756 = vmatpush.msra.mxu0 0.0
  %3757 = vmatpush.msra.mxu0 0.0
  %3758 = vmatpush.msra.mxu0 0.0
  %3759 = vmatpush.msra.mxu0 %v50
  %3760 = vmatpush.msra.mxu0 %v49
  %3761 = vmatpush.msra.mxu0 %v48
  %3762 = vmatpush.msra.mxu0 %v47
  %3763 = vmatmul.f32.gmra.mxu0 %v3745
  %v3764 = vpop.f32.mrf.mxu0
  %v3765 = vadd.f32 %v141, %v3764
  %3766 = vdwg.mxu0
  %v3767 = vsub.f32 %v3765, %v39
  %v3768 = vmax.f32 %v3767, -1.0
  %v3769 = vmin.f32 %v3768, 1.0
  %v3771 = vsel %vm116, %v3769, 0
  %3773 = vmatpush.msra.mxu0 0.0
  %3774 = vmatpush.msra.mxu0 0.0
  %3775 = vmatpush.msra.mxu0 0.0
  %3776 = vmatpush.msra.mxu0 0.0
  %3777 = vmatpush.msra.mxu0 0.0
  %3778 = vmatpush.msra.mxu0 0.0
  %3779 = vmatpush.msra.mxu0 0.0
  %3780 = vmatpush.msra.mxu0 0.0
  %3781 = vmatpush.msra.mxu0 0.0
  %3782 = vmatpush.msra.mxu0 0.0
  %3783 = vmatpush.msra.mxu0 0.0
  %3784 = vmatpush.msra.mxu0 0.0
  %3785 = vmatpush.msra.mxu0 %v55
  %3786 = vmatpush.msra.mxu0 %v54
  %3787 = vmatpush.msra.mxu0 %v53
  %3788 = vmatpush.msra.mxu0 %v52
  %3789 = vmatmul.f32.gmra.mxu0 %v3771
  %v3790 = vpop.f32.mrf.mxu0
  %v3791 = vadd.f32 0.0, %v3790
  %3792 = vdwg.mxu0
  %v3794 = vsel %vm205, %v3791, 0
  %3796 = vmatpush.msra.mxu0 0.0
  %3797 = vmatpush.msra.mxu0 0.0
  %3798 = vmatpush.msra.mxu0 0.0
  %3799 = vmatpush.msra.mxu0 0.0
  %3800 = vmatpush.msra.mxu0 0.0
  %3801 = vmatpush.msra.mxu0 0.0
  %3802 = vmatpush.msra.mxu0 0.0
  %3803 = vmatpush.msra.mxu0 0.0
  %3804 = vmatpush.msra.mxu0 0.0
  %3805 = vmatpush.msra.mxu0 0.0
  %3806 = vmatpush.msra.mxu0 0.0
  %3807 = vmatpush.msra.mxu0 0.0
  %3808 = vmatpush.msra.mxu0 0.0
  %3809 = vmatpush.msra.mxu0 0.0
  %3810 = vmatpush.msra.mxu0 0.0
  %3811 = vmatpush.msra.mxu0 %v3794
  %3812 = vmatmul.f32.gmra.mxu0 %v194
  %v3813 = vpop.f32.mrf.mxu0
  %v3814 = vadd.f32 0.0, %v3813
  %3815 = vmatmul.f32.gmra.mxu0 %v197
  %v3816 = vpop.f32.mrf.mxu0
  %v3817 = vadd.f32 0.0, %v3816
  %3818 = vmatmul.f32.gmra.mxu0 %v200
  %v3819 = vpop.f32.mrf.mxu0
  %v3820 = vadd.f32 0.0, %v3819
  %3821 = vmatmul.f32.gmra.mxu0 %v203
  %v3822 = vpop.f32.mrf.mxu0
  %v3823 = vadd.f32 0.0, %v3822
  %3824 = vdwg.mxu0
  %vm3825 = vcmp.gt.f32.partialorder %v3709, 0.0
  %vm3826 = vcmp.gt.f32.partialorder %v3712, 0.0
  %vm3827 = vcmp.gt.f32.partialorder %v3715, 0.0
  %vm3828 = vcmp.gt.f32.partialorder %v3718, 0.0
  %v3829 = vsel %vm3825, %v3814, 0.0
  %v3830 = vsel %vm3826, %v3817, 0.0
  %v3831 = vsel %vm3827, %v3820, 0.0
  %v3832 = vsel %vm3828, %v3823, 0.0
  %v3834 = vsel %vm116, %v3829, 0
  %v3837 = vsel %vm116, %v3830, 0
  %v3840 = vsel %vm116, %v3831, 0
  %v3843 = vsel %vm116, %v3832, 0
  %3845 = vmatpush.msra.mxu0 0.0
  %3846 = vmatpush.msra.mxu0 0.0
  %3847 = vmatpush.msra.mxu0 0.0
  %3848 = vmatpush.msra.mxu0 0.0
  %3849 = vmatpush.msra.mxu0 0.0
  %3850 = vmatpush.msra.mxu0 0.0
  %3851 = vmatpush.msra.mxu0 0.0
  %3852 = vmatpush.msra.mxu0 0.0
  %3853 = vmatpush.msra.mxu0 0.0
  %3854 = vmatpush.msra.mxu0 0.0
  %3855 = vmatpush.msra.mxu0 0.0
  %3856 = vmatpush.msra.mxu0 0.0
  %3857 = vmatpush.msra.mxu0 %v59
  %3858 = vmatpush.msra.mxu0 %v58
  %3859 = vmatpush.msra.mxu0 %v57
  %3860 = vmatpush.msra.mxu0 %v56
  %3861 = vmatmul.f32.gmra.mxu0 %v3834
  %v3862 = vpop.f32.mrf.mxu0
  %v3863 = vadd.f32 0.0, %v3862
  %3864 = vmatmul.f32.gmra.mxu0 %v3837
  %v3865 = vpop.f32.mrf.mxu0
  %v3866 = vadd.f32 0.0, %v3865
  %3867 = vmatmul.f32.gmra.mxu0 %v3840
  %v3868 = vpop.f32.mrf.mxu0
  %v3869 = vadd.f32 0.0, %v3868
  %3870 = vmatmul.f32.gmra.mxu0 %v3843
  %v3871 = vpop.f32.mrf.mxu0
  %v3872 = vadd.f32 0.0, %v3871
  %3873 = vdwg.mxu0
  %v3874 = vsub.f32 %v3675, %v3863
  %v3875 = vsub.f32 %v3676, %v3866
  %v3876 = vsub.f32 %v3677, %v3869
  %v3877 = vsub.f32 %v3678, %v3872
  %v3878 = vmax.f32 %v3874, 0.0
  %v3879 = vmax.f32 %v3875, 0.0
  %v3880 = vmax.f32 %v3876, 0.0
  %v3881 = vmax.f32 %v3877, 0.0
  %v3882 = vmin.f32 %v3878, 1.0
  %v3883 = vmin.f32 %v3879, 1.0
  %v3884 = vmin.f32 %v3880, 1.0
  %v3885 = vmin.f32 %v3881, 1.0
  %v3886 = vsel %vm62, %v3882, %v3874
  %v3887 = vsel %vm62, %v3883, %v3875
  %v3888 = vsel %vm62, %v3884, %v3876
  %v3889 = vsel %vm62, %v3885, %v3877
  %v3891 = vsel %vm66, %v3886, 0
  %v3894 = vsel %vm66, %v3887, 0
  %v3897 = vsel %vm66, %v3888, 0
  %v3900 = vsel %vm66, %v3889, 0
  %3902 = vmatpush.msra.mxu0 0.0
  %3903 = vmatpush.msra.mxu0 0.0
  %3904 = vmatpush.msra.mxu0 0.0
  %3905 = vmatpush.msra.mxu0 0.0
  %3906 = vmatpush.msra.mxu0 0.0
  %3907 = vmatpush.msra.mxu0 0.0
  %3908 = vmatpush.msra.mxu0 0.0
  %3909 = vmatpush.msra.mxu0 0.0
  %3910 = vmatpush.msra.mxu0 0.0
  %3911 = vmatpush.msra.mxu0 0.0
  %3912 = vmatpush.msra.mxu0 0.0
  %3913 = vmatpush.msra.mxu0 0.0
  %3914 = vmatpush.msra.mxu0 0.0
  %3915 = vmatpush.msra.mxu0 0.0
  %3916 = vmatpush.msra.mxu0 0.0
  %3917 = vmatpush.msra.mxu0 %v81
  %3918 = vmatmul.f32.gmra.mxu0 %v3891
  %v3919 = vpop.f32.mrf.mxu0
  %v3920 = vadd.f32 %v64, %v3919
  %3921 = vmatmul.f32.gmra.mxu0 %v3894
  %v3922 = vpop.f32.mrf.mxu0
  %v3923 = vadd.f32 %v64, %v3922
  %3924 = vmatmul.f32.gmra.mxu0 %v3897
  %v3925 = vpop.f32.mrf.mxu0
  %v3926 = vadd.f32 %v64, %v3925
  %3927 = vmatmul.f32.gmra.mxu0 %v3900
  %v3928 = vpop.f32.mrf.mxu0
  %v3929 = vadd.f32 %v64, %v3928
  %3930 = vdwg.mxu0
  %v3931 = vmax.f32 %v3920, 0.0
  %v3932 = vmax.f32 %v3923, 0.0
  %v3933 = vmax.f32 %v3926, 0.0
  %v3934 = vmax.f32 %v3929, 0.0
  %3935 = vmatpush.msra.mxu0 0.0
  %3936 = vmatpush.msra.mxu0 0.0
  %3937 = vmatpush.msra.mxu0 0.0
  %3938 = vmatpush.msra.mxu0 0.0
  %3939 = vmatpush.msra.mxu0 0.0
  %3940 = vmatpush.msra.mxu0 0.0
  %3941 = vmatpush.msra.mxu0 0.0
  %3942 = vmatpush.msra.mxu0 0.0
  %3943 = vmatpush.msra.mxu0 0.0
  %3944 = vmatpush.msra.mxu0 0.0
  %3945 = vmatpush.msra.mxu0 0.0
  %3946 = vmatpush.msra.mxu0 0.0
  %3947 = vmatpush.msra.mxu0 %v3934
  %3948 = vmatpush.msra.mxu0 %v3933
  %3949 = vmatpush.msra.mxu0 %v3932
  %3950 = vmatpush.msra.mxu0 %v3931
  %3951 = vmatmul.f32.gmra.mxu0 %v118
  %v3952 = vpop.f32.mrf.mxu0
  %v3953 = vadd.f32 0.0, %v3952
  %3954 = vdwg.mxu0
  %v3956 = vsel %vm116, %v3953, 0
  %3958 = vmatpush.msra.mxu0 0.0
  %3959 = vmatpush.msra.mxu0 0.0
  %3960 = vmatpush.msra.mxu0 0.0
  %3961 = vmatpush.msra.mxu0 0.0
  %3962 = vmatpush.msra.mxu0 0.0
  %3963 = vmatpush.msra.mxu0 0.0
  %3964 = vmatpush.msra.mxu0 0.0
  %3965 = vmatpush.msra.mxu0 0.0
  %3966 = vmatpush.msra.mxu0 0.0
  %3967 = vmatpush.msra.mxu0 0.0
  %3968 = vmatpush.msra.mxu0 0.0
  %3969 = vmatpush.msra.mxu0 0.0
  %3970 = vmatpush.msra.mxu0 %v50
  %3971 = vmatpush.msra.mxu0 %v49
  %3972 = vmatpush.msra.mxu0 %v48
  %3973 = vmatpush.msra.mxu0 %v47
  %3974 = vmatmul.f32.gmra.mxu0 %v3956
  %v3975 = vpop.f32.mrf.mxu0
  %v3976 = vadd.f32 %v141, %v3975
  %3977 = vdwg.mxu0
  %v3978 = vsub.f32 %v3976, %v39
  %v3979 = vmax.f32 %v3978, -1.0
  %v3980 = vmin.f32 %v3979, 1.0
  %v3982 = vsel %vm116, %v3980, 0
  %3984 = vmatpush.msra.mxu0 0.0
  %3985 = vmatpush.msra.mxu0 0.0
  %3986 = vmatpush.msra.mxu0 0.0
  %3987 = vmatpush.msra.mxu0 0.0
  %3988 = vmatpush.msra.mxu0 0.0
  %3989 = vmatpush.msra.mxu0 0.0
  %3990 = vmatpush.msra.mxu0 0.0
  %3991 = vmatpush.msra.mxu0 0.0
  %3992 = vmatpush.msra.mxu0 0.0
  %3993 = vmatpush.msra.mxu0 0.0
  %3994 = vmatpush.msra.mxu0 0.0
  %3995 = vmatpush.msra.mxu0 0.0
  %3996 = vmatpush.msra.mxu0 %v55
  %3997 = vmatpush.msra.mxu0 %v54
  %3998 = vmatpush.msra.mxu0 %v53
  %3999 = vmatpush.msra.mxu0 %v52
  %4000 = vmatmul.f32.gmra.mxu0 %v3982
  %v4001 = vpop.f32.mrf.mxu0
  %v4002 = vadd.f32 0.0, %v4001
  %4003 = vdwg.mxu0
  %v4005 = vsel %vm205, %v4002, 0
  %4007 = vmatpush.msra.mxu0 0.0
  %4008 = vmatpush.msra.mxu0 0.0
  %4009 = vmatpush.msra.mxu0 0.0
  %4010 = vmatpush.msra.mxu0 0.0
  %4011 = vmatpush.msra.mxu0 0.0
  %4012 = vmatpush.msra.mxu0 0.0
  %4013 = vmatpush.msra.mxu0 0.0
  %4014 = vmatpush.msra.mxu0 0.0
  %4015 = vmatpush.msra.mxu0 0.0
  %4016 = vmatpush.msra.mxu0 0.0
  %4017 = vmatpush.msra.mxu0 0.0
  %4018 = vmatpush.msra.mxu0 0.0
  %4019 = vmatpush.msra.mxu0 0.0
  %4020 = vmatpush.msra.mxu0 0.0
  %4021 = vmatpush.msra.mxu0 0.0
  %4022 = vmatpush.msra.mxu0 %v4005
  %4023 = vmatmul.f32.gmra.mxu0 %v194
  %v4024 = vpop.f32.mrf.mxu0
  %v4025 = vadd.f32 0.0, %v4024
  %4026 = vmatmul.f32.gmra.mxu0 %v197
  %v4027 = vpop.f32.mrf.mxu0
  %v4028 = vadd.f32 0.0, %v4027
  %4029 = vmatmul.f32.gmra.mxu0 %v200
  %v4030 = vpop.f32.mrf.mxu0
  %v4031 = vadd.f32 0.0, %v4030
  %4032 = vmatmul.f32.gmra.mxu0 %v203
  %v4033 = vpop.f32.mrf.mxu0
  %v4034 = vadd.f32 0.0, %v4033
  %4035 = vdwg.mxu0
  %vm4036 = vcmp.gt.f32.partialorder %v3920, 0.0
  %vm4037 = vcmp.gt.f32.partialorder %v3923, 0.0
  %vm4038 = vcmp.gt.f32.partialorder %v3926, 0.0
  %vm4039 = vcmp.gt.f32.partialorder %v3929, 0.0
  %v4040 = vsel %vm4036, %v4025, 0.0
  %v4041 = vsel %vm4037, %v4028, 0.0
  %v4042 = vsel %vm4038, %v4031, 0.0
  %v4043 = vsel %vm4039, %v4034, 0.0
  %v4045 = vsel %vm116, %v4040, 0
  %v4048 = vsel %vm116, %v4041, 0
  %v4051 = vsel %vm116, %v4042, 0
  %v4054 = vsel %vm116, %v4043, 0
  %4056 = vmatpush.msra.mxu0 0.0
  %4057 = vmatpush.msra.mxu0 0.0
  %4058 = vmatpush.msra.mxu0 0.0
  %4059 = vmatpush.msra.mxu0 0.0
  %4060 = vmatpush.msra.mxu0 0.0
  %4061 = vmatpush.msra.mxu0 0.0
  %4062 = vmatpush.msra.mxu0 0.0
  %4063 = vmatpush.msra.mxu0 0.0
  %4064 = vmatpush.msra.mxu0 0.0
  %4065 = vmatpush.msra.mxu0 0.0
  %4066 = vmatpush.msra.mxu0 0.0
  %4067 = vmatpush.msra.mxu0 0.0
  %4068 = vmatpush.msra.mxu0 %v59
  %4069 = vmatpush.msra.mxu0 %v58
  %4070 = vmatpush.msra.mxu0 %v57
  %4071 = vmatpush.msra.mxu0 %v56
  %4072 = vmatmul.f32.gmra.mxu0 %v4045
  %v4073 = vpop.f32.mrf.mxu0
  %v4074 = vadd.f32 0.0, %v4073
  %4075 = vmatmul.f32.gmra.mxu0 %v4048
  %v4076 = vpop.f32.mrf.mxu0
  %v4077 = vadd.f32 0.0, %v4076
  %4078 = vmatmul.f32.gmra.mxu0 %v4051
  %v4079 = vpop.f32.mrf.mxu0
  %v4080 = vadd.f32 0.0, %v4079
  %4081 = vmatmul.f32.gmra.mxu0 %v4054
  %v4082 = vpop.f32.mrf.mxu0
  %v4083 = vadd.f32 0.0, %v4082
  %4084 = vdwg.mxu0
  %v4085 = vsub.f32 %v3886, %v4074
  %v4086 = vsub.f32 %v3887, %v4077
  %v4087 = vsub.f32 %v3888, %v4080
  %v4088 = vsub.f32 %v3889, %v4083
  %v4089 = vmax.f32 %v4085, 0.0
  %v4090 = vmax.f32 %v4086, 0.0
  %v4091 = vmax.f32 %v4087, 0.0
  %v4092 = vmax.f32 %v4088, 0.0
  %v4093 = vmin.f32 %v4089, 1.0
  %v4094 = vmin.f32 %v4090, 1.0
  %v4095 = vmin.f32 %v4091, 1.0
  %v4096 = vmin.f32 %v4092, 1.0
  %v4097 = vsel %vm62, %v4093, %v4085
  %v4098 = vsel %vm62, %v4094, %v4086
  %v4099 = vsel %vm62, %v4095, %v4087
  %v4100 = vsel %vm62, %v4096, %v4088
  %v4102 = vsel %vm66, %v4097, 0
  %v4105 = vsel %vm66, %v4098, 0
  %v4108 = vsel %vm66, %v4099, 0
  %v4111 = vsel %vm66, %v4100, 0
  %4113 = vmatpush.msra.mxu0 0.0
  %4114 = vmatpush.msra.mxu0 0.0
  %4115 = vmatpush.msra.mxu0 0.0
  %4116 = vmatpush.msra.mxu0 0.0
  %4117 = vmatpush.msra.mxu0 0.0
  %4118 = vmatpush.msra.mxu0 0.0
  %4119 = vmatpush.msra.mxu0 0.0
  %4120 = vmatpush.msra.mxu0 0.0
  %4121 = vmatpush.msra.mxu0 0.0
  %4122 = vmatpush.msra.mxu0 0.0
  %4123 = vmatpush.msra.mxu0 0.0
  %4124 = vmatpush.msra.mxu0 0.0
  %4125 = vmatpush.msra.mxu0 0.0
  %4126 = vmatpush.msra.mxu0 0.0
  %4127 = vmatpush.msra.mxu0 0.0
  %4128 = vmatpush.msra.mxu0 %v81
  %4129 = vmatmul.f32.gmra.mxu0 %v4102
  %v4130 = vpop.f32.mrf.mxu0
  %v4131 = vadd.f32 %v64, %v4130
  %4132 = vmatmul.f32.gmra.mxu0 %v4105
  %v4133 = vpop.f32.mrf.mxu0
  %v4134 = vadd.f32 %v64, %v4133
  %4135 = vmatmul.f32.gmra.mxu0 %v4108
  %v4136 = vpop.f32.mrf.mxu0
  %v4137 = vadd.f32 %v64, %v4136
  %4138 = vmatmul.f32.gmra.mxu0 %v4111
  %v4139 = vpop.f32.mrf.mxu0
  %v4140 = vadd.f32 %v64, %v4139
  %4141 = vdwg.mxu0
  %v4142 = vmax.f32 %v4131, 0.0
  %v4143 = vmax.f32 %v4134, 0.0
  %v4144 = vmax.f32 %v4137, 0.0
  %v4145 = vmax.f32 %v4140, 0.0
  %4146 = vmatpush.msra.mxu0 0.0
  %4147 = vmatpush.msra.mxu0 0.0
  %4148 = vmatpush.msra.mxu0 0.0
  %4149 = vmatpush.msra.mxu0 0.0
  %4150 = vmatpush.msra.mxu0 0.0
  %4151 = vmatpush.msra.mxu0 0.0
  %4152 = vmatpush.msra.mxu0 0.0
  %4153 = vmatpush.msra.mxu0 0.0
  %4154 = vmatpush.msra.mxu0 0.0
  %4155 = vmatpush.msra.mxu0 0.0
  %4156 = vmatpush.msra.mxu0 0.0
  %4157 = vmatpush.msra.mxu0 0.0
  %4158 = vmatpush.msra.mxu0 %v4145
  %4159 = vmatpush.msra.mxu0 %v4144
  %4160 = vmatpush.msra.mxu0 %v4143
  %4161 = vmatpush.msra.mxu0 %v4142
  %4162 = vmatmul.f32.gmra.mxu0 %v118
  %v4163 = vpop.f32.mrf.mxu0
  %v4164 = vadd.f32 0.0, %v4163
  %4165 = vdwg.mxu0
  %v4167 = vsel %vm116, %v4164, 0
  %4169 = vmatpush.msra.mxu0 0.0
  %4170 = vmatpush.msra.mxu0 0.0
  %4171 = vmatpush.msra.mxu0 0.0
  %4172 = vmatpush.msra.mxu0 0.0
  %4173 = vmatpush.msra.mxu0 0.0
  %4174 = vmatpush.msra.mxu0 0.0
  %4175 = vmatpush.msra.mxu0 0.0
  %4176 = vmatpush.msra.mxu0 0.0
  %4177 = vmatpush.msra.mxu0 0.0
  %4178 = vmatpush.msra.mxu0 0.0
  %4179 = vmatpush.msra.mxu0 0.0
  %4180 = vmatpush.msra.mxu0 0.0
  %4181 = vmatpush.msra.mxu0 %v50
  %4182 = vmatpush.msra.mxu0 %v49
  %4183 = vmatpush.msra.mxu0 %v48
  %4184 = vmatpush.msra.mxu0 %v47
  %4185 = vmatmul.f32.gmra.mxu0 %v4167
  %v4186 = vpop.f32.mrf.mxu0
  %v4187 = vadd.f32 %v141, %v4186
  %4188 = vdwg.mxu0
  %v4189 = vsub.f32 %v4187, %v39
  %v4190 = vmax.f32 %v4189, -1.0
  %v4191 = vmin.f32 %v4190, 1.0
  %v4193 = vsel %vm116, %v4191, 0
  %4195 = vmatpush.msra.mxu0 0.0
  %4196 = vmatpush.msra.mxu0 0.0
  %4197 = vmatpush.msra.mxu0 0.0
  %4198 = vmatpush.msra.mxu0 0.0
  %4199 = vmatpush.msra.mxu0 0.0
  %4200 = vmatpush.msra.mxu0 0.0
  %4201 = vmatpush.msra.mxu0 0.0
  %4202 = vmatpush.msra.mxu0 0.0
  %4203 = vmatpush.msra.mxu0 0.0
  %4204 = vmatpush.msra.mxu0 0.0
  %4205 = vmatpush.msra.mxu0 0.0
  %4206 = vmatpush.msra.mxu0 0.0
  %4207 = vmatpush.msra.mxu0 %v55
  %4208 = vmatpush.msra.mxu0 %v54
  %4209 = vmatpush.msra.mxu0 %v53
  %4210 = vmatpush.msra.mxu0 %v52
  %4211 = vmatmul.f32.gmra.mxu0 %v4193
  %v4212 = vpop.f32.mrf.mxu0
  %v4213 = vadd.f32 0.0, %v4212
  %4214 = vdwg.mxu0
  %v4216 = vsel %vm205, %v4213, 0
  %4218 = vmatpush.msra.mxu0 0.0
  %4219 = vmatpush.msra.mxu0 0.0
  %4220 = vmatpush.msra.mxu0 0.0
  %4221 = vmatpush.msra.mxu0 0.0
  %4222 = vmatpush.msra.mxu0 0.0
  %4223 = vmatpush.msra.mxu0 0.0
  %4224 = vmatpush.msra.mxu0 0.0
  %4225 = vmatpush.msra.mxu0 0.0
  %4226 = vmatpush.msra.mxu0 0.0
  %4227 = vmatpush.msra.mxu0 0.0
  %4228 = vmatpush.msra.mxu0 0.0
  %4229 = vmatpush.msra.mxu0 0.0
  %4230 = vmatpush.msra.mxu0 0.0
  %4231 = vmatpush.msra.mxu0 0.0
  %4232 = vmatpush.msra.mxu0 0.0
  %4233 = vmatpush.msra.mxu0 %v4216
  %4234 = vmatmul.f32.gmra.mxu0 %v194
  %v4235 = vpop.f32.mrf.mxu0
  %v4236 = vadd.f32 0.0, %v4235
  %4237 = vmatmul.f32.gmra.mxu0 %v197
  %v4238 = vpop.f32.mrf.mxu0
  %v4239 = vadd.f32 0.0, %v4238
  %4240 = vmatmul.f32.gmra.mxu0 %v200
  %v4241 = vpop.f32.mrf.mxu0
  %v4242 = vadd.f32 0.0, %v4241
  %4243 = vmatmul.f32.gmra.mxu0 %v203
  %v4244 = vpop.f32.mrf.mxu0
  %v4245 = vadd.f32 0.0, %v4244
  %4246 = vdwg.mxu0
  %vm4247 = vcmp.gt.f32.partialorder %v4131, 0.0
  %vm4248 = vcmp.gt.f32.partialorder %v4134, 0.0
  %vm4249 = vcmp.gt.f32.partialorder %v4137, 0.0
  %vm4250 = vcmp.gt.f32.partialorder %v4140, 0.0
  %v4251 = vsel %vm4247, %v4236, 0.0
  %v4252 = vsel %vm4248, %v4239, 0.0
  %v4253 = vsel %vm4249, %v4242, 0.0
  %v4254 = vsel %vm4250, %v4245, 0.0
  %v4256 = vsel %vm116, %v4251, 0
  %v4259 = vsel %vm116, %v4252, 0
  %v4262 = vsel %vm116, %v4253, 0
  %v4265 = vsel %vm116, %v4254, 0
  %4267 = vmatpush.msra.mxu0 0.0
  %4268 = vmatpush.msra.mxu0 0.0
  %4269 = vmatpush.msra.mxu0 0.0
  %4270 = vmatpush.msra.mxu0 0.0
  %4271 = vmatpush.msra.mxu0 0.0
  %4272 = vmatpush.msra.mxu0 0.0
  %4273 = vmatpush.msra.mxu0 0.0
  %4274 = vmatpush.msra.mxu0 0.0
  %4275 = vmatpush.msra.mxu0 0.0
  %4276 = vmatpush.msra.mxu0 0.0
  %4277 = vmatpush.msra.mxu0 0.0
  %4278 = vmatpush.msra.mxu0 0.0
  %4279 = vmatpush.msra.mxu0 %v59
  %4280 = vmatpush.msra.mxu0 %v58
  %4281 = vmatpush.msra.mxu0 %v57
  %4282 = vmatpush.msra.mxu0 %v56
  %4283 = vmatmul.f32.gmra.mxu0 %v4256
  %v4284 = vpop.f32.mrf.mxu0
  %v4285 = vadd.f32 0.0, %v4284
  %4286 = vmatmul.f32.gmra.mxu0 %v4259
  %v4287 = vpop.f32.mrf.mxu0
  %v4288 = vadd.f32 0.0, %v4287
  %4289 = vmatmul.f32.gmra.mxu0 %v4262
  %v4290 = vpop.f32.mrf.mxu0
  %v4291 = vadd.f32 0.0, %v4290
  %4292 = vmatmul.f32.gmra.mxu0 %v4265
  %v4293 = vpop.f32.mrf.mxu0
  %v4294 = vadd.f32 0.0, %v4293
  %4295 = vdwg.mxu0
  %v4296 = vsub.f32 %v4097, %v4285
  %v4297 = vsub.f32 %v4098, %v4288
  %v4298 = vsub.f32 %v4099, %v4291
  %v4299 = vsub.f32 %v4100, %v4294
  %v4300 = vmax.f32 %v4296, 0.0
  %v4301 = vmax.f32 %v4297, 0.0
  %v4302 = vmax.f32 %v4298, 0.0
  %v4303 = vmax.f32 %v4299, 0.0
  %v4304 = vmin.f32 %v4300, 1.0
  %v4305 = vmin.f32 %v4301, 1.0
  %v4306 = vmin.f32 %v4302, 1.0
  %v4307 = vmin.f32 %v4303, 1.0
  %v4308 = vsel %vm62, %v4304, %v4296
  %v4309 = vsel %vm62, %v4305, %v4297
  %v4310 = vsel %vm62, %v4306, %v4298
  %v4311 = vsel %vm62, %v4307, %v4299
  %4312 = vst.msk [vmem:[%s10] sm:$0xff] %vm66, %v4308
  %4313 = vst.msk [vmem:[%s10 + $0x8] sm:$0xff] %vm66, %v4309
  %4314 = vst.msk [vmem:[%s10 + $0x10] sm:$0xff] %vm66, %v4310
  %4315 = vst.msk [vmem:[%s10 + $0x18] sm:$0xff] %vm66, %v4311
  // Predicated region
  $region42: #{dspn_forward.1} parent=0 // pred_check
    _
  $region43: #{dspn_forward.1} parent=0 // pred_check_branch
    %4317 = sbr.rel (0) target = $region45
  $region44: #{dspn_forward.1} parent=0 // pred_region
    _
  $region45: #{dspn_forward.1} parent=0 // pred_fallthru
    _
  // Predicated region
  $region46: #{dspn_forward.1} parent=0 // pred_check
    _
  $region47: #{dspn_forward.1} parent=0 // pred_check_branch
    %4319 = sbr.rel (0) target = $region49
  $region48: #{dspn_forward.1} parent=0 // pred_region
    _
  $region49: #{dspn_forward.1} parent=0 // pred_fallthru
    _

</llo_original>
